<compile_context>
chip_gen: v5e
topology: v5e:2x2
jax: 0.10.0
libtpu: 0.0.40
codegen_flags: <defaults>
</compile_context>

<pallas_src>
import functools

import jax
import jax.numpy as jnp
from jax.experimental import pallas as pl
from jax.experimental.pallas import tpu as pltpu


def _upsample_conv_kernel(x_ref, w_ref, b_ref, o_ref, *, TH, W, C, TC):
    """Fused nearest-2x upsample + 3x3/pad-1 conv for one (batch, Cout-tile, row-tile).

    x_ref: (1, H+2, W+2, C)   zero-padded ORIGINAL-resolution input (NHWC), resident/batch
    w_ref: (4, 4, C, TC)      combined polyphase weights [phase p*2+q, tap a*2+b, Cin, Cout]
    b_ref: (1, TC)            bias slice for this Cout tile (f32)
    o_ref: (1, 4, TH, W, TC)  output tile: [parity slot 2q+p, row r, col c, Cout]
    """
    t = pl.program_id(2)                       # row-tile index
    row0 = pl.multiple_of(t * TH, TH)          # first padded input row of this tile

    # The 9 shifted original-resolution patches (channels stay on the lane axis);
    # each is reused by up to 4 of the polyphase outputs.
    patches = {}
    for dv in range(3):
        for dh in range(3):
            sl = x_ref[0, pl.ds(row0 + dv, TH), pl.ds(dh, W), :]   # (TH, W, C)
            patches[(dv, dh)] = sl.reshape(TH * W, C)

    bias = b_ref[...].astype(jnp.float32)      # (1, TC) -- hoisted, implicit-broadcast add

    # out[2r+p, 2c+q] = bias + sum_{a,b in {0,1}} x_pad[r+p+a, c+q+b] . Wcomb[p, q, a, b]
    for p in range(2):
        for q in range(2):
            ph = p * 2 + q
            acc = jnp.dot(patches[(p, q)], w_ref[ph, 0],
                          preferred_element_type=jnp.float32)
            acc = acc + jnp.dot(patches[(p, q + 1)], w_ref[ph, 1],
                                preferred_element_type=jnp.float32)
            acc = acc + jnp.dot(patches[(p + 1, q)], w_ref[ph, 2],
                                preferred_element_type=jnp.float32)
            acc = acc + jnp.dot(patches[(p + 1, q + 1)], w_ref[ph, 3],
                                preferred_element_type=jnp.float32)
            acc = acc + bias
            # Direct store into this phase's parity slot (no interleave copies in-kernel).
            o_ref[0, q * 2 + p] = acc.reshape(TH, W, TC).astype(o_ref.dtype)


def _pick_cout_tile(cout, cin, dtype_bytes, weight_budget_bytes=12 << 20):
    """Largest of {256,128} dividing cout whose double-buffered (4,4,Cin,TC) weight
    tile fits the budget; falls back to the smallest divisible candidate, then cout."""
    cands = [c for c in (256, 128) if cout % c == 0]
    if not cands:
        return cout
    for c in cands:
        if 2 * 16 * cin * c * dtype_bytes <= weight_budget_bytes:
            return c
    return cands[-1]


def _pick_row_tile(H, W, cout_tile, target_bytes=1 << 20):
    """Largest divisor of H whose (4, TH, W, cout_tile) f32 output tile fits target."""
    th = 1
    for cand in range(1, H + 1):
        if H % cand == 0 and 4 * cand * W * cout_tile * 4 <= target_bytes:
            th = cand
    return th


def upsample_forward(x_nchw, weight_oihw, bias, use_conv=True):
    """Upsample.forward (dims=2): nearest-2x upsample + optional 3x3 conv, pad=1.

    x_nchw: (B, C, H, W); weight_oihw: (Cout, C, 3, 3); bias: (Cout,)
    returns (B, Cout, 2H, 2W) in NCHW, matching the PyTorch module.
    """
    B, C, H, W = x_nchw.shape

    if not use_conv:
        return jnp.repeat(jnp.repeat(x_nchw, 2, axis=2), 2, axis=3)

    Cout = weight_oihw.shape[0]

    # NCHW -> NHWC + zero pad, at ORIGINAL resolution (4x cheaper than output-side work).
    x = jnp.transpose(x_nchw, (0, 2, 3, 1))
    x_pad = jnp.pad(x, ((0, 0), (1, 1), (1, 1), (0, 0)))

    # Polyphase weight combination: kernel row kh of the 3x3 filter lands on original-row
    # tap a according to S[p, kh, a] (p = output-row parity); same for columns.
    S = jnp.array(
        [[[1.0, 0.0], [0.0, 1.0], [0.0, 1.0]],   # p = 0 (even output rows/cols)
         [[1.0, 0.0], [1.0, 0.0], [0.0, 1.0]]],  # p = 1 (odd output rows/cols)
        dtype=jnp.float32)
    wcomb = jnp.einsum("pha,qwb,oihw->pqabio", S, S, weight_oihw.astype(jnp.float32))
    wcomb = wcomb.reshape(4, 4, C, Cout).astype(x.dtype)   # [phase, tap, Cin, Cout]
    b2 = bias.reshape(1, Cout).astype(jnp.float32)

    TC = _pick_cout_tile(Cout, C, jnp.dtype(x.dtype).itemsize)
    TH = _pick_row_tile(H, W, TC)
    J, T = Cout // TC, H // TH

    kernel = functools.partial(_upsample_conv_kernel, TH=TH, W=W, C=C, TC=TC)

    out5 = pl.pallas_call(
        kernel,
        out_shape=jax.ShapeDtypeStruct((B, 4, H, W, Cout), x.dtype),
        grid_spec=pltpu.PrefetchScalarGridSpec(
            num_scalar_prefetch=0,
            # Row tiles innermost: the resident input / weight blocks do not re-DMA per tile.
            grid=(B, J, T),
            in_specs=[
                pl.BlockSpec((1, H + 2, W + 2, C), lambda b, j, t: (b, 0, 0, 0)),
                pl.BlockSpec((4, 4, C, TC), lambda b, j, t: (0, 0, 0, j)),
                pl.BlockSpec((1, TC), lambda b, j, t: (0, j)),
            ],
            out_specs=pl.BlockSpec((1, 4, TH, W, TC),
                                   lambda b, j, t: (b, 0, t, 0, j)),
        ),
        compiler_params=pltpu.CompilerParams(
            dimension_semantics=("parallel", "parallel", "parallel"),
            vmem_limit_bytes=48 * 1024 * 1024,
        ),
    )(x_pad, wcomb, b2)

    # out5[b, 2q+p, r, c, o] = y_nhwc[b, 2r+p, 2c+q, o].  Free view-split of the parity
    # dim + one transpose (needed anyway for NHWC->NCHW) + free adjacent-dim merges.
    out6 = out5.reshape(B, 2, 2, H, W, Cout)           # [b, q, p, r, c, o]
    out = jnp.transpose(out6, (0, 5, 3, 2, 4, 1))      # (B, Cout, H, 2, W, 2)
    return out.reshape(B, Cout, 2 * H, 2 * W)


def _reference_forward(x_nchw, weight_oihw, bias):
    """Pure-JAX reference mirroring the PyTorch forward (nearest 2x + conv3x3, pad=1)."""
    x_up = jnp.repeat(jnp.repeat(x_nchw, 2, axis=2), 2, axis=3)
    y = jax.lax.conv_general_dilated(
        x_up, weight_oihw,
        window_strides=(1, 1), padding=((1, 1), (1, 1)),
        dimension_numbers=("NCHW", "OIHW", "NCHW"))
    return y + bias[None, :, None, None]


if __name__ == "__main__":
    # Shapes consistent with Upsample(channels=4, use_conv=True, dims=2).
    B, C, H, W = 2, 4, 16, 16
    Cout = C

    key = jax.random.PRNGKey(0)
    kx, kw, kb = jax.random.split(key, 3)
    x = jax.random.normal(kx, (B, C, H, W), dtype=jnp.float32)
    weight = jax.random.normal(kw, (Cout, C, 3, 3), dtype=jnp.float32) * 0.1
    bias = jax.random.normal(kb, (Cout,), dtype=jnp.float32) * 0.1

    out = upsample_forward(x, weight, bias, use_conv=True)
    out = jax.block_until_ready(out)

    ref = _reference_forward(x, weight, bias)
    assert out.shape == (B, Cout, 2 * H, 2 * W), out.shape
    assert jnp.allclose(out, ref, rtol=1e-4, atol=1e-4), (
        float(jnp.max(jnp.abs(out - ref))))
    print("KERNEL_OK")
</pallas_src>

<mosaic_0001>
module attributes {stable_mosaic.version = 11 : i64} {
  func.func @_upsample_conv_kernel(%arg0: i32, %arg1: i32, %arg2: i32, %arg3: memref<1x18x18x4xf32, #tpu.memory_space<vmem>>, %arg4: memref<4x4x4x4xf32, #tpu.memory_space<vmem>>, %arg5: memref<1x4xf32, #tpu.memory_space<vmem>>, %arg6: memref<1x4x16x16x4xf32, #tpu.memory_space<vmem>>) attributes {dimension_semantics = [#tpu.dimension_semantics<parallel>, #tpu.dimension_semantics<parallel>, #tpu.dimension_semantics<parallel>], iteration_bounds = array<i64: 2, 1, 1>, scalar_prefetch = 0 : i64, scratch_operands = 0 : i64, tpu.core_type = #tpu.core_type<tc>, window_params = [{transform_indices = @transform_0, window_bounds = array<i64: 1, 18, 18, 4>}, {transform_indices = @transform_1, window_bounds = array<i64: 4, 4, 4, 4>}, {transform_indices = @transform_2, window_bounds = array<i64: 1, 4>}, {transform_indices = @transform_3, window_bounds = array<i64: 1, 4, 16, 16, 4>}]} {
    %c16_i32 = arith.constant 16 : i32
    %0 = arith.muli %arg2, %c16_i32 : i32
    %1 = tpu.assume_multiple %0, 16 : i32
    %c0_i32 = arith.constant 0 : i32
    %2 = arith.addi %1, %c0_i32 : i32
    %c0 = arith.constant 0 : index
    %3 = arith.index_cast %2 : i32 to index
    %c0_0 = arith.constant 0 : index
    %c0_1 = arith.constant 0 : index
    %4 = vector.load %arg3[%c0, %3, %c0_0, %c0_1] : memref<1x18x18x4xf32, #tpu.memory_space<vmem>>, vector<1x16x16x4xf32>
    %5 = vector.shape_cast %4 : vector<1x16x16x4xf32> to vector<16x16x4xf32>
    %6 = vector.shape_cast %5 : vector<16x16x4xf32> to vector<256x4xf32>
    %c0_i32_2 = arith.constant 0 : i32
    %7 = arith.addi %1, %c0_i32_2 : i32
    %c0_3 = arith.constant 0 : index
    %8 = arith.index_cast %7 : i32 to index
    %c1 = arith.constant 1 : index
    %c0_4 = arith.constant 0 : index
    %9 = vector.load %arg3[%c0_3, %8, %c1, %c0_4] : memref<1x18x18x4xf32, #tpu.memory_space<vmem>>, vector<1x16x16x4xf32>
    %10 = vector.shape_cast %9 : vector<1x16x16x4xf32> to vector<16x16x4xf32>
    %11 = vector.shape_cast %10 : vector<16x16x4xf32> to vector<256x4xf32>
    %c0_i32_5 = arith.constant 0 : i32
    %12 = arith.addi %1, %c0_i32_5 : i32
    %c0_6 = arith.constant 0 : index
    %13 = arith.index_cast %12 : i32 to index
    %c2 = arith.constant 2 : index
    %c0_7 = arith.constant 0 : index
    %14 = vector.load %arg3[%c0_6, %13, %c2, %c0_7] : memref<1x18x18x4xf32, #tpu.memory_space<vmem>>, vector<1x16x16x4xf32>
    %15 = vector.shape_cast %14 : vector<1x16x16x4xf32> to vector<16x16x4xf32>
    %16 = vector.shape_cast %15 : vector<16x16x4xf32> to vector<256x4xf32>
    %c1_i32 = arith.constant 1 : i32
    %17 = arith.addi %1, %c1_i32 : i32
    %c0_8 = arith.constant 0 : index
    %18 = arith.index_cast %17 : i32 to index
    %c0_9 = arith.constant 0 : index
    %c0_10 = arith.constant 0 : index
    %19 = vector.load %arg3[%c0_8, %18, %c0_9, %c0_10] : memref<1x18x18x4xf32, #tpu.memory_space<vmem>>, vector<1x16x16x4xf32>
    %20 = vector.shape_cast %19 : vector<1x16x16x4xf32> to vector<16x16x4xf32>
    %21 = vector.shape_cast %20 : vector<16x16x4xf32> to vector<256x4xf32>
    %c1_i32_11 = arith.constant 1 : i32
    %22 = arith.addi %1, %c1_i32_11 : i32
    %c0_12 = arith.constant 0 : index
    %23 = arith.index_cast %22 : i32 to index
    %c1_13 = arith.constant 1 : index
    %c0_14 = arith.constant 0 : index
    %24 = vector.load %arg3[%c0_12, %23, %c1_13, %c0_14] : memref<1x18x18x4xf32, #tpu.memory_space<vmem>>, vector<1x16x16x4xf32>
    %25 = vector.shape_cast %24 : vector<1x16x16x4xf32> to vector<16x16x4xf32>
    %26 = vector.shape_cast %25 : vector<16x16x4xf32> to vector<256x4xf32>
    %c1_i32_15 = arith.constant 1 : i32
    %27 = arith.addi %1, %c1_i32_15 : i32
    %c0_16 = arith.constant 0 : index
    %28 = arith.index_cast %27 : i32 to index
    %c2_17 = arith.constant 2 : index
    %c0_18 = arith.constant 0 : index
    %29 = vector.load %arg3[%c0_16, %28, %c2_17, %c0_18] : memref<1x18x18x4xf32, #tpu.memory_space<vmem>>, vector<1x16x16x4xf32>
    %30 = vector.shape_cast %29 : vector<1x16x16x4xf32> to vector<16x16x4xf32>
    %31 = vector.shape_cast %30 : vector<16x16x4xf32> to vector<256x4xf32>
    %c2_i32 = arith.constant 2 : i32
    %32 = arith.addi %1, %c2_i32 : i32
    %c0_19 = arith.constant 0 : index
    %33 = arith.index_cast %32 : i32 to index
    %c0_20 = arith.constant 0 : index
    %c0_21 = arith.constant 0 : index
    %34 = vector.load %arg3[%c0_19, %33, %c0_20, %c0_21] : memref<1x18x18x4xf32, #tpu.memory_space<vmem>>, vector<1x16x16x4xf32>
    %35 = vector.shape_cast %34 : vector<1x16x16x4xf32> to vector<16x16x4xf32>
    %36 = vector.shape_cast %35 : vector<16x16x4xf32> to vector<256x4xf32>
    %c2_i32_22 = arith.constant 2 : i32
    %37 = arith.addi %1, %c2_i32_22 : i32
    %c0_23 = arith.constant 0 : index
    %38 = arith.index_cast %37 : i32 to index
    %c1_24 = arith.constant 1 : index
    %c0_25 = arith.constant 0 : index
    %39 = vector.load %arg3[%c0_23, %38, %c1_24, %c0_25] : memref<1x18x18x4xf32, #tpu.memory_space<vmem>>, vector<1x16x16x4xf32>
    %40 = vector.shape_cast %39 : vector<1x16x16x4xf32> to vector<16x16x4xf32>
    %41 = vector.shape_cast %40 : vector<16x16x4xf32> to vector<256x4xf32>
    %c2_i32_26 = arith.constant 2 : i32
    %42 = arith.addi %1, %c2_i32_26 : i32
    %c0_27 = arith.constant 0 : index
    %43 = arith.index_cast %42 : i32 to index
    %c2_28 = arith.constant 2 : index
    %c0_29 = arith.constant 0 : index
    %44 = vector.load %arg3[%c0_27, %43, %c2_28, %c0_29] : memref<1x18x18x4xf32, #tpu.memory_space<vmem>>, vector<1x16x16x4xf32>
    %45 = vector.shape_cast %44 : vector<1x16x16x4xf32> to vector<16x16x4xf32>
    %46 = vector.shape_cast %45 : vector<16x16x4xf32> to vector<256x4xf32>
    %c0_30 = arith.constant 0 : index
    %c0_31 = arith.constant 0 : index
    %47 = vector.load %arg5[%c0_30, %c0_31] : memref<1x4xf32, #tpu.memory_space<vmem>>, vector<1x4xf32>
    %c0_32 = arith.constant 0 : index
    %c0_33 = arith.constant 0 : index
    %c0_34 = arith.constant 0 : index
    %c0_35 = arith.constant 0 : index
    %48 = vector.load %arg4[%c0_32, %c0_33, %c0_34, %c0_35] : memref<4x4x4x4xf32, #tpu.memory_space<vmem>>, vector<1x1x4x4xf32>
    %49 = vector.shape_cast %48 : vector<1x1x4x4xf32> to vector<4x4xf32>
    %cst = arith.constant dense<0.000000e+00> : vector<256x4xf32>
    %50 = tpu.matmul %6, %49, %cst {dimension_numbers = #tpu.dot_dimension_numbers<[1], [0], [0], [1], [0, 0, 1, 1], [], []>} : vector<256x4xf32>, vector<4x4xf32>, vector<256x4xf32> -> vector<256x4xf32>
    %c0_36 = arith.constant 0 : index
    %c1_37 = arith.constant 1 : index
    %c0_38 = arith.constant 0 : index
    %c0_39 = arith.constant 0 : index
    %51 = vector.load %arg4[%c0_36, %c1_37, %c0_38, %c0_39] : memref<4x4x4x4xf32, #tpu.memory_space<vmem>>, vector<1x1x4x4xf32>
    %52 = vector.shape_cast %51 : vector<1x1x4x4xf32> to vector<4x4xf32>
    %cst_40 = arith.constant dense<0.000000e+00> : vector<256x4xf32>
    %53 = tpu.matmul %11, %52, %cst_40 {dimension_numbers = #tpu.dot_dimension_numbers<[1], [0], [0], [1], [0, 0, 1, 1], [], []>} : vector<256x4xf32>, vector<4x4xf32>, vector<256x4xf32> -> vector<256x4xf32>
    %54 = arith.addf %50, %53 : vector<256x4xf32>
    %c0_41 = arith.constant 0 : index
    %c2_42 = arith.constant 2 : index
    %c0_43 = arith.constant 0 : index
    %c0_44 = arith.constant 0 : index
    %55 = vector.load %arg4[%c0_41, %c2_42, %c0_43, %c0_44] : memref<4x4x4x4xf32, #tpu.memory_space<vmem>>, vector<1x1x4x4xf32>
    %56 = vector.shape_cast %55 : vector<1x1x4x4xf32> to vector<4x4xf32>
    %cst_45 = arith.constant dense<0.000000e+00> : vector<256x4xf32>
    %57 = tpu.matmul %21, %56, %cst_45 {dimension_numbers = #tpu.dot_dimension_numbers<[1], [0], [0], [1], [0, 0, 1, 1], [], []>} : vector<256x4xf32>, vector<4x4xf32>, vector<256x4xf32> -> vector<256x4xf32>
    %58 = arith.addf %54, %57 : vector<256x4xf32>
    %c0_46 = arith.constant 0 : index
    %c3 = arith.constant 3 : index
    %c0_47 = arith.constant 0 : index
    %c0_48 = arith.constant 0 : index
    %59 = vector.load %arg4[%c0_46, %c3, %c0_47, %c0_48] : memref<4x4x4x4xf32, #tpu.memory_space<vmem>>, vector<1x1x4x4xf32>
    %60 = vector.shape_cast %59 : vector<1x1x4x4xf32> to vector<4x4xf32>
    %cst_49 = arith.constant dense<0.000000e+00> : vector<256x4xf32>
    %61 = tpu.matmul %26, %60, %cst_49 {dimension_numbers = #tpu.dot_dimension_numbers<[1], [0], [0], [1], [0, 0, 1, 1], [], []>} : vector<256x4xf32>, vector<4x4xf32>, vector<256x4xf32> -> vector<256x4xf32>
    %62 = arith.addf %58, %61 : vector<256x4xf32>
    %63 = vector.broadcast %47 : vector<1x4xf32> to vector<256x4xf32>
    %64 = arith.addf %62, %63 : vector<256x4xf32>
    %65 = vector.shape_cast %64 : vector<256x4xf32> to vector<16x16x4xf32>
    %c0_50 = arith.constant 0 : index
    %c0_51 = arith.constant 0 : index
    %c0_52 = arith.constant 0 : index
    %c0_53 = arith.constant 0 : index
    %c0_54 = arith.constant 0 : index
    %66 = vector.load %arg6[%c0_50, %c0_51, %c0_52, %c0_53, %c0_54] : memref<1x4x16x16x4xf32, #tpu.memory_space<vmem>>, vector<1x1x16x16x4xf32>
    %67 = vector.shape_cast %66 : vector<1x1x16x16x4xf32> to vector<16x16x4xf32>
    %68 = vector.shape_cast %65 : vector<16x16x4xf32> to vector<1x1x16x16x4xf32>
    tpu.vector_store %arg6[%c0_50, %c0_51, %c0_52, %c0_53, %c0_54], %68 {strides = array<i32>} : memref<1x4x16x16x4xf32, #tpu.memory_space<vmem>>, vector<1x1x16x16x4xf32>,
    %c1_55 = arith.constant 1 : index
    %c0_56 = arith.constant 0 : index
    %c0_57 = arith.constant 0 : index
    %c0_58 = arith.constant 0 : index
    %69 = vector.load %arg4[%c1_55, %c0_56, %c0_57, %c0_58] : memref<4x4x4x4xf32, #tpu.memory_space<vmem>>, vector<1x1x4x4xf32>
    %70 = vector.shape_cast %69 : vector<1x1x4x4xf32> to vector<4x4xf32>
    %cst_59 = arith.constant dense<0.000000e+00> : vector<256x4xf32>
    %71 = tpu.matmul %11, %70, %cst_59 {dimension_numbers = #tpu.dot_dimension_numbers<[1], [0], [0], [1], [0, 0, 1, 1], [], []>} : vector<256x4xf32>, vector<4x4xf32>, vector<256x4xf32> -> vector<256x4xf32>
    %c1_60 = arith.constant 1 : index
    %c1_61 = arith.constant 1 : index
    %c0_62 = arith.constant 0 : index
    %c0_63 = arith.constant 0 : index
    %72 = vector.load %arg4[%c1_60, %c1_61, %c0_62, %c0_63] : memref<4x4x4x4xf32, #tpu.memory_space<vmem>>, vector<1x1x4x4xf32>
    %73 = vector.shape_cast %72 : vector<1x1x4x4xf32> to vector<4x4xf32>
    %cst_64 = arith.constant dense<0.000000e+00> : vector<256x4xf32>
    %74 = tpu.matmul %16, %73, %cst_64 {dimension_numbers = #tpu.dot_dimension_numbers<[1], [0], [0], [1], [0, 0, 1, 1], [], []>} : vector<256x4xf32>, vector<4x4xf32>, vector<256x4xf32> -> vector<256x4xf32>
    %75 = arith.addf %71, %74 : vector<256x4xf32>
    %c1_65 = arith.constant 1 : index
    %c2_66 = arith.constant 2 : index
    %c0_67 = arith.constant 0 : index
    %c0_68 = arith.constant 0 : index
    %76 = vector.load %arg4[%c1_65, %c2_66, %c0_67, %c0_68] : memref<4x4x4x4xf32, #tpu.memory_space<vmem>>, vector<1x1x4x4xf32>
    %77 = vector.shape_cast %76 : vector<1x1x4x4xf32> to vector<4x4xf32>
    %cst_69 = arith.constant dense<0.000000e+00> : vector<256x4xf32>
    %78 = tpu.matmul %26, %77, %cst_69 {dimension_numbers = #tpu.dot_dimension_numbers<[1], [0], [0], [1], [0, 0, 1, 1], [], []>} : vector<256x4xf32>, vector<4x4xf32>, vector<256x4xf32> -> vector<256x4xf32>
    %79 = arith.addf %75, %78 : vector<256x4xf32>
    %c1_70 = arith.constant 1 : index
    %c3_71 = arith.constant 3 : index
    %c0_72 = arith.constant 0 : index
    %c0_73 = arith.constant 0 : index
    %80 = vector.load %arg4[%c1_70, %c3_71, %c0_72, %c0_73] : memref<4x4x4x4xf32, #tpu.memory_space<vmem>>, vector<1x1x4x4xf32>
    %81 = vector.shape_cast %80 : vector<1x1x4x4xf32> to vector<4x4xf32>
    %cst_74 = arith.constant dense<0.000000e+00> : vector<256x4xf32>
    %82 = tpu.matmul %31, %81, %cst_74 {dimension_numbers = #tpu.dot_dimension_numbers<[1], [0], [0], [1], [0, 0, 1, 1], [], []>} : vector<256x4xf32>, vector<4x4xf32>, vector<256x4xf32> -> vector<256x4xf32>
    %83 = arith.addf %79, %82 : vector<256x4xf32>
    %84 = vector.broadcast %47 : vector<1x4xf32> to vector<256x4xf32>
    %85 = arith.addf %83, %84 : vector<256x4xf32>
    %86 = vector.shape_cast %85 : vector<256x4xf32> to vector<16x16x4xf32>
    %c0_75 = arith.constant 0 : index
    %c2_76 = arith.constant 2 : index
    %c0_77 = arith.constant 0 : index
    %c0_78 = arith.constant 0 : index
    %c0_79 = arith.constant 0 : index
    %87 = vector.load %arg6[%c0_75, %c2_76, %c0_77, %c0_78, %c0_79] : memref<1x4x16x16x4xf32, #tpu.memory_space<vmem>>, vector<1x1x16x16x4xf32>
    %88 = vector.shape_cast %87 : vector<1x1x16x16x4xf32> to vector<16x16x4xf32>
    %89 = vector.shape_cast %86 : vector<16x16x4xf32> to vector<1x1x16x16x4xf32>
    tpu.vector_store %arg6[%c0_75, %c2_76, %c0_77, %c0_78, %c0_79], %89 {strides = array<i32>} : memref<1x4x16x16x4xf32, #tpu.memory_space<vmem>>, vector<1x1x16x16x4xf32>,
    %c2_80 = arith.constant 2 : index
    %c0_81 = arith.constant 0 : index
    %c0_82 = arith.constant 0 : index
    %c0_83 = arith.constant 0 : index
    %90 = vector.load %arg4[%c2_80, %c0_81, %c0_82, %c0_83] : memref<4x4x4x4xf32, #tpu.memory_space<vmem>>, vector<1x1x4x4xf32>
    %91 = vector.shape_cast %90 : vector<1x1x4x4xf32> to vector<4x4xf32>
    %cst_84 = arith.constant dense<0.000000e+00> : vector<256x4xf32>
    %92 = tpu.matmul %21, %91, %cst_84 {dimension_numbers = #tpu.dot_dimension_numbers<[1], [0], [0], [1], [0, 0, 1, 1], [], []>} : vector<256x4xf32>, vector<4x4xf32>, vector<256x4xf32> -> vector<256x4xf32>
    %c2_85 = arith.constant 2 : index
    %c1_86 = arith.constant 1 : index
    %c0_87 = arith.constant 0 : index
    %c0_88 = arith.constant 0 : index
    %93 = vector.load %arg4[%c2_85, %c1_86, %c0_87, %c0_88] : memref<4x4x4x4xf32, #tpu.memory_space<vmem>>, vector<1x1x4x4xf32>
    %94 = vector.shape_cast %93 : vector<1x1x4x4xf32> to vector<4x4xf32>
    %cst_89 = arith.constant dense<0.000000e+00> : vector<256x4xf32>
    %95 = tpu.matmul %26, %94, %cst_89 {dimension_numbers = #tpu.dot_dimension_numbers<[1], [0], [0], [1], [0, 0, 1, 1], [], []>} : vector<256x4xf32>, vector<4x4xf32>, vector<256x4xf32> -> vector<256x4xf32>
    %96 = arith.addf %92, %95 : vector<256x4xf32>
    %c2_90 = arith.constant 2 : index
    %c2_91 = arith.constant 2 : index
    %c0_92 = arith.constant 0 : index
    %c0_93 = arith.constant 0 : index
    %97 = vector.load %arg4[%c2_90, %c2_91, %c0_92, %c0_93] : memref<4x4x4x4xf32, #tpu.memory_space<vmem>>, vector<1x1x4x4xf32>
    %98 = vector.shape_cast %97 : vector<1x1x4x4xf32> to vector<4x4xf32>
    %cst_94 = arith.constant dense<0.000000e+00> : vector<256x4xf32>
    %99 = tpu.matmul %36, %98, %cst_94 {dimension_numbers = #tpu.dot_dimension_numbers<[1], [0], [0], [1], [0, 0, 1, 1], [], []>} : vector<256x4xf32>, vector<4x4xf32>, vector<256x4xf32> -> vector<256x4xf32>
    %100 = arith.addf %96, %99 : vector<256x4xf32>
    %c2_95 = arith.constant 2 : index
    %c3_96 = arith.constant 3 : index
    %c0_97 = arith.constant 0 : index
    %c0_98 = arith.constant 0 : index
    %101 = vector.load %arg4[%c2_95, %c3_96, %c0_97, %c0_98] : memref<4x4x4x4xf32, #tpu.memory_space<vmem>>, vector<1x1x4x4xf32>
    %102 = vector.shape_cast %101 : vector<1x1x4x4xf32> to vector<4x4xf32>
    %cst_99 = arith.constant dense<0.000000e+00> : vector<256x4xf32>
    %103 = tpu.matmul %41, %102, %cst_99 {dimension_numbers = #tpu.dot_dimension_numbers<[1], [0], [0], [1], [0, 0, 1, 1], [], []>} : vector<256x4xf32>, vector<4x4xf32>, vector<256x4xf32> -> vector<256x4xf32>
    %104 = arith.addf %100, %103 : vector<256x4xf32>
    %105 = vector.broadcast %47 : vector<1x4xf32> to vector<256x4xf32>
    %106 = arith.addf %104, %105 : vector<256x4xf32>
    %107 = vector.shape_cast %106 : vector<256x4xf32> to vector<16x16x4xf32>
    %c0_100 = arith.constant 0 : index
    %c1_101 = arith.constant 1 : index
    %c0_102 = arith.constant 0 : index
    %c0_103 = arith.constant 0 : index
    %c0_104 = arith.constant 0 : index
    %108 = vector.load %arg6[%c0_100, %c1_101, %c0_102, %c0_103, %c0_104] : memref<1x4x16x16x4xf32, #tpu.memory_space<vmem>>, vector<1x1x16x16x4xf32>
    %109 = vector.shape_cast %108 : vector<1x1x16x16x4xf32> to vector<16x16x4xf32>
    %110 = vector.shape_cast %107 : vector<16x16x4xf32> to vector<1x1x16x16x4xf32>
    tpu.vector_store %arg6[%c0_100, %c1_101, %c0_102, %c0_103, %c0_104], %110 {strides = array<i32>} : memref<1x4x16x16x4xf32, #tpu.memory_space<vmem>>, vector<1x1x16x16x4xf32>,
    %c3_105 = arith.constant 3 : index
    %c0_106 = arith.constant 0 : index
    %c0_107 = arith.constant 0 : index
    %c0_108 = arith.constant 0 : index
    %111 = vector.load %arg4[%c3_105, %c0_106, %c0_107, %c0_108] : memref<4x4x4x4xf32, #tpu.memory_space<vmem>>, vector<1x1x4x4xf32>
    %112 = vector.shape_cast %111 : vector<1x1x4x4xf32> to vector<4x4xf32>
    %cst_109 = arith.constant dense<0.000000e+00> : vector<256x4xf32>
    %113 = tpu.matmul %26, %112, %cst_109 {dimension_numbers = #tpu.dot_dimension_numbers<[1], [0], [0], [1], [0, 0, 1, 1], [], []>} : vector<256x4xf32>, vector<4x4xf32>, vector<256x4xf32> -> vector<256x4xf32>
    %c3_110 = arith.constant 3 : index
    %c1_111 = arith.constant 1 : index
    %c0_112 = arith.constant 0 : index
    %c0_113 = arith.constant 0 : index
    %114 = vector.load %arg4[%c3_110, %c1_111, %c0_112, %c0_113] : memref<4x4x4x4xf32, #tpu.memory_space<vmem>>, vector<1x1x4x4xf32>
    %115 = vector.shape_cast %114 : vector<1x1x4x4xf32> to vector<4x4xf32>
    %cst_114 = arith.constant dense<0.000000e+00> : vector<256x4xf32>
    %116 = tpu.matmul %31, %115, %cst_114 {dimension_numbers = #tpu.dot_dimension_numbers<[1], [0], [0], [1], [0, 0, 1, 1], [], []>} : vector<256x4xf32>, vector<4x4xf32>, vector<256x4xf32> -> vector<256x4xf32>
    %117 = arith.addf %113, %116 : vector<256x4xf32>
    %c3_115 = arith.constant 3 : index
    %c2_116 = arith.constant 2 : index
    %c0_117 = arith.constant 0 : index
    %c0_118 = arith.constant 0 : index
    %118 = vector.load %arg4[%c3_115, %c2_116, %c0_117, %c0_118] : memref<4x4x4x4xf32, #tpu.memory_space<vmem>>, vector<1x1x4x4xf32>
    %119 = vector.shape_cast %118 : vector<1x1x4x4xf32> to vector<4x4xf32>
    %cst_119 = arith.constant dense<0.000000e+00> : vector<256x4xf32>
    %120 = tpu.matmul %41, %119, %cst_119 {dimension_numbers = #tpu.dot_dimension_numbers<[1], [0], [0], [1], [0, 0, 1, 1], [], []>} : vector<256x4xf32>, vector<4x4xf32>, vector<256x4xf32> -> vector<256x4xf32>
    %121 = arith.addf %117, %120 : vector<256x4xf32>
    %c3_120 = arith.constant 3 : index
    %c3_121 = arith.constant 3 : index
    %c0_122 = arith.constant 0 : index
    %c0_123 = arith.constant 0 : index
    %122 = vector.load %arg4[%c3_120, %c3_121, %c0_122, %c0_123] : memref<4x4x4x4xf32, #tpu.memory_space<vmem>>, vector<1x1x4x4xf32>
    %123 = vector.shape_cast %122 : vector<1x1x4x4xf32> to vector<4x4xf32>
    %cst_124 = arith.constant dense<0.000000e+00> : vector<256x4xf32>
    %124 = tpu.matmul %46, %123, %cst_124 {dimension_numbers = #tpu.dot_dimension_numbers<[1], [0], [0], [1], [0, 0, 1, 1], [], []>} : vector<256x4xf32>, vector<4x4xf32>, vector<256x4xf32> -> vector<256x4xf32>
    %125 = arith.addf %121, %124 : vector<256x4xf32>
    %126 = vector.broadcast %47 : vector<1x4xf32> to vector<256x4xf32>
    %127 = arith.addf %125, %126 : vector<256x4xf32>
    %128 = vector.shape_cast %127 : vector<256x4xf32> to vector<16x16x4xf32>
    %c0_125 = arith.constant 0 : index
    %c3_126 = arith.constant 3 : index
    %c0_127 = arith.constant 0 : index
    %c0_128 = arith.constant 0 : index
    %c0_129 = arith.constant 0 : index
    %129 = vector.load %arg6[%c0_125, %c3_126, %c0_127, %c0_128, %c0_129] : memref<1x4x16x16x4xf32, #tpu.memory_space<vmem>>, vector<1x1x16x16x4xf32>
    %130 = vector.shape_cast %129 : vector<1x1x16x16x4xf32> to vector<16x16x4xf32>
    %131 = vector.shape_cast %128 : vector<16x16x4xf32> to vector<1x1x16x16x4xf32>
    tpu.vector_store %arg6[%c0_125, %c3_126, %c0_127, %c0_128, %c0_129], %131 {strides = array<i32>} : memref<1x4x16x16x4xf32, #tpu.memory_space<vmem>>, vector<1x1x16x16x4xf32>,
    return
  }
  func.func @transform_0(%arg0: i32, %arg1: i32, %arg2: i32) -> (i32, i32, i32, i32) {
    %c0_i32 = arith.constant 0 : i32
    %c0_i32_0 = arith.constant 0 : i32
    %c0_i32_1 = arith.constant 0 : i32
    %c0_i32_2 = arith.constant 0 : i32
    return %arg0, %c0_i32, %c0_i32_0, %c0_i32_1 : i32, i32, i32, i32
  }
  func.func @transform_1(%arg0: i32, %arg1: i32, %arg2: i32) -> (i32, i32, i32, i32) {
    %c0_i32 = arith.constant 0 : i32
    %c0_i32_0 = arith.constant 0 : i32
    %c0_i32_1 = arith.constant 0 : i32
    %c0_i32_2 = arith.constant 0 : i32
    return %c0_i32, %c0_i32_0, %c0_i32_1, %arg1 : i32, i32, i32, i32
  }
  func.func @transform_2(%arg0: i32, %arg1: i32, %arg2: i32) -> (i32, i32) {
    %c0_i32 = arith.constant 0 : i32
    %c0_i32_0 = arith.constant 0 : i32
    return %c0_i32, %arg1 : i32, i32
  }
  func.func @transform_3(%arg0: i32, %arg1: i32, %arg2: i32) -> (i32, i32, i32, i32, i32) {
    %c0_i32 = arith.constant 0 : i32
    %c0_i32_0 = arith.constant 0 : i32
    %c0_i32_1 = arith.constant 0 : i32
    return %arg0, %c0_i32, %arg2, %c0_i32_0, %arg1 : i32, i32, i32, i32, i32
  }
}

</mosaic_0001>

<llo_original>
// kernel: tpu_custom_call.1
$region0: #{tpu_custom_call.1}
  #allocation0 [shape = 'u32[]', space=smem, size = 0x4, offset = 0x4, fixed_abs, tag = 'smem constant byte address 0x4 - core index']
  #allocation1 [shape = 'u32[72,128]{1,0:T(1,128)}', space=vmem, size = 0x9000, scoped, tag = 'internal scratch']
  %s0 = inlined_call_operand.vmem [shape: f32[2,18,18,4], index: 0, kind: input, shape index: {}]
  %s1 = inlined_call_operand.vmem [shape: f32[4,4,4,4], index: 1, kind: input, shape index: {}]
  %s2 = inlined_call_operand.vmem [shape: f32[1,4], index: 2, kind: input, shape index: {}]
  %s3 = inlined_call_operand.vmem [shape: f32[2,4,16,16,4], index: 3, kind: output, shape index: {}]
  %s4 = sld [smem:[#allocation0]]
  $region45: #{tpu_custom_call.1} parent=0
    _
  %s6 = ssub.s32 1, %s4
  %s7 = scalar_select 0, %s6, %s4
  loop: start=0, step=1, limit=4
  $region2: #{tpu_custom_call.1} parent=0 // loop_pre_header
    _
  $region3: #{tpu_custom_call.1} parent=0 // loop_header
    %s9 = sphi 0, %s13
    %p10 = scmp.ge.s32.totalorder %s9, 4
    %s16 = sphi 0, %s35
    %s17 = sphi 0, %s31
    %s18 = sphi 0, %s27
    %s19 = sphi 0, %s16
    %s20 = sphi 0, %s17
    %s21 = sphi 0, %s18
    %s22 = sphi 0, %s19
    %s23 = sphi 0, %s20
    %s24 = sphi 0, %s21
    %s38 = sphi 0, %s40
    %s41 = sphi 0, %s38
    %s42 = sphi 0, %s41
    %s58 = sphi 0, %s42
    %s64 = sphi 0, %s66
    %s67 = sphi 0, %s64
    %s68 = sphi 0, %s67
    %s84 = sphi 0, %s68
    %s90 = sphi 0, %s92
    %s93 = sphi 0, %s90
    %s94 = sphi 0, %s93
    %s110 = sphi 0, %s94
    %s120 = sphi 0, %s122
    %s123 = sphi 0, %s120
    %s124 = sphi 0, %s123
    %s140 = sphi 0, %s124
  $region4: #{tpu_custom_call.1} parent=0 // loop_header_branch
    %12 = sbr.rel (%p10) target = $region8
  $region5: #{tpu_custom_call.1} parent=0 // loop_body
    %s14 = ssub.s32 %s9, 1
    %s15 = ssub.s32 %s9, 2
    %s25 = sadd.s32 1, %s18
    %p26 = scmp.ge.s32.totalorder %s25, 1
    %s27 = scalar_select %p26, 0, %s25
    %s28 = sadd.s32 1, %s17
    %s29 = scalar_select %p26, %s28, %s17
    %p30 = scmp.ge.s32.totalorder %s29, 1
    %s31 = scalar_select %p30, 0, %s29
    %s32 = sadd.s32 1, %s16
    %s33 = scalar_select %p30, %s32, %s16
    %p34 = scmp.ge.s32.totalorder %s33, 2
    %s35 = scalar_select %p34, 0, %s33
    %s36 = ssub.s32 %s16, %s35
    %p37 = scmp.eq.s32.totalorder %s36, 0
    %s39 = sadd.s32 %s38, 1
    %s40 = scalar_select %p37, %s38, %s39
    %p43 = pneg %p37
    %p44 = scmp.eq.s32.totalorder %s9, 1
    %p45 = por %p43, %p44
    %p46 = scmp.ne.s32.totalorder %s38, %s41
    %p47 = scmp.eq.s32.totalorder %s9, 0
    %p48 = por %p46, %p47
    %p49 = scmp.ne.s32.totalorder %s38, %s41
    %p50 = scmp.eq.s32.totalorder %s14, 1
    %p51 = por %p49, %p50
    %p52 = scmp.ne.s32.totalorder %s41, %s42
    %p53 = scmp.eq.s32.totalorder %s14, 0
    %p54 = por %p52, %p53
    %p55 = scmp.ne.s32.totalorder %s41, %s42
    %p56 = scmp.eq.s32.totalorder %s15, 1
    %p57 = por %p55, %p56
    %p59 = scmp.ne.s32.totalorder %s42, %s58
    %p60 = scmp.eq.s32.totalorder %s15, 0
    %p61 = por %p59, %p60
    %s62 = ssub.s32 %s17, %s31
    %p63 = scmp.eq.s32.totalorder %s62, 0
    %s65 = sadd.s32 %s64, 1
    %s66 = scalar_select %p63, %s64, %s65
    %p69 = pneg %p63
    %p70 = scmp.eq.s32.totalorder %s9, 1
    %p71 = por %p69, %p70
    %p72 = scmp.ne.s32.totalorder %s64, %s67
    %p73 = scmp.eq.s32.totalorder %s9, 0
    %p74 = por %p72, %p73
    %p75 = scmp.ne.s32.totalorder %s64, %s67
    %p76 = scmp.eq.s32.totalorder %s14, 1
    %p77 = por %p75, %p76
    %p78 = scmp.ne.s32.totalorder %s67, %s68
    %p79 = scmp.eq.s32.totalorder %s14, 0
    %p80 = por %p78, %p79
    %p81 = scmp.ne.s32.totalorder %s67, %s68
    %p82 = scmp.eq.s32.totalorder %s15, 1
    %p83 = por %p81, %p82
    %p85 = scmp.ne.s32.totalorder %s68, %s84
    %p86 = scmp.eq.s32.totalorder %s15, 0
    %p87 = por %p85, %p86
    %s88 = ssub.s32 %s17, %s31
    %p89 = scmp.eq.s32.totalorder %s88, 0
    %s91 = sadd.s32 %s90, 1
    %s92 = scalar_select %p89, %s90, %s91
    %p95 = pneg %p89
    %p96 = scmp.eq.s32.totalorder %s9, 1
    %p97 = por %p95, %p96
    %p98 = scmp.ne.s32.totalorder %s90, %s93
    %p99 = scmp.eq.s32.totalorder %s9, 0
    %p100 = por %p98, %p99
    %p101 = scmp.ne.s32.totalorder %s90, %s93
    %p102 = scmp.eq.s32.totalorder %s14, 1
    %p103 = por %p101, %p102
    %p104 = scmp.ne.s32.totalorder %s93, %s94
    %p105 = scmp.eq.s32.totalorder %s14, 0
    %p106 = por %p104, %p105
    %p107 = scmp.ne.s32.totalorder %s93, %s94
    %p108 = scmp.eq.s32.totalorder %s15, 1
    %p109 = por %p107, %p108
    %p111 = scmp.ne.s32.totalorder %s94, %s110
    %p112 = scmp.eq.s32.totalorder %s15, 0
    %p113 = por %p111, %p112
    %s114 = ssub.s32 %s16, %s35
    %s115 = ssub.s32 %s18, %s27
    %s116 = sor.u32 %s114, %s115
    %s117 = ssub.s32 %s17, %s31
    %s118 = sor.u32 %s116, %s117
    %p119 = scmp.eq.s32.totalorder %s118, 0
    %s121 = sadd.s32 %s120, 1
    %s122 = scalar_select %p119, %s120, %s121
    %p125 = pneg %p119
    %p126 = scmp.eq.s32.totalorder %s9, 1
    %p127 = por %p125, %p126
    %p128 = scmp.ne.s32.totalorder %s120, %s123
    %p129 = scmp.eq.s32.totalorder %s9, 0
    %p130 = por %p128, %p129
    %p131 = scmp.ne.s32.totalorder %s120, %s123
    %p132 = scmp.eq.s32.totalorder %s14, 1
    %p133 = por %p131, %p132
    %p134 = scmp.ne.s32.totalorder %s123, %s124
    %p135 = scmp.eq.s32.totalorder %s14, 0
    %p136 = por %p134, %p135
    %p137 = scmp.ne.s32.totalorder %s123, %s124
    %p138 = scmp.eq.s32.totalorder %s15, 1
    %p139 = por %p137, %p138
    %p141 = scmp.ne.s32.totalorder %s124, %s140
    %p142 = scmp.eq.s32.totalorder %s15, 0
    %p143 = por %p141, %p142
    %p144 = scmp.le.s32.totalorder 1, %s9
    %p145 = scmp.lt.s32.totalorder %s9, 3
    %p146 = pnand %p144, %p145
    %p147 = pneg %p146
    // Predicated region
    $region9: #{tpu_custom_call.1} parent=5 // pred_check
      _
    $region10: #{tpu_custom_call.1} parent=5 // pred_check_branch
      %149 = sbr.rel (%p146) target = $region12
    $region11: #{tpu_custom_call.1} parent=5 // pred_region
      %s150 = ssub.s32 %s9, 1
      // Predicated region
      $region13: #{tpu_custom_call.1} parent=11 // pred_check
        %p151 = pneg %p80
      $region14: #{tpu_custom_call.1} parent=11 // pred_check_branch
        %153 = sbr.rel (%p151) target = $region16
      $region15: #{tpu_custom_call.1} parent=11 // pred_region
        %p154 = scmp.lt.s32.totalorder %s20, 0
        %s155 = scalar_select %p154, %s20, 0
        %s156 = smul.addr %s155, 4
        %s157 = scalar_lea.vmem %s1, %s156
      $region16: #{tpu_custom_call.1} parent=11 // pred_fallthru
        _
      // Predicated region
      $region17: #{tpu_custom_call.1} parent=11 // pred_check
        %p158 = pneg %p106
      $region18: #{tpu_custom_call.1} parent=11 // pred_check_branch
        %160 = sbr.rel (%p158) target = $region20
      $region19: #{tpu_custom_call.1} parent=11 // pred_region
        %p161 = scmp.lt.s32.totalorder %s20, 0
        %s162 = scalar_select %p161, %s20, 0
        %s163 = scalar_lea.vmem %s2, %s162
      $region20: #{tpu_custom_call.1} parent=11 // pred_fallthru
        _
    $region12: #{tpu_custom_call.1} parent=5 // pred_fallthru
      _
    %p164 = scmp.lt.s32.totalorder %s9, 2
    // Predicated region
    $region21: #{tpu_custom_call.1} parent=5 // pred_check
      %p165 = pneg %p164
    $region22: #{tpu_custom_call.1} parent=5 // pred_check_branch
      %167 = sbr.rel (%p165) target = $region24
    $region23: #{tpu_custom_call.1} parent=5 // pred_region
      // Predicated region
      $region25: #{tpu_custom_call.1} parent=23 // pred_check
        %p168 = pneg %p48
      $region26: #{tpu_custom_call.1} parent=23 // pred_check_branch
        %170 = sbr.rel (%p168) target = $region28
      $region27: #{tpu_custom_call.1} parent=23 // pred_region
        %p171 = scmp.lt.s32.totalorder %s16, 1
        %s172 = scalar_select %p171, %s16, 1
        %s173 = smul.addr %s172, 54
        %s174 = smul.addr %s173, 8
        %s175 = scalar_lea.vmem %s0, %s174
      $region28: #{tpu_custom_call.1} parent=23 // pred_fallthru
        _
    $region24: #{tpu_custom_call.1} parent=5 // pred_fallthru
      _
    %p176 = scmp.le.s32.totalorder 1, %s9
    %p177 = scmp.lt.s32.totalorder %s9, 3
    %p178 = pnand %p176, %p177
    %p179 = pneg %p178
    // Predicated region
    $region29: #{tpu_custom_call.1} parent=5 // pred_check
      _
    $region30: #{tpu_custom_call.1} parent=5 // pred_check_branch
      %181 = sbr.rel (%p178) target = $region32
    $region31: #{tpu_custom_call.1} parent=5 // pred_region
      %s182 = ssub.s32 %s9, 1
      %p183 = scmp.lt.s32.totalorder %s19, 1
      %s184 = scalar_select %p183, %s19, 1
      %s185 = smul.addr %s184, 54
      %s186 = smul.addr %s185, 8
      %s187 = scalar_lea.vmem %s0, %s186
      %p188 = pneg %p54
      %p189 = pneg %p51
      %p190 = scmp.lt.s32.totalorder %s20, 0
      %s191 = scalar_select %p190, %s20, 0
      %s192 = smul.addr %s191, 4
      %s193 = scalar_lea.vmem %s1, %s192
      %p194 = pneg %p80
      %p195 = pneg %p77
      %p196 = scmp.lt.s32.totalorder %s20, 0
      %s197 = scalar_select %p196, %s20, 0
      %s198 = scalar_lea.vmem %s2, %s197
      %p199 = pneg %p106
      %p200 = pneg %p103
      %p201 = pneg %p136
      %p202 = pneg %p133
      %s203 = smul.u32 16, %s21
      %p204 = scmp.lt.s32.totalorder %s19, 1
      %s205 = scalar_select %p204, %s19, 1
      %p206 = scmp.lt.s32.totalorder %s203, 15
      %s207 = scalar_select %p206, %s203, 15
      %p208 = scmp.lt.s32.totalorder %s20, 0
      %s209 = scalar_select %p208, %s20, 0
      %s210 = smul.addr %s207, 2
      %s211 = sadd.s32 %s209, %s210
      %s212 = smul.addr %s205, 128
      %s213 = sadd.s32 %s211, %s212
      %s214 = smul.addr %s213, 8
      %s215 = scalar_lea.vmem %s3, %s214
      %p216 = scmp.lt.s32.totalorder %s19, 1
      %s217 = scalar_select %p216, %s19, 1
      %s218 = smul.addr %s217, 54
      %s219 = smul.addr %s218, 8
      %s220 = scalar_lea.vmem %s0, %s219
      %p221 = scmp.lt.s32.totalorder %s20, 0
      %s222 = scalar_select %p221, %s20, 0
      %s223 = smul.addr %s222, 4
      %s224 = scalar_lea.vmem %s1, %s223
      %p225 = scmp.lt.s32.totalorder %s20, 0
      %s226 = scalar_select %p225, %s20, 0
      %s227 = scalar_lea.vmem %s2, %s226
      %s228 = smul.u32 16, %s21
      %p229 = scmp.lt.s32.totalorder %s19, 1
      %s230 = scalar_select %p229, %s19, 1
      %p231 = scmp.lt.s32.totalorder %s228, 15
      %s232 = scalar_select %p231, %s228, 15
      %p233 = scmp.lt.s32.totalorder %s20, 0
      %s234 = scalar_select %p233, %s20, 0
      %s235 = smul.addr %s232, 2
      %s236 = sadd.s32 %s234, %s235
      %s237 = smul.addr %s230, 128
      %s238 = sadd.s32 %s236, %s237
      %s239 = smul.addr %s238, 8
      %s240 = scalar_lea.vmem %s3, %s239
      %s241 = smul.u32 16, %s21
      %s242 = smul.u32 %s21, 16
      %s243 = smul.u32 %s242, 24
      %s244 = scalar_lea.vmem %s220, %s243
      %v245 = vld [vmem:[%s244] sm:$0xff]
      %v246 = vld [vmem:[%s244 + $0x8] sm:$0xff]
      %v247 = vld [vmem:[%s244 + $0x18] sm:$0xff]
      %v248 = vld [vmem:[%s244 + $0x20] sm:$0xff]
      %v249 = vld [vmem:[%s244 + $0x30] sm:$0xff]
      %v250 = vld [vmem:[%s244 + $0x38] sm:$0xff]
      %v251 = vld [vmem:[%s244 + $0x48] sm:$0xff]
      %v252 = vld [vmem:[%s244 + $0x50] sm:$0xff]
      %v253 = vld [vmem:[%s244 + $0x60] sm:$0xff]
      %v254 = vld [vmem:[%s244 + $0x68] sm:$0xff]
      %v255 = vld [vmem:[%s244 + $0x78] sm:$0xff]
      %v256 = vld [vmem:[%s244 + $0x80] sm:$0xff]
      %v257 = vld [vmem:[%s244 + $0x90] sm:$0xff]
      %v258 = vld [vmem:[%s244 + $0x98] sm:$0xff]
      %v259 = vld [vmem:[%s244 + $0xa8] sm:$0xff]
      %v260 = vld [vmem:[%s244 + $0xb0] sm:$0xff]
      %v261 = vld [vmem:[%s244 + $0xc0] sm:$0xff]
      %v262 = vld [vmem:[%s244 + $0xc8] sm:$0xff]
      %v263 = vld [vmem:[%s244 + $0xd8] sm:$0xff]
      %v264 = vld [vmem:[%s244 + $0xe0] sm:$0xff]
      %v265 = vld [vmem:[%s244 + $0xf0] sm:$0xff]
      %v266 = vld [vmem:[%s244 + $0xf8] sm:$0xff]
      %v267 = vld [vmem:[%s244 + $0x108] sm:$0xff]
      %v268 = vld [vmem:[%s244 + $0x110] sm:$0xff]
      %v269 = vld [vmem:[%s244 + $0x120] sm:$0xff]
      %v270 = vld [vmem:[%s244 + $0x128] sm:$0xff]
      %v271 = vld [vmem:[%s244 + $0x138] sm:$0xff]
      %v272 = vld [vmem:[%s244 + $0x140] sm:$0xff]
      %v273 = vld [vmem:[%s244 + $0x150] sm:$0xff]
      %v274 = vld [vmem:[%s244 + $0x158] sm:$0xff]
      %v275 = vld [vmem:[%s244 + $0x168] sm:$0xff]
      %v276 = vld [vmem:[%s244 + $0x170] sm:$0xff]
      %v277 = vld [vmem:[%s244 + $0x1] sm:$0xff]
      %v278 = vld [vmem:[%s244 + $0x9] sm:$0xff]
      %v279 = vld [vmem:[%s244 + $0x19] sm:$0xff]
      %v280 = vld [vmem:[%s244 + $0x21] sm:$0xff]
      %v281 = vld [vmem:[%s244 + $0x31] sm:$0xff]
      %v282 = vld [vmem:[%s244 + $0x39] sm:$0xff]
      %v283 = vld [vmem:[%s244 + $0x49] sm:$0xff]
      %v284 = vld [vmem:[%s244 + $0x51] sm:$0xff]
      %v285 = vld [vmem:[%s244 + $0x61] sm:$0xff]
      %v286 = vld [vmem:[%s244 + $0x69] sm:$0xff]
      %v287 = vld [vmem:[%s244 + $0x79] sm:$0xff]
      %v288 = vld [vmem:[%s244 + $0x81] sm:$0xff]
      %v289 = vld [vmem:[%s244 + $0x91] sm:$0xff]
      %v290 = vld [vmem:[%s244 + $0x99] sm:$0xff]
      %v291 = vld [vmem:[%s244 + $0xa9] sm:$0xff]
      %v292 = vld [vmem:[%s244 + $0xb1] sm:$0xff]
      %v293 = vld [vmem:[%s244 + $0xc1] sm:$0xff]
      %v294 = vld [vmem:[%s244 + $0xc9] sm:$0xff]
      %v295 = vld [vmem:[%s244 + $0xd9] sm:$0xff]
      %v296 = vld [vmem:[%s244 + $0xe1] sm:$0xff]
      %v297 = vld [vmem:[%s244 + $0xf1] sm:$0xff]
      %v298 = vld [vmem:[%s244 + $0xf9] sm:$0xff]
      %v299 = vld [vmem:[%s244 + $0x109] sm:$0xff]
      %v300 = vld [vmem:[%s244 + $0x111] sm:$0xff]
      %v301 = vld [vmem:[%s244 + $0x121] sm:$0xff]
      %v302 = vld [vmem:[%s244 + $0x129] sm:$0xff]
      %v303 = vld [vmem:[%s244 + $0x139] sm:$0xff]
      %v304 = vld [vmem:[%s244 + $0x141] sm:$0xff]
      %v305 = vld [vmem:[%s244 + $0x151] sm:$0xff]
      %v306 = vld [vmem:[%s244 + $0x159] sm:$0xff]
      %v307 = vld [vmem:[%s244 + $0x169] sm:$0xff]
      %v308 = vld [vmem:[%s244 + $0x171] sm:$0xff]
      %v309 = vld [vmem:[%s244 + $0x2] sm:$0xff]
      %v310 = vld [vmem:[%s244 + $0xa] sm:$0xff]
      %v311 = vld [vmem:[%s244 + $0x1a] sm:$0xff]
      %v312 = vld [vmem:[%s244 + $0x22] sm:$0xff]
      %v313 = vld [vmem:[%s244 + $0x32] sm:$0xff]
      %v314 = vld [vmem:[%s244 + $0x3a] sm:$0xff]
      %v315 = vld [vmem:[%s244 + $0x4a] sm:$0xff]
      %v316 = vld [vmem:[%s244 + $0x52] sm:$0xff]
      %v317 = vld [vmem:[%s244 + $0x62] sm:$0xff]
      %v318 = vld [vmem:[%s244 + $0x6a] sm:$0xff]
      %v319 = vld [vmem:[%s244 + $0x7a] sm:$0xff]
      %v320 = vld [vmem:[%s244 + $0x82] sm:$0xff]
      %v321 = vld [vmem:[%s244 + $0x92] sm:$0xff]
      %v322 = vld [vmem:[%s244 + $0x9a] sm:$0xff]
      %v323 = vld [vmem:[%s244 + $0xaa] sm:$0xff]
      %v324 = vld [vmem:[%s244 + $0xb2] sm:$0xff]
      %v325 = vld [vmem:[%s244 + $0xc2] sm:$0xff]
      %v326 = vld [vmem:[%s244 + $0xca] sm:$0xff]
      %v327 = vld [vmem:[%s244 + $0xda] sm:$0xff]
      %v328 = vld [vmem:[%s244 + $0xe2] sm:$0xff]
      %v329 = vld [vmem:[%s244 + $0xf2] sm:$0xff]
      %v330 = vld [vmem:[%s244 + $0xfa] sm:$0xff]
      %v331 = vld [vmem:[%s244 + $0x10a] sm:$0xff]
      %v332 = vld [vmem:[%s244 + $0x112] sm:$0xff]
      %v333 = vld [vmem:[%s244 + $0x122] sm:$0xff]
      %v334 = vld [vmem:[%s244 + $0x12a] sm:$0xff]
      %v335 = vld [vmem:[%s244 + $0x13a] sm:$0xff]
      %v336 = vld [vmem:[%s244 + $0x142] sm:$0xff]
      %v337 = vld [vmem:[%s244 + $0x152] sm:$0xff]
      %v338 = vld [vmem:[%s244 + $0x15a] sm:$0xff]
      %v339 = vld [vmem:[%s244 + $0x16a] sm:$0xff]
      %v340 = vld [vmem:[%s244 + $0x172] sm:$0xff]
      %s341 = sadd.s32 %s242, 1
      %s342 = smul.u32 %s341, 24
      %s343 = scalar_lea.vmem %s220, %s342
      %v344 = vld [vmem:[%s343] sm:$0xff]
      %v345 = vld [vmem:[%s343 + $0x8] sm:$0xff]
      %v346 = vld [vmem:[%s343 + $0x18] sm:$0xff]
      %v347 = vld [vmem:[%s343 + $0x20] sm:$0xff]
      %v348 = vld [vmem:[%s343 + $0x30] sm:$0xff]
      %v349 = vld [vmem:[%s343 + $0x38] sm:$0xff]
      %v350 = vld [vmem:[%s343 + $0x48] sm:$0xff]
      %v351 = vld [vmem:[%s343 + $0x50] sm:$0xff]
      %v352 = vld [vmem:[%s343 + $0x60] sm:$0xff]
      %v353 = vld [vmem:[%s343 + $0x68] sm:$0xff]
      %v354 = vld [vmem:[%s343 + $0x78] sm:$0xff]
      %v355 = vld [vmem:[%s343 + $0x80] sm:$0xff]
      %v356 = vld [vmem:[%s343 + $0x90] sm:$0xff]
      %v357 = vld [vmem:[%s343 + $0x98] sm:$0xff]
      %v358 = vld [vmem:[%s343 + $0xa8] sm:$0xff]
      %v359 = vld [vmem:[%s343 + $0xb0] sm:$0xff]
      %v360 = vld [vmem:[%s343 + $0xc0] sm:$0xff]
      %v361 = vld [vmem:[%s343 + $0xc8] sm:$0xff]
      %v362 = vld [vmem:[%s343 + $0xd8] sm:$0xff]
      %v363 = vld [vmem:[%s343 + $0xe0] sm:$0xff]
      %v364 = vld [vmem:[%s343 + $0xf0] sm:$0xff]
      %v365 = vld [vmem:[%s343 + $0xf8] sm:$0xff]
      %v366 = vld [vmem:[%s343 + $0x108] sm:$0xff]
      %v367 = vld [vmem:[%s343 + $0x110] sm:$0xff]
      %v368 = vld [vmem:[%s343 + $0x120] sm:$0xff]
      %v369 = vld [vmem:[%s343 + $0x128] sm:$0xff]
      %v370 = vld [vmem:[%s343 + $0x138] sm:$0xff]
      %v371 = vld [vmem:[%s343 + $0x140] sm:$0xff]
      %v372 = vld [vmem:[%s343 + $0x150] sm:$0xff]
      %v373 = vld [vmem:[%s343 + $0x158] sm:$0xff]
      %v374 = vld [vmem:[%s343 + $0x168] sm:$0xff]
      %v375 = vld [vmem:[%s343 + $0x170] sm:$0xff]
      %v376 = vld [vmem:[%s343 + $0x1] sm:$0xff]
      %v377 = vld [vmem:[%s343 + $0x9] sm:$0xff]
      %v378 = vld [vmem:[%s343 + $0x19] sm:$0xff]
      %v379 = vld [vmem:[%s343 + $0x21] sm:$0xff]
      %v380 = vld [vmem:[%s343 + $0x31] sm:$0xff]
      %v381 = vld [vmem:[%s343 + $0x39] sm:$0xff]
      %v382 = vld [vmem:[%s343 + $0x49] sm:$0xff]
      %v383 = vld [vmem:[%s343 + $0x51] sm:$0xff]
      %v384 = vld [vmem:[%s343 + $0x61] sm:$0xff]
      %v385 = vld [vmem:[%s343 + $0x69] sm:$0xff]
      %v386 = vld [vmem:[%s343 + $0x79] sm:$0xff]
      %v387 = vld [vmem:[%s343 + $0x81] sm:$0xff]
      %v388 = vld [vmem:[%s343 + $0x91] sm:$0xff]
      %v389 = vld [vmem:[%s343 + $0x99] sm:$0xff]
      %v390 = vld [vmem:[%s343 + $0xa9] sm:$0xff]
      %v391 = vld [vmem:[%s343 + $0xb1] sm:$0xff]
      %v392 = vld [vmem:[%s343 + $0xc1] sm:$0xff]
      %v393 = vld [vmem:[%s343 + $0xc9] sm:$0xff]
      %v394 = vld [vmem:[%s343 + $0xd9] sm:$0xff]
      %v395 = vld [vmem:[%s343 + $0xe1] sm:$0xff]
      %v396 = vld [vmem:[%s343 + $0xf1] sm:$0xff]
      %v397 = vld [vmem:[%s343 + $0xf9] sm:$0xff]
      %v398 = vld [vmem:[%s343 + $0x109] sm:$0xff]
      %v399 = vld [vmem:[%s343 + $0x111] sm:$0xff]
      %v400 = vld [vmem:[%s343 + $0x121] sm:$0xff]
      %v401 = vld [vmem:[%s343 + $0x129] sm:$0xff]
      %v402 = vld [vmem:[%s343 + $0x139] sm:$0xff]
      %v403 = vld [vmem:[%s343 + $0x141] sm:$0xff]
      %v404 = vld [vmem:[%s343 + $0x151] sm:$0xff]
      %v405 = vld [vmem:[%s343 + $0x159] sm:$0xff]
      %v406 = vld [vmem:[%s343 + $0x169] sm:$0xff]
      %v407 = vld [vmem:[%s343 + $0x171] sm:$0xff]
      %v408 = vld [vmem:[%s343 + $0x2] sm:$0xff]
      %v409 = vld [vmem:[%s343 + $0xa] sm:$0xff]
      %v410 = vld [vmem:[%s343 + $0x1a] sm:$0xff]
      %v411 = vld [vmem:[%s343 + $0x22] sm:$0xff]
      %v412 = vld [vmem:[%s343 + $0x32] sm:$0xff]
      %v413 = vld [vmem:[%s343 + $0x3a] sm:$0xff]
      %v414 = vld [vmem:[%s343 + $0x4a] sm:$0xff]
      %v415 = vld [vmem:[%s343 + $0x52] sm:$0xff]
      %v416 = vld [vmem:[%s343 + $0x62] sm:$0xff]
      %v417 = vld [vmem:[%s343 + $0x6a] sm:$0xff]
      %v418 = vld [vmem:[%s343 + $0x7a] sm:$0xff]
      %v419 = vld [vmem:[%s343 + $0x82] sm:$0xff]
      %v420 = vld [vmem:[%s343 + $0x92] sm:$0xff]
      %v421 = vld [vmem:[%s343 + $0x9a] sm:$0xff]
      %v422 = vld [vmem:[%s343 + $0xaa] sm:$0xff]
      %v423 = vld [vmem:[%s343 + $0xb2] sm:$0xff]
      %v424 = vld [vmem:[%s343 + $0xc2] sm:$0xff]
      %v425 = vld [vmem:[%s343 + $0xca] sm:$0xff]
      %v426 = vld [vmem:[%s343 + $0xda] sm:$0xff]
      %v427 = vld [vmem:[%s343 + $0xe2] sm:$0xff]
      %v428 = vld [vmem:[%s343 + $0xf2] sm:$0xff]
      %v429 = vld [vmem:[%s343 + $0xfa] sm:$0xff]
      %v430 = vld [vmem:[%s343 + $0x10a] sm:$0xff]
      %v431 = vld [vmem:[%s343 + $0x112] sm:$0xff]
      %v432 = vld [vmem:[%s343 + $0x122] sm:$0xff]
      %v433 = vld [vmem:[%s343 + $0x12a] sm:$0xff]
      %v434 = vld [vmem:[%s343 + $0x13a] sm:$0xff]
      %v435 = vld [vmem:[%s343 + $0x142] sm:$0xff]
      %v436 = vld [vmem:[%s343 + $0x152] sm:$0xff]
      %v437 = vld [vmem:[%s343 + $0x15a] sm:$0xff]
      %v438 = vld [vmem:[%s343 + $0x16a] sm:$0xff]
      %v439 = vld [vmem:[%s343 + $0x172] sm:$0xff]
      %s440 = sadd.s32 %s242, 2
      %s441 = smul.u32 %s440, 24
      %s442 = scalar_lea.vmem %s220, %s441
      %v443 = vld [vmem:[%s442] sm:$0xff]
      %v444 = vld [vmem:[%s442 + $0x8] sm:$0xff]
      %v445 = vld [vmem:[%s442 + $0x18] sm:$0xff]
      %v446 = vld [vmem:[%s442 + $0x20] sm:$0xff]
      %v447 = vld [vmem:[%s442 + $0x30] sm:$0xff]
      %v448 = vld [vmem:[%s442 + $0x38] sm:$0xff]
      %v449 = vld [vmem:[%s442 + $0x48] sm:$0xff]
      %v450 = vld [vmem:[%s442 + $0x50] sm:$0xff]
      %v451 = vld [vmem:[%s442 + $0x60] sm:$0xff]
      %v452 = vld [vmem:[%s442 + $0x68] sm:$0xff]
      %v453 = vld [vmem:[%s442 + $0x78] sm:$0xff]
      %v454 = vld [vmem:[%s442 + $0x80] sm:$0xff]
      %v455 = vld [vmem:[%s442 + $0x90] sm:$0xff]
      %v456 = vld [vmem:[%s442 + $0x98] sm:$0xff]
      %v457 = vld [vmem:[%s442 + $0xa8] sm:$0xff]
      %v458 = vld [vmem:[%s442 + $0xb0] sm:$0xff]
      %v459 = vld [vmem:[%s442 + $0xc0] sm:$0xff]
      %v460 = vld [vmem:[%s442 + $0xc8] sm:$0xff]
      %v461 = vld [vmem:[%s442 + $0xd8] sm:$0xff]
      %v462 = vld [vmem:[%s442 + $0xe0] sm:$0xff]
      %v463 = vld [vmem:[%s442 + $0xf0] sm:$0xff]
      %v464 = vld [vmem:[%s442 + $0xf8] sm:$0xff]
      %v465 = vld [vmem:[%s442 + $0x108] sm:$0xff]
      %v466 = vld [vmem:[%s442 + $0x110] sm:$0xff]
      %v467 = vld [vmem:[%s442 + $0x120] sm:$0xff]
      %v468 = vld [vmem:[%s442 + $0x128] sm:$0xff]
      %v469 = vld [vmem:[%s442 + $0x138] sm:$0xff]
      %v470 = vld [vmem:[%s442 + $0x140] sm:$0xff]
      %v471 = vld [vmem:[%s442 + $0x150] sm:$0xff]
      %v472 = vld [vmem:[%s442 + $0x158] sm:$0xff]
      %v473 = vld [vmem:[%s442 + $0x168] sm:$0xff]
      %v474 = vld [vmem:[%s442 + $0x170] sm:$0xff]
      %v475 = vld [vmem:[%s442 + $0x1] sm:$0xff]
      %v476 = vld [vmem:[%s442 + $0x9] sm:$0xff]
      %v477 = vld [vmem:[%s442 + $0x19] sm:$0xff]
      %v478 = vld [vmem:[%s442 + $0x21] sm:$0xff]
      %v479 = vld [vmem:[%s442 + $0x31] sm:$0xff]
      %v480 = vld [vmem:[%s442 + $0x39] sm:$0xff]
      %v481 = vld [vmem:[%s442 + $0x49] sm:$0xff]
      %v482 = vld [vmem:[%s442 + $0x51] sm:$0xff]
      %v483 = vld [vmem:[%s442 + $0x61] sm:$0xff]
      %v484 = vld [vmem:[%s442 + $0x69] sm:$0xff]
      %v485 = vld [vmem:[%s442 + $0x79] sm:$0xff]
      %v486 = vld [vmem:[%s442 + $0x81] sm:$0xff]
      %v487 = vld [vmem:[%s442 + $0x91] sm:$0xff]
      %v488 = vld [vmem:[%s442 + $0x99] sm:$0xff]
      %v489 = vld [vmem:[%s442 + $0xa9] sm:$0xff]
      %v490 = vld [vmem:[%s442 + $0xb1] sm:$0xff]
      %v491 = vld [vmem:[%s442 + $0xc1] sm:$0xff]
      %v492 = vld [vmem:[%s442 + $0xc9] sm:$0xff]
      %v493 = vld [vmem:[%s442 + $0xd9] sm:$0xff]
      %v494 = vld [vmem:[%s442 + $0xe1] sm:$0xff]
      %v495 = vld [vmem:[%s442 + $0xf1] sm:$0xff]
      %v496 = vld [vmem:[%s442 + $0xf9] sm:$0xff]
      %v497 = vld [vmem:[%s442 + $0x109] sm:$0xff]
      %v498 = vld [vmem:[%s442 + $0x111] sm:$0xff]
      %v499 = vld [vmem:[%s442 + $0x121] sm:$0xff]
      %v500 = vld [vmem:[%s442 + $0x129] sm:$0xff]
      %v501 = vld [vmem:[%s442 + $0x139] sm:$0xff]
      %v502 = vld [vmem:[%s442 + $0x141] sm:$0xff]
      %v503 = vld [vmem:[%s442 + $0x151] sm:$0xff]
      %v504 = vld [vmem:[%s442 + $0x159] sm:$0xff]
      %v505 = vld [vmem:[%s442 + $0x169] sm:$0xff]
      %v506 = vld [vmem:[%s442 + $0x171] sm:$0xff]
      %v507 = vld [vmem:[%s442 + $0x2] sm:$0xff]
      %v508 = vld [vmem:[%s442 + $0xa] sm:$0xff]
      %v509 = vld [vmem:[%s442 + $0x1a] sm:$0xff]
      %v510 = vld [vmem:[%s442 + $0x22] sm:$0xff]
      %v511 = vld [vmem:[%s442 + $0x32] sm:$0xff]
      %v512 = vld [vmem:[%s442 + $0x3a] sm:$0xff]
      %v513 = vld [vmem:[%s442 + $0x4a] sm:$0xff]
      %v514 = vld [vmem:[%s442 + $0x52] sm:$0xff]
      %v515 = vld [vmem:[%s442 + $0x62] sm:$0xff]
      %v516 = vld [vmem:[%s442 + $0x6a] sm:$0xff]
      %v517 = vld [vmem:[%s442 + $0x7a] sm:$0xff]
      %v518 = vld [vmem:[%s442 + $0x82] sm:$0xff]
      %v519 = vld [vmem:[%s442 + $0x92] sm:$0xff]
      %v520 = vld [vmem:[%s442 + $0x9a] sm:$0xff]
      %v521 = vld [vmem:[%s442 + $0xaa] sm:$0xff]
      %v522 = vld [vmem:[%s442 + $0xb2] sm:$0xff]
      %v523 = vld [vmem:[%s442 + $0xc2] sm:$0xff]
      %v524 = vld [vmem:[%s442 + $0xca] sm:$0xff]
      %v525 = vld [vmem:[%s442 + $0xda] sm:$0xff]
      %v526 = vld [vmem:[%s442 + $0xe2] sm:$0xff]
      %v527 = vld [vmem:[%s442 + $0xf2] sm:$0xff]
      %v528 = vld [vmem:[%s442 + $0xfa] sm:$0xff]
      %v529 = vld [vmem:[%s442 + $0x10a] sm:$0xff]
      %v530 = vld [vmem:[%s442 + $0x112] sm:$0xff]
      %v531 = vld [vmem:[%s442 + $0x122] sm:$0xff]
      %v532 = vld [vmem:[%s442 + $0x12a] sm:$0xff]
      %v533 = vld [vmem:[%s442 + $0x13a] sm:$0xff]
      %v534 = vld [vmem:[%s442 + $0x142] sm:$0xff]
      %v535 = vld [vmem:[%s442 + $0x152] sm:$0xff]
      %v536 = vld [vmem:[%s442 + $0x15a] sm:$0xff]
      %v537 = vld [vmem:[%s442 + $0x16a] sm:$0xff]
      %v538 = vld [vmem:[%s442 + $0x172] sm:$0xff]
      %v539 = vld [vmem:[%s227] sm:$0x1]
      %v540 = vld [vmem:[%s224] sm:$0xf]
      %s541 = scalar_lea.vmem %s224, 4
      %v542 = vld [vmem:[%s541] sm:$0xf]
      %vm543 = vcmask 31744
      %v545 = vsel %vm543, %v277, 0
      %v548 = vsel %vm543, %v278, 0
      %v551 = vsel %vm543, %v279, 0
      %v554 = vsel %vm543, %v280, 0
      %v557 = vsel %vm543, %v281, 0
      %v560 = vsel %vm543, %v282, 0
      %v563 = vsel %vm543, %v283, 0
      %v566 = vsel %vm543, %v284, 0
      %v569 = vsel %vm543, %v285, 0
      %v572 = vsel %vm543, %v286, 0
      %v575 = vsel %vm543, %v287, 0
      %v578 = vsel %vm543, %v288, 0
      %v581 = vsel %vm543, %v289, 0
      %v584 = vsel %vm543, %v290, 0
      %v587 = vsel %vm543, %v291, 0
      %v590 = vsel %vm543, %v292, 0
      %v593 = vsel %vm543, %v293, 0
      %v596 = vsel %vm543, %v294, 0
      %v599 = vsel %vm543, %v295, 0
      %v602 = vsel %vm543, %v296, 0
      %v605 = vsel %vm543, %v297, 0
      %v608 = vsel %vm543, %v298, 0
      %v611 = vsel %vm543, %v299, 0
      %v614 = vsel %vm543, %v300, 0
      %v617 = vsel %vm543, %v301, 0
      %v620 = vsel %vm543, %v302, 0
      %v623 = vsel %vm543, %v303, 0
      %v626 = vsel %vm543, %v304, 0
      %v629 = vsel %vm543, %v305, 0
      %v632 = vsel %vm543, %v306, 0
      %v635 = vsel %vm543, %v307, 0
      %v638 = vsel %vm543, %v308, 0
      %vm640 = vcmask 1043456
      %v642 = vsel %vm640, %v542, 0
      %644 = vmatpush.msra.mxu0 0.0
      %645 = vmatpush.msra.mxu0 0.0
      %646 = vmatpush.msra.mxu0 0.0
      %647 = vmatpush.msra.mxu0 0.0
      %648 = vmatpush.msra.mxu0 0.0
      %649 = vmatpush.msra.mxu0 0.0
      %650 = vmatpush.msra.mxu0 0.0
      %651 = vmatpush.msra.mxu0 0.0
      %652 = vmatpush.msra.mxu0 0.0
      %653 = vmatpush.msra.mxu0 0.0
      %654 = vmatpush.msra.mxu0 0.0
      %655 = vmatpush.msra.mxu0 0.0
      %656 = vmatpush.msra.mxu0 0.0
      %657 = vmatpush.msra.mxu0 0.0
      %658 = vmatpush.msra.mxu0 0.0
      %659 = vmatpush.msra.mxu0 %v642
      %660 = vmatmul.f32.gmra.mxu0 %v545
      %v661 = vpop.f32.mrf.mxu0
      %v662 = vadd.f32 0.0, %v661
      %663 = vmatmul.f32.gmra.mxu0 %v548
      %v664 = vpop.f32.mrf.mxu0
      %v665 = vadd.f32 0.0, %v664
      %666 = vmatmul.f32.gmra.mxu0 %v551
      %v667 = vpop.f32.mrf.mxu0
      %v668 = vadd.f32 0.0, %v667
      %669 = vmatmul.f32.gmra.mxu0 %v554
      %v670 = vpop.f32.mrf.mxu0
      %v671 = vadd.f32 0.0, %v670
      %672 = vmatmul.f32.gmra.mxu0 %v557
      %v673 = vpop.f32.mrf.mxu0
      %v674 = vadd.f32 0.0, %v673
      %675 = vmatmul.f32.gmra.mxu0 %v560
      %v676 = vpop.f32.mrf.mxu0
      %v677 = vadd.f32 0.0, %v676
      %678 = vmatmul.f32.gmra.mxu0 %v563
      %v679 = vpop.f32.mrf.mxu0
      %v680 = vadd.f32 0.0, %v679
      %681 = vmatmul.f32.gmra.mxu0 %v566
      %v682 = vpop.f32.mrf.mxu0
      %v683 = vadd.f32 0.0, %v682
      %684 = vmatmul.f32.gmra.mxu0 %v569
      %v685 = vpop.f32.mrf.mxu0
      %v686 = vadd.f32 0.0, %v685
      %687 = vmatmul.f32.gmra.mxu0 %v572
      %v688 = vpop.f32.mrf.mxu0
      %v689 = vadd.f32 0.0, %v688
      %690 = vmatmul.f32.gmra.mxu0 %v575
      %v691 = vpop.f32.mrf.mxu0
      %v692 = vadd.f32 0.0, %v691
      %693 = vmatmul.f32.gmra.mxu0 %v578
      %v694 = vpop.f32.mrf.mxu0
      %v695 = vadd.f32 0.0, %v694
      %696 = vmatmul.f32.gmra.mxu0 %v581
      %v697 = vpop.f32.mrf.mxu0
      %v698 = vadd.f32 0.0, %v697
      %699 = vmatmul.f32.gmra.mxu0 %v584
      %v700 = vpop.f32.mrf.mxu0
      %v701 = vadd.f32 0.0, %v700
      %702 = vmatmul.f32.gmra.mxu0 %v587
      %v703 = vpop.f32.mrf.mxu0
      %v704 = vadd.f32 0.0, %v703
      %705 = vmatmul.f32.gmra.mxu0 %v590
      %v706 = vpop.f32.mrf.mxu0
      %v707 = vadd.f32 0.0, %v706
      %708 = vmatmul.f32.gmra.mxu0 %v593
      %v709 = vpop.f32.mrf.mxu0
      %v710 = vadd.f32 0.0, %v709
      %711 = vmatmul.f32.gmra.mxu0 %v596
      %v712 = vpop.f32.mrf.mxu0
      %v713 = vadd.f32 0.0, %v712
      %714 = vmatmul.f32.gmra.mxu0 %v599
      %v715 = vpop.f32.mrf.mxu0
      %v716 = vadd.f32 0.0, %v715
      %717 = vmatmul.f32.gmra.mxu0 %v602
      %v718 = vpop.f32.mrf.mxu0
      %v719 = vadd.f32 0.0, %v718
      %720 = vmatmul.f32.gmra.mxu0 %v605
      %v721 = vpop.f32.mrf.mxu0
      %v722 = vadd.f32 0.0, %v721
      %723 = vmatmul.f32.gmra.mxu0 %v608
      %v724 = vpop.f32.mrf.mxu0
      %v725 = vadd.f32 0.0, %v724
      %726 = vmatmul.f32.gmra.mxu0 %v611
      %v727 = vpop.f32.mrf.mxu0
      %v728 = vadd.f32 0.0, %v727
      %729 = vmatmul.f32.gmra.mxu0 %v614
      %v730 = vpop.f32.mrf.mxu0
      %v731 = vadd.f32 0.0, %v730
      %732 = vmatmul.f32.gmra.mxu0 %v617
      %v733 = vpop.f32.mrf.mxu0
      %v734 = vadd.f32 0.0, %v733
      %735 = vmatmul.f32.gmra.mxu0 %v620
      %v736 = vpop.f32.mrf.mxu0
      %v737 = vadd.f32 0.0, %v736
      %738 = vmatmul.f32.gmra.mxu0 %v623
      %v739 = vpop.f32.mrf.mxu0
      %v740 = vadd.f32 0.0, %v739
      %741 = vmatmul.f32.gmra.mxu0 %v626
      %v742 = vpop.f32.mrf.mxu0
      %v743 = vadd.f32 0.0, %v742
      %744 = vmatmul.f32.gmra.mxu0 %v629
      %v745 = vpop.f32.mrf.mxu0
      %v746 = vadd.f32 0.0, %v745
      %747 = vmatmul.f32.gmra.mxu0 %v632
      %v748 = vpop.f32.mrf.mxu0
      %v749 = vadd.f32 0.0, %v748
      %750 = vmatmul.f32.gmra.mxu0 %v635
      %v751 = vpop.f32.mrf.mxu0
      %v752 = vadd.f32 0.0, %v751
      %753 = vmatmul.f32.gmra.mxu0 %v638
      %v754 = vpop.f32.mrf.mxu0
      %v755 = vadd.f32 0.0, %v754
      %756 = vdwg.mxu0
      %v758 = vsel %vm543, %v245, 0
      %v761 = vsel %vm543, %v246, 0
      %v764 = vsel %vm543, %v247, 0
      %v767 = vsel %vm543, %v248, 0
      %v770 = vsel %vm543, %v249, 0
      %v773 = vsel %vm543, %v250, 0
      %v776 = vsel %vm543, %v251, 0
      %v779 = vsel %vm543, %v252, 0
      %v782 = vsel %vm543, %v253, 0
      %v785 = vsel %vm543, %v254, 0
      %v788 = vsel %vm543, %v255, 0
      %v791 = vsel %vm543, %v256, 0
      %v794 = vsel %vm543, %v257, 0
      %v797 = vsel %vm543, %v258, 0
      %v800 = vsel %vm543, %v259, 0
      %v803 = vsel %vm543, %v260, 0
      %v806 = vsel %vm543, %v261, 0
      %v809 = vsel %vm543, %v262, 0
      %v812 = vsel %vm543, %v263, 0
      %v815 = vsel %vm543, %v264, 0
      %v818 = vsel %vm543, %v265, 0
      %v821 = vsel %vm543, %v266, 0
      %v824 = vsel %vm543, %v267, 0
      %v827 = vsel %vm543, %v268, 0
      %v830 = vsel %vm543, %v269, 0
      %v833 = vsel %vm543, %v270, 0
      %v836 = vsel %vm543, %v271, 0
      %v839 = vsel %vm543, %v272, 0
      %v842 = vsel %vm543, %v273, 0
      %v845 = vsel %vm543, %v274, 0
      %v848 = vsel %vm543, %v275, 0
      %v851 = vsel %vm543, %v276, 0
      %v854 = vsel %vm640, %v540, 0
      %856 = vmatpush.msra.mxu0 0.0
      %857 = vmatpush.msra.mxu0 0.0
      %858 = vmatpush.msra.mxu0 0.0
      %859 = vmatpush.msra.mxu0 0.0
      %860 = vmatpush.msra.mxu0 0.0
      %861 = vmatpush.msra.mxu0 0.0
      %862 = vmatpush.msra.mxu0 0.0
      %863 = vmatpush.msra.mxu0 0.0
      %864 = vmatpush.msra.mxu0 0.0
      %865 = vmatpush.msra.mxu0 0.0
      %866 = vmatpush.msra.mxu0 0.0
      %867 = vmatpush.msra.mxu0 0.0
      %868 = vmatpush.msra.mxu0 0.0
      %869 = vmatpush.msra.mxu0 0.0
      %870 = vmatpush.msra.mxu0 0.0
      %871 = vmatpush.msra.mxu0 %v854
      %872 = vmatmul.f32.gmra.mxu0 %v758
      %v873 = vpop.f32.mrf.mxu0
      %v874 = vadd.f32 %v662, %v873
      %875 = vmatmul.f32.gmra.mxu0 %v761
      %v876 = vpop.f32.mrf.mxu0
      %v877 = vadd.f32 %v665, %v876
      %878 = vmatmul.f32.gmra.mxu0 %v764
      %v879 = vpop.f32.mrf.mxu0
      %v880 = vadd.f32 %v668, %v879
      %881 = vmatmul.f32.gmra.mxu0 %v767
      %v882 = vpop.f32.mrf.mxu0
      %v883 = vadd.f32 %v671, %v882
      %884 = vmatmul.f32.gmra.mxu0 %v770
      %v885 = vpop.f32.mrf.mxu0
      %v886 = vadd.f32 %v674, %v885
      %887 = vmatmul.f32.gmra.mxu0 %v773
      %v888 = vpop.f32.mrf.mxu0
      %v889 = vadd.f32 %v677, %v888
      %890 = vmatmul.f32.gmra.mxu0 %v776
      %v891 = vpop.f32.mrf.mxu0
      %v892 = vadd.f32 %v680, %v891
      %893 = vmatmul.f32.gmra.mxu0 %v779
      %v894 = vpop.f32.mrf.mxu0
      %v895 = vadd.f32 %v683, %v894
      %896 = vmatmul.f32.gmra.mxu0 %v782
      %v897 = vpop.f32.mrf.mxu0
      %v898 = vadd.f32 %v686, %v897
      %899 = vmatmul.f32.gmra.mxu0 %v785
      %v900 = vpop.f32.mrf.mxu0
      %v901 = vadd.f32 %v689, %v900
      %902 = vmatmul.f32.gmra.mxu0 %v788
      %v903 = vpop.f32.mrf.mxu0
      %v904 = vadd.f32 %v692, %v903
      %905 = vmatmul.f32.gmra.mxu0 %v791
      %v906 = vpop.f32.mrf.mxu0
      %v907 = vadd.f32 %v695, %v906
      %908 = vmatmul.f32.gmra.mxu0 %v794
      %v909 = vpop.f32.mrf.mxu0
      %v910 = vadd.f32 %v698, %v909
      %911 = vmatmul.f32.gmra.mxu0 %v797
      %v912 = vpop.f32.mrf.mxu0
      %v913 = vadd.f32 %v701, %v912
      %914 = vmatmul.f32.gmra.mxu0 %v800
      %v915 = vpop.f32.mrf.mxu0
      %v916 = vadd.f32 %v704, %v915
      %917 = vmatmul.f32.gmra.mxu0 %v803
      %v918 = vpop.f32.mrf.mxu0
      %v919 = vadd.f32 %v707, %v918
      %920 = vmatmul.f32.gmra.mxu0 %v806
      %v921 = vpop.f32.mrf.mxu0
      %v922 = vadd.f32 %v710, %v921
      %923 = vmatmul.f32.gmra.mxu0 %v809
      %v924 = vpop.f32.mrf.mxu0
      %v925 = vadd.f32 %v713, %v924
      %926 = vmatmul.f32.gmra.mxu0 %v812
      %v927 = vpop.f32.mrf.mxu0
      %v928 = vadd.f32 %v716, %v927
      %929 = vmatmul.f32.gmra.mxu0 %v815
      %v930 = vpop.f32.mrf.mxu0
      %v931 = vadd.f32 %v719, %v930
      %932 = vmatmul.f32.gmra.mxu0 %v818
      %v933 = vpop.f32.mrf.mxu0
      %v934 = vadd.f32 %v722, %v933
      %935 = vmatmul.f32.gmra.mxu0 %v821
      %v936 = vpop.f32.mrf.mxu0
      %v937 = vadd.f32 %v725, %v936
      %938 = vmatmul.f32.gmra.mxu0 %v824
      %v939 = vpop.f32.mrf.mxu0
      %v940 = vadd.f32 %v728, %v939
      %941 = vmatmul.f32.gmra.mxu0 %v827
      %v942 = vpop.f32.mrf.mxu0
      %v943 = vadd.f32 %v731, %v942
      %944 = vmatmul.f32.gmra.mxu0 %v830
      %v945 = vpop.f32.mrf.mxu0
      %v946 = vadd.f32 %v734, %v945
      %947 = vmatmul.f32.gmra.mxu0 %v833
      %v948 = vpop.f32.mrf.mxu0
      %v949 = vadd.f32 %v737, %v948
      %950 = vmatmul.f32.gmra.mxu0 %v836
      %v951 = vpop.f32.mrf.mxu0
      %v952 = vadd.f32 %v740, %v951
      %953 = vmatmul.f32.gmra.mxu0 %v839
      %v954 = vpop.f32.mrf.mxu0
      %v955 = vadd.f32 %v743, %v954
      %956 = vmatmul.f32.gmra.mxu0 %v842
      %v957 = vpop.f32.mrf.mxu0
      %v958 = vadd.f32 %v746, %v957
      %959 = vmatmul.f32.gmra.mxu0 %v845
      %v960 = vpop.f32.mrf.mxu0
      %v961 = vadd.f32 %v749, %v960
      %962 = vmatmul.f32.gmra.mxu0 %v848
      %v963 = vpop.f32.mrf.mxu0
      %v964 = vadd.f32 %v752, %v963
      %965 = vmatmul.f32.gmra.mxu0 %v851
      %v966 = vpop.f32.mrf.mxu0
      %v967 = vadd.f32 %v755, %v966
      %968 = vdwg.mxu0
      %s969 = scalar_lea.vmem %s224, 8
      %v970 = vld [vmem:[%s969] sm:$0xf]
      %v972 = vsel %vm543, %v344, 0
      %v975 = vsel %vm543, %v345, 0
      %v978 = vsel %vm543, %v346, 0
      %v981 = vsel %vm543, %v347, 0
      %v984 = vsel %vm543, %v348, 0
      %v987 = vsel %vm543, %v349, 0
      %v990 = vsel %vm543, %v350, 0
      %v993 = vsel %vm543, %v351, 0
      %v996 = vsel %vm543, %v352, 0
      %v999 = vsel %vm543, %v353, 0
      %v1002 = vsel %vm543, %v354, 0
      %v1005 = vsel %vm543, %v355, 0
      %v1008 = vsel %vm543, %v356, 0
      %v1011 = vsel %vm543, %v357, 0
      %v1014 = vsel %vm543, %v358, 0
      %v1017 = vsel %vm543, %v359, 0
      %v1020 = vsel %vm543, %v360, 0
      %v1023 = vsel %vm543, %v361, 0
      %v1026 = vsel %vm543, %v362, 0
      %v1029 = vsel %vm543, %v363, 0
      %v1032 = vsel %vm543, %v364, 0
      %v1035 = vsel %vm543, %v365, 0
      %v1038 = vsel %vm543, %v366, 0
      %v1041 = vsel %vm543, %v367, 0
      %v1044 = vsel %vm543, %v368, 0
      %v1047 = vsel %vm543, %v369, 0
      %v1050 = vsel %vm543, %v370, 0
      %v1053 = vsel %vm543, %v371, 0
      %v1056 = vsel %vm543, %v372, 0
      %v1059 = vsel %vm543, %v373, 0
      %v1062 = vsel %vm543, %v374, 0
      %v1065 = vsel %vm543, %v375, 0
      %v1068 = vsel %vm640, %v970, 0
      %1070 = vmatpush.msra.mxu0 0.0
      %1071 = vmatpush.msra.mxu0 0.0
      %1072 = vmatpush.msra.mxu0 0.0
      %1073 = vmatpush.msra.mxu0 0.0
      %1074 = vmatpush.msra.mxu0 0.0
      %1075 = vmatpush.msra.mxu0 0.0
      %1076 = vmatpush.msra.mxu0 0.0
      %1077 = vmatpush.msra.mxu0 0.0
      %1078 = vmatpush.msra.mxu0 0.0
      %1079 = vmatpush.msra.mxu0 0.0
      %1080 = vmatpush.msra.mxu0 0.0
      %1081 = vmatpush.msra.mxu0 0.0
      %1082 = vmatpush.msra.mxu0 0.0
      %1083 = vmatpush.msra.mxu0 0.0
      %1084 = vmatpush.msra.mxu0 0.0
      %1085 = vmatpush.msra.mxu0 %v1068
      %1086 = vmatmul.f32.gmra.mxu0 %v972
      %v1087 = vpop.f32.mrf.mxu0
      %v1088 = vadd.f32 0.0, %v1087
      %1089 = vmatmul.f32.gmra.mxu0 %v975
      %v1090 = vpop.f32.mrf.mxu0
      %v1091 = vadd.f32 0.0, %v1090
      %1092 = vmatmul.f32.gmra.mxu0 %v978
      %v1093 = vpop.f32.mrf.mxu0
      %v1094 = vadd.f32 0.0, %v1093
      %1095 = vmatmul.f32.gmra.mxu0 %v981
      %v1096 = vpop.f32.mrf.mxu0
      %v1097 = vadd.f32 0.0, %v1096
      %1098 = vmatmul.f32.gmra.mxu0 %v984
      %v1099 = vpop.f32.mrf.mxu0
      %v1100 = vadd.f32 0.0, %v1099
      %1101 = vmatmul.f32.gmra.mxu0 %v987
      %v1102 = vpop.f32.mrf.mxu0
      %v1103 = vadd.f32 0.0, %v1102
      %1104 = vmatmul.f32.gmra.mxu0 %v990
      %v1105 = vpop.f32.mrf.mxu0
      %v1106 = vadd.f32 0.0, %v1105
      %1107 = vmatmul.f32.gmra.mxu0 %v993
      %v1108 = vpop.f32.mrf.mxu0
      %v1109 = vadd.f32 0.0, %v1108
      %1110 = vmatmul.f32.gmra.mxu0 %v996
      %v1111 = vpop.f32.mrf.mxu0
      %v1112 = vadd.f32 0.0, %v1111
      %1113 = vmatmul.f32.gmra.mxu0 %v999
      %v1114 = vpop.f32.mrf.mxu0
      %v1115 = vadd.f32 0.0, %v1114
      %1116 = vmatmul.f32.gmra.mxu0 %v1002
      %v1117 = vpop.f32.mrf.mxu0
      %v1118 = vadd.f32 0.0, %v1117
      %1119 = vmatmul.f32.gmra.mxu0 %v1005
      %v1120 = vpop.f32.mrf.mxu0
      %v1121 = vadd.f32 0.0, %v1120
      %1122 = vmatmul.f32.gmra.mxu0 %v1008
      %v1123 = vpop.f32.mrf.mxu0
      %v1124 = vadd.f32 0.0, %v1123
      %1125 = vmatmul.f32.gmra.mxu0 %v1011
      %v1126 = vpop.f32.mrf.mxu0
      %v1127 = vadd.f32 0.0, %v1126
      %1128 = vmatmul.f32.gmra.mxu0 %v1014
      %v1129 = vpop.f32.mrf.mxu0
      %v1130 = vadd.f32 0.0, %v1129
      %1131 = vmatmul.f32.gmra.mxu0 %v1017
      %v1132 = vpop.f32.mrf.mxu0
      %v1133 = vadd.f32 0.0, %v1132
      %1134 = vmatmul.f32.gmra.mxu0 %v1020
      %v1135 = vpop.f32.mrf.mxu0
      %v1136 = vadd.f32 0.0, %v1135
      %1137 = vmatmul.f32.gmra.mxu0 %v1023
      %v1138 = vpop.f32.mrf.mxu0
      %v1139 = vadd.f32 0.0, %v1138
      %1140 = vmatmul.f32.gmra.mxu0 %v1026
      %v1141 = vpop.f32.mrf.mxu0
      %v1142 = vadd.f32 0.0, %v1141
      %1143 = vmatmul.f32.gmra.mxu0 %v1029
      %v1144 = vpop.f32.mrf.mxu0
      %v1145 = vadd.f32 0.0, %v1144
      %1146 = vmatmul.f32.gmra.mxu0 %v1032
      %v1147 = vpop.f32.mrf.mxu0
      %v1148 = vadd.f32 0.0, %v1147
      %1149 = vmatmul.f32.gmra.mxu0 %v1035
      %v1150 = vpop.f32.mrf.mxu0
      %v1151 = vadd.f32 0.0, %v1150
      %1152 = vmatmul.f32.gmra.mxu0 %v1038
      %v1153 = vpop.f32.mrf.mxu0
      %v1154 = vadd.f32 0.0, %v1153
      %1155 = vmatmul.f32.gmra.mxu0 %v1041
      %v1156 = vpop.f32.mrf.mxu0
      %v1157 = vadd.f32 0.0, %v1156
      %1158 = vmatmul.f32.gmra.mxu0 %v1044
      %v1159 = vpop.f32.mrf.mxu0
      %v1160 = vadd.f32 0.0, %v1159
      %1161 = vmatmul.f32.gmra.mxu0 %v1047
      %v1162 = vpop.f32.mrf.mxu0
      %v1163 = vadd.f32 0.0, %v1162
      %1164 = vmatmul.f32.gmra.mxu0 %v1050
      %v1165 = vpop.f32.mrf.mxu0
      %v1166 = vadd.f32 0.0, %v1165
      %1167 = vmatmul.f32.gmra.mxu0 %v1053
      %v1168 = vpop.f32.mrf.mxu0
      %v1169 = vadd.f32 0.0, %v1168
      %1170 = vmatmul.f32.gmra.mxu0 %v1056
      %v1171 = vpop.f32.mrf.mxu0
      %v1172 = vadd.f32 0.0, %v1171
      %1173 = vmatmul.f32.gmra.mxu0 %v1059
      %v1174 = vpop.f32.mrf.mxu0
      %v1175 = vadd.f32 0.0, %v1174
      %1176 = vmatmul.f32.gmra.mxu0 %v1062
      %v1177 = vpop.f32.mrf.mxu0
      %v1178 = vadd.f32 0.0, %v1177
      %1179 = vmatmul.f32.gmra.mxu0 %v1065
      %v1180 = vpop.f32.mrf.mxu0
      %v1181 = vadd.f32 0.0, %v1180
      %1182 = vdwg.mxu0
      %v1183 = vadd.f32 %v874, %v1088
      %v1184 = vadd.f32 %v877, %v1091
      %v1185 = vadd.f32 %v880, %v1094
      %v1186 = vadd.f32 %v883, %v1097
      %v1187 = vadd.f32 %v886, %v1100
      %v1188 = vadd.f32 %v889, %v1103
      %v1189 = vadd.f32 %v892, %v1106
      %v1190 = vadd.f32 %v895, %v1109
      %v1191 = vadd.f32 %v898, %v1112
      %v1192 = vadd.f32 %v901, %v1115
      %v1193 = vadd.f32 %v904, %v1118
      %v1194 = vadd.f32 %v907, %v1121
      %v1195 = vadd.f32 %v910, %v1124
      %v1196 = vadd.f32 %v913, %v1127
      %v1197 = vadd.f32 %v916, %v1130
      %v1198 = vadd.f32 %v919, %v1133
      %v1199 = vadd.f32 %v922, %v1136
      %v1200 = vadd.f32 %v925, %v1139
      %v1201 = vadd.f32 %v928, %v1142
      %v1202 = vadd.f32 %v931, %v1145
      %v1203 = vadd.f32 %v934, %v1148
      %v1204 = vadd.f32 %v937, %v1151
      %v1205 = vadd.f32 %v940, %v1154
      %v1206 = vadd.f32 %v943, %v1157
      %v1207 = vadd.f32 %v946, %v1160
      %v1208 = vadd.f32 %v949, %v1163
      %v1209 = vadd.f32 %v952, %v1166
      %v1210 = vadd.f32 %v955, %v1169
      %v1211 = vadd.f32 %v958, %v1172
      %v1212 = vadd.f32 %v961, %v1175
      %v1213 = vadd.f32 %v964, %v1178
      %v1214 = vadd.f32 %v967, %v1181
      %s1215 = scalar_lea.vmem %s224, 12
      %v1216 = vld [vmem:[%s1215] sm:$0xf]
      %v1218 = vsel %vm543, %v376, 0
      %v1221 = vsel %vm543, %v377, 0
      %v1224 = vsel %vm543, %v378, 0
      %v1227 = vsel %vm543, %v379, 0
      %v1230 = vsel %vm543, %v380, 0
      %v1233 = vsel %vm543, %v381, 0
      %v1236 = vsel %vm543, %v382, 0
      %v1239 = vsel %vm543, %v383, 0
      %v1242 = vsel %vm543, %v384, 0
      %v1245 = vsel %vm543, %v385, 0
      %v1248 = vsel %vm543, %v386, 0
      %v1251 = vsel %vm543, %v387, 0
      %v1254 = vsel %vm543, %v388, 0
      %v1257 = vsel %vm543, %v389, 0
      %v1260 = vsel %vm543, %v390, 0
      %v1263 = vsel %vm543, %v391, 0
      %v1266 = vsel %vm543, %v392, 0
      %v1269 = vsel %vm543, %v393, 0
      %v1272 = vsel %vm543, %v394, 0
      %v1275 = vsel %vm543, %v395, 0
      %v1278 = vsel %vm543, %v396, 0
      %v1281 = vsel %vm543, %v397, 0
      %v1284 = vsel %vm543, %v398, 0
      %v1287 = vsel %vm543, %v399, 0
      %v1290 = vsel %vm543, %v400, 0
      %v1293 = vsel %vm543, %v401, 0
      %v1296 = vsel %vm543, %v402, 0
      %v1299 = vsel %vm543, %v403, 0
      %v1302 = vsel %vm543, %v404, 0
      %v1305 = vsel %vm543, %v405, 0
      %v1308 = vsel %vm543, %v406, 0
      %v1311 = vsel %vm543, %v407, 0
      %v1314 = vsel %vm640, %v1216, 0
      %1316 = vmatpush.msra.mxu0 0.0
      %1317 = vmatpush.msra.mxu0 0.0
      %1318 = vmatpush.msra.mxu0 0.0
      %1319 = vmatpush.msra.mxu0 0.0
      %1320 = vmatpush.msra.mxu0 0.0
      %1321 = vmatpush.msra.mxu0 0.0
      %1322 = vmatpush.msra.mxu0 0.0
      %1323 = vmatpush.msra.mxu0 0.0
      %1324 = vmatpush.msra.mxu0 0.0
      %1325 = vmatpush.msra.mxu0 0.0
      %1326 = vmatpush.msra.mxu0 0.0
      %1327 = vmatpush.msra.mxu0 0.0
      %1328 = vmatpush.msra.mxu0 0.0
      %1329 = vmatpush.msra.mxu0 0.0
      %1330 = vmatpush.msra.mxu0 0.0
      %1331 = vmatpush.msra.mxu0 %v1314
      %1332 = vmatmul.f32.gmra.mxu0 %v1218
      %v1333 = vpop.f32.mrf.mxu0
      %v1334 = vadd.f32 0.0, %v1333
      %1335 = vmatmul.f32.gmra.mxu0 %v1221
      %v1336 = vpop.f32.mrf.mxu0
      %v1337 = vadd.f32 0.0, %v1336
      %1338 = vmatmul.f32.gmra.mxu0 %v1224
      %v1339 = vpop.f32.mrf.mxu0
      %v1340 = vadd.f32 0.0, %v1339
      %1341 = vmatmul.f32.gmra.mxu0 %v1227
      %v1342 = vpop.f32.mrf.mxu0
      %v1343 = vadd.f32 0.0, %v1342
      %1344 = vmatmul.f32.gmra.mxu0 %v1230
      %v1345 = vpop.f32.mrf.mxu0
      %v1346 = vadd.f32 0.0, %v1345
      %1347 = vmatmul.f32.gmra.mxu0 %v1233
      %v1348 = vpop.f32.mrf.mxu0
      %v1349 = vadd.f32 0.0, %v1348
      %1350 = vmatmul.f32.gmra.mxu0 %v1236
      %v1351 = vpop.f32.mrf.mxu0
      %v1352 = vadd.f32 0.0, %v1351
      %1353 = vmatmul.f32.gmra.mxu0 %v1239
      %v1354 = vpop.f32.mrf.mxu0
      %v1355 = vadd.f32 0.0, %v1354
      %1356 = vmatmul.f32.gmra.mxu0 %v1242
      %v1357 = vpop.f32.mrf.mxu0
      %v1358 = vadd.f32 0.0, %v1357
      %1359 = vmatmul.f32.gmra.mxu0 %v1245
      %v1360 = vpop.f32.mrf.mxu0
      %v1361 = vadd.f32 0.0, %v1360
      %1362 = vmatmul.f32.gmra.mxu0 %v1248
      %v1363 = vpop.f32.mrf.mxu0
      %v1364 = vadd.f32 0.0, %v1363
      %1365 = vmatmul.f32.gmra.mxu0 %v1251
      %v1366 = vpop.f32.mrf.mxu0
      %v1367 = vadd.f32 0.0, %v1366
      %1368 = vmatmul.f32.gmra.mxu0 %v1254
      %v1369 = vpop.f32.mrf.mxu0
      %v1370 = vadd.f32 0.0, %v1369
      %1371 = vmatmul.f32.gmra.mxu0 %v1257
      %v1372 = vpop.f32.mrf.mxu0
      %v1373 = vadd.f32 0.0, %v1372
      %1374 = vmatmul.f32.gmra.mxu0 %v1260
      %v1375 = vpop.f32.mrf.mxu0
      %v1376 = vadd.f32 0.0, %v1375
      %1377 = vmatmul.f32.gmra.mxu0 %v1263
      %v1378 = vpop.f32.mrf.mxu0
      %v1379 = vadd.f32 0.0, %v1378
      %1380 = vmatmul.f32.gmra.mxu0 %v1266
      %v1381 = vpop.f32.mrf.mxu0
      %v1382 = vadd.f32 0.0, %v1381
      %1383 = vmatmul.f32.gmra.mxu0 %v1269
      %v1384 = vpop.f32.mrf.mxu0
      %v1385 = vadd.f32 0.0, %v1384
      %1386 = vmatmul.f32.gmra.mxu0 %v1272
      %v1387 = vpop.f32.mrf.mxu0
      %v1388 = vadd.f32 0.0, %v1387
      %1389 = vmatmul.f32.gmra.mxu0 %v1275
      %v1390 = vpop.f32.mrf.mxu0
      %v1391 = vadd.f32 0.0, %v1390
      %1392 = vmatmul.f32.gmra.mxu0 %v1278
      %v1393 = vpop.f32.mrf.mxu0
      %v1394 = vadd.f32 0.0, %v1393
      %1395 = vmatmul.f32.gmra.mxu0 %v1281
      %v1396 = vpop.f32.mrf.mxu0
      %v1397 = vadd.f32 0.0, %v1396
      %1398 = vmatmul.f32.gmra.mxu0 %v1284
      %v1399 = vpop.f32.mrf.mxu0
      %v1400 = vadd.f32 0.0, %v1399
      %1401 = vmatmul.f32.gmra.mxu0 %v1287
      %v1402 = vpop.f32.mrf.mxu0
      %v1403 = vadd.f32 0.0, %v1402
      %1404 = vmatmul.f32.gmra.mxu0 %v1290
      %v1405 = vpop.f32.mrf.mxu0
      %v1406 = vadd.f32 0.0, %v1405
      %1407 = vmatmul.f32.gmra.mxu0 %v1293
      %v1408 = vpop.f32.mrf.mxu0
      %v1409 = vadd.f32 0.0, %v1408
      %1410 = vmatmul.f32.gmra.mxu0 %v1296
      %v1411 = vpop.f32.mrf.mxu0
      %v1412 = vadd.f32 0.0, %v1411
      %1413 = vmatmul.f32.gmra.mxu0 %v1299
      %v1414 = vpop.f32.mrf.mxu0
      %v1415 = vadd.f32 0.0, %v1414
      %1416 = vmatmul.f32.gmra.mxu0 %v1302
      %v1417 = vpop.f32.mrf.mxu0
      %v1418 = vadd.f32 0.0, %v1417
      %1419 = vmatmul.f32.gmra.mxu0 %v1305
      %v1420 = vpop.f32.mrf.mxu0
      %v1421 = vadd.f32 0.0, %v1420
      %1422 = vmatmul.f32.gmra.mxu0 %v1308
      %v1423 = vpop.f32.mrf.mxu0
      %v1424 = vadd.f32 0.0, %v1423
      %1425 = vmatmul.f32.gmra.mxu0 %v1311
      %v1426 = vpop.f32.mrf.mxu0
      %v1427 = vadd.f32 0.0, %v1426
      %1428 = vdwg.mxu0
      %v1429 = vadd.f32 %v1183, %v1334
      %v1430 = vadd.f32 %v1184, %v1337
      %v1431 = vadd.f32 %v1185, %v1340
      %v1432 = vadd.f32 %v1186, %v1343
      %v1433 = vadd.f32 %v1187, %v1346
      %v1434 = vadd.f32 %v1188, %v1349
      %v1435 = vadd.f32 %v1189, %v1352
      %v1436 = vadd.f32 %v1190, %v1355
      %v1437 = vadd.f32 %v1191, %v1358
      %v1438 = vadd.f32 %v1192, %v1361
      %v1439 = vadd.f32 %v1193, %v1364
      %v1440 = vadd.f32 %v1194, %v1367
      %v1441 = vadd.f32 %v1195, %v1370
      %v1442 = vadd.f32 %v1196, %v1373
      %v1443 = vadd.f32 %v1197, %v1376
      %v1444 = vadd.f32 %v1198, %v1379
      %v1445 = vadd.f32 %v1199, %v1382
      %v1446 = vadd.f32 %v1200, %v1385
      %v1447 = vadd.f32 %v1201, %v1388
      %v1448 = vadd.f32 %v1202, %v1391
      %v1449 = vadd.f32 %v1203, %v1394
      %v1450 = vadd.f32 %v1204, %v1397
      %v1451 = vadd.f32 %v1205, %v1400
      %v1452 = vadd.f32 %v1206, %v1403
      %v1453 = vadd.f32 %v1207, %v1406
      %v1454 = vadd.f32 %v1208, %v1409
      %v1455 = vadd.f32 %v1209, %v1412
      %v1456 = vadd.f32 %v1210, %v1415
      %v1457 = vadd.f32 %v1211, %v1418
      %v1458 = vadd.f32 %v1212, %v1421
      %v1459 = vadd.f32 %v1213, %v1424
      %v1460 = vadd.f32 %v1214, %v1427
      %v1462 = vperm.slane %v539, 0
      %v1464 = vadd.f32 %v1429, %v1462
      %v1465 = vadd.f32 %v1430, %v1462
      %v1466 = vadd.f32 %v1431, %v1462
      %v1467 = vadd.f32 %v1432, %v1462
      %v1468 = vadd.f32 %v1433, %v1462
      %v1469 = vadd.f32 %v1434, %v1462
      %v1470 = vadd.f32 %v1435, %v1462
      %v1471 = vadd.f32 %v1436, %v1462
      %v1472 = vadd.f32 %v1437, %v1462
      %v1473 = vadd.f32 %v1438, %v1462
      %v1474 = vadd.f32 %v1439, %v1462
      %v1475 = vadd.f32 %v1440, %v1462
      %v1476 = vadd.f32 %v1441, %v1462
      %v1477 = vadd.f32 %v1442, %v1462
      %v1478 = vadd.f32 %v1443, %v1462
      %v1479 = vadd.f32 %v1444, %v1462
      %v1480 = vadd.f32 %v1445, %v1462
      %v1481 = vadd.f32 %v1446, %v1462
      %v1482 = vadd.f32 %v1447, %v1462
      %v1483 = vadd.f32 %v1448, %v1462
      %v1484 = vadd.f32 %v1449, %v1462
      %v1485 = vadd.f32 %v1450, %v1462
      %v1486 = vadd.f32 %v1451, %v1462
      %v1487 = vadd.f32 %v1452, %v1462
      %v1488 = vadd.f32 %v1453, %v1462
      %v1489 = vadd.f32 %v1454, %v1462
      %v1490 = vadd.f32 %v1455, %v1462
      %v1491 = vadd.f32 %v1456, %v1462
      %v1492 = vadd.f32 %v1457, %v1462
      %v1493 = vadd.f32 %v1458, %v1462
      %v1494 = vadd.f32 %v1459, %v1462
      %v1495 = vadd.f32 %v1460, %v1462
      %1496 = vst.msk [vmem:[%s240] sm:$0xff] %vm543, %v1464
      %1497 = vst.msk [vmem:[%s240 + $0x8] sm:$0xff] %vm543, %v1465
      %1498 = vst.msk [vmem:[%s240 + $0x10] sm:$0xff] %vm543, %v1466
      %1499 = vst.msk [vmem:[%s240 + $0x18] sm:$0xff] %vm543, %v1467
      %1500 = vst.msk [vmem:[%s240 + $0x20] sm:$0xff] %vm543, %v1468
      %1501 = vst.msk [vmem:[%s240 + $0x28] sm:$0xff] %vm543, %v1469
      %1502 = vst.msk [vmem:[%s240 + $0x30] sm:$0xff] %vm543, %v1470
      %1503 = vst.msk [vmem:[%s240 + $0x38] sm:$0xff] %vm543, %v1471
      %1504 = vst.msk [vmem:[%s240 + $0x40] sm:$0xff] %vm543, %v1472
      %1505 = vst.msk [vmem:[%s240 + $0x48] sm:$0xff] %vm543, %v1473
      %1506 = vst.msk [vmem:[%s240 + $0x50] sm:$0xff] %vm543, %v1474
      %1507 = vst.msk [vmem:[%s240 + $0x58] sm:$0xff] %vm543, %v1475
      %1508 = vst.msk [vmem:[%s240 + $0x60] sm:$0xff] %vm543, %v1476
      %1509 = vst.msk [vmem:[%s240 + $0x68] sm:$0xff] %vm543, %v1477
      %1510 = vst.msk [vmem:[%s240 + $0x70] sm:$0xff] %vm543, %v1478
      %1511 = vst.msk [vmem:[%s240 + $0x78] sm:$0xff] %vm543, %v1479
      %1512 = vst.msk [vmem:[%s240 + $0x80] sm:$0xff] %vm543, %v1480
      %1513 = vst.msk [vmem:[%s240 + $0x88] sm:$0xff] %vm543, %v1481
      %1514 = vst.msk [vmem:[%s240 + $0x90] sm:$0xff] %vm543, %v1482
      %1515 = vst.msk [vmem:[%s240 + $0x98] sm:$0xff] %vm543, %v1483
      %1516 = vst.msk [vmem:[%s240 + $0xa0] sm:$0xff] %vm543, %v1484
      %1517 = vst.msk [vmem:[%s240 + $0xa8] sm:$0xff] %vm543, %v1485
      %1518 = vst.msk [vmem:[%s240 + $0xb0] sm:$0xff] %vm543, %v1486
      %1519 = vst.msk [vmem:[%s240 + $0xb8] sm:$0xff] %vm543, %v1487
      %1520 = vst.msk [vmem:[%s240 + $0xc0] sm:$0xff] %vm543, %v1488
      %1521 = vst.msk [vmem:[%s240 + $0xc8] sm:$0xff] %vm543, %v1489
      %1522 = vst.msk [vmem:[%s240 + $0xd0] sm:$0xff] %vm543, %v1490
      %1523 = vst.msk [vmem:[%s240 + $0xd8] sm:$0xff] %vm543, %v1491
      %1524 = vst.msk [vmem:[%s240 + $0xe0] sm:$0xff] %vm543, %v1492
      %1525 = vst.msk [vmem:[%s240 + $0xe8] sm:$0xff] %vm543, %v1493
      %1526 = vst.msk [vmem:[%s240 + $0xf0] sm:$0xff] %vm543, %v1494
      %1527 = vst.msk [vmem:[%s240 + $0xf8] sm:$0xff] %vm543, %v1495
      %s1528 = scalar_lea.vmem %s224, 16
      %v1529 = vld [vmem:[%s1528] sm:$0xf]
      %s1530 = scalar_lea.vmem %s224, 20
      %v1531 = vld [vmem:[%s1530] sm:$0xf]
      %v1533 = vsel %vm543, %v309, 0
      %v1536 = vsel %vm543, %v310, 0
      %v1539 = vsel %vm543, %v311, 0
      %v1542 = vsel %vm543, %v312, 0
      %v1545 = vsel %vm543, %v313, 0
      %v1548 = vsel %vm543, %v314, 0
      %v1551 = vsel %vm543, %v315, 0
      %v1554 = vsel %vm543, %v316, 0
      %v1557 = vsel %vm543, %v317, 0
      %v1560 = vsel %vm543, %v318, 0
      %v1563 = vsel %vm543, %v319, 0
      %v1566 = vsel %vm543, %v320, 0
      %v1569 = vsel %vm543, %v321, 0
      %v1572 = vsel %vm543, %v322, 0
      %v1575 = vsel %vm543, %v323, 0
      %v1578 = vsel %vm543, %v324, 0
      %v1581 = vsel %vm543, %v325, 0
      %v1584 = vsel %vm543, %v326, 0
      %v1587 = vsel %vm543, %v327, 0
      %v1590 = vsel %vm543, %v328, 0
      %v1593 = vsel %vm543, %v329, 0
      %v1596 = vsel %vm543, %v330, 0
      %v1599 = vsel %vm543, %v331, 0
      %v1602 = vsel %vm543, %v332, 0
      %v1605 = vsel %vm543, %v333, 0
      %v1608 = vsel %vm543, %v334, 0
      %v1611 = vsel %vm543, %v335, 0
      %v1614 = vsel %vm543, %v336, 0
      %v1617 = vsel %vm543, %v337, 0
      %v1620 = vsel %vm543, %v338, 0
      %v1623 = vsel %vm543, %v339, 0
      %v1626 = vsel %vm543, %v340, 0
      %v1629 = vsel %vm640, %v1531, 0
      %1631 = vmatpush.msra.mxu0 0.0
      %1632 = vmatpush.msra.mxu0 0.0
      %1633 = vmatpush.msra.mxu0 0.0
      %1634 = vmatpush.msra.mxu0 0.0
      %1635 = vmatpush.msra.mxu0 0.0
      %1636 = vmatpush.msra.mxu0 0.0
      %1637 = vmatpush.msra.mxu0 0.0
      %1638 = vmatpush.msra.mxu0 0.0
      %1639 = vmatpush.msra.mxu0 0.0
      %1640 = vmatpush.msra.mxu0 0.0
      %1641 = vmatpush.msra.mxu0 0.0
      %1642 = vmatpush.msra.mxu0 0.0
      %1643 = vmatpush.msra.mxu0 0.0
      %1644 = vmatpush.msra.mxu0 0.0
      %1645 = vmatpush.msra.mxu0 0.0
      %1646 = vmatpush.msra.mxu0 %v1629
      %1647 = vmatmul.f32.gmra.mxu0 %v1533
      %v1648 = vpop.f32.mrf.mxu0
      %v1649 = vadd.f32 0.0, %v1648
      %1650 = vmatmul.f32.gmra.mxu0 %v1536
      %v1651 = vpop.f32.mrf.mxu0
      %v1652 = vadd.f32 0.0, %v1651
      %1653 = vmatmul.f32.gmra.mxu0 %v1539
      %v1654 = vpop.f32.mrf.mxu0
      %v1655 = vadd.f32 0.0, %v1654
      %1656 = vmatmul.f32.gmra.mxu0 %v1542
      %v1657 = vpop.f32.mrf.mxu0
      %v1658 = vadd.f32 0.0, %v1657
      %1659 = vmatmul.f32.gmra.mxu0 %v1545
      %v1660 = vpop.f32.mrf.mxu0
      %v1661 = vadd.f32 0.0, %v1660
      %1662 = vmatmul.f32.gmra.mxu0 %v1548
      %v1663 = vpop.f32.mrf.mxu0
      %v1664 = vadd.f32 0.0, %v1663
      %1665 = vmatmul.f32.gmra.mxu0 %v1551
      %v1666 = vpop.f32.mrf.mxu0
      %v1667 = vadd.f32 0.0, %v1666
      %1668 = vmatmul.f32.gmra.mxu0 %v1554
      %v1669 = vpop.f32.mrf.mxu0
      %v1670 = vadd.f32 0.0, %v1669
      %1671 = vmatmul.f32.gmra.mxu0 %v1557
      %v1672 = vpop.f32.mrf.mxu0
      %v1673 = vadd.f32 0.0, %v1672
      %1674 = vmatmul.f32.gmra.mxu0 %v1560
      %v1675 = vpop.f32.mrf.mxu0
      %v1676 = vadd.f32 0.0, %v1675
      %1677 = vmatmul.f32.gmra.mxu0 %v1563
      %v1678 = vpop.f32.mrf.mxu0
      %v1679 = vadd.f32 0.0, %v1678
      %1680 = vmatmul.f32.gmra.mxu0 %v1566
      %v1681 = vpop.f32.mrf.mxu0
      %v1682 = vadd.f32 0.0, %v1681
      %1683 = vmatmul.f32.gmra.mxu0 %v1569
      %v1684 = vpop.f32.mrf.mxu0
      %v1685 = vadd.f32 0.0, %v1684
      %1686 = vmatmul.f32.gmra.mxu0 %v1572
      %v1687 = vpop.f32.mrf.mxu0
      %v1688 = vadd.f32 0.0, %v1687
      %1689 = vmatmul.f32.gmra.mxu0 %v1575
      %v1690 = vpop.f32.mrf.mxu0
      %v1691 = vadd.f32 0.0, %v1690
      %1692 = vmatmul.f32.gmra.mxu0 %v1578
      %v1693 = vpop.f32.mrf.mxu0
      %v1694 = vadd.f32 0.0, %v1693
      %1695 = vmatmul.f32.gmra.mxu0 %v1581
      %v1696 = vpop.f32.mrf.mxu0
      %v1697 = vadd.f32 0.0, %v1696
      %1698 = vmatmul.f32.gmra.mxu0 %v1584
      %v1699 = vpop.f32.mrf.mxu0
      %v1700 = vadd.f32 0.0, %v1699
      %1701 = vmatmul.f32.gmra.mxu0 %v1587
      %v1702 = vpop.f32.mrf.mxu0
      %v1703 = vadd.f32 0.0, %v1702
      %1704 = vmatmul.f32.gmra.mxu0 %v1590
      %v1705 = vpop.f32.mrf.mxu0
      %v1706 = vadd.f32 0.0, %v1705
      %1707 = vmatmul.f32.gmra.mxu0 %v1593
      %v1708 = vpop.f32.mrf.mxu0
      %v1709 = vadd.f32 0.0, %v1708
      %1710 = vmatmul.f32.gmra.mxu0 %v1596
      %v1711 = vpop.f32.mrf.mxu0
      %v1712 = vadd.f32 0.0, %v1711
      %1713 = vmatmul.f32.gmra.mxu0 %v1599
      %v1714 = vpop.f32.mrf.mxu0
      %v1715 = vadd.f32 0.0, %v1714
      %1716 = vmatmul.f32.gmra.mxu0 %v1602
      %v1717 = vpop.f32.mrf.mxu0
      %v1718 = vadd.f32 0.0, %v1717
      %1719 = vmatmul.f32.gmra.mxu0 %v1605
      %v1720 = vpop.f32.mrf.mxu0
      %v1721 = vadd.f32 0.0, %v1720
      %1722 = vmatmul.f32.gmra.mxu0 %v1608
      %v1723 = vpop.f32.mrf.mxu0
      %v1724 = vadd.f32 0.0, %v1723
      %1725 = vmatmul.f32.gmra.mxu0 %v1611
      %v1726 = vpop.f32.mrf.mxu0
      %v1727 = vadd.f32 0.0, %v1726
      %1728 = vmatmul.f32.gmra.mxu0 %v1614
      %v1729 = vpop.f32.mrf.mxu0
      %v1730 = vadd.f32 0.0, %v1729
      %1731 = vmatmul.f32.gmra.mxu0 %v1617
      %v1732 = vpop.f32.mrf.mxu0
      %v1733 = vadd.f32 0.0, %v1732
      %1734 = vmatmul.f32.gmra.mxu0 %v1620
      %v1735 = vpop.f32.mrf.mxu0
      %v1736 = vadd.f32 0.0, %v1735
      %1737 = vmatmul.f32.gmra.mxu0 %v1623
      %v1738 = vpop.f32.mrf.mxu0
      %v1739 = vadd.f32 0.0, %v1738
      %1740 = vmatmul.f32.gmra.mxu0 %v1626
      %v1741 = vpop.f32.mrf.mxu0
      %v1742 = vadd.f32 0.0, %v1741
      %1743 = vdwg.mxu0
      %v1745 = vsel %vm640, %v1529, 0
      %1747 = vmatpush.msra.mxu0 0.0
      %1748 = vmatpush.msra.mxu0 0.0
      %1749 = vmatpush.msra.mxu0 0.0
      %1750 = vmatpush.msra.mxu0 0.0
      %1751 = vmatpush.msra.mxu0 0.0
      %1752 = vmatpush.msra.mxu0 0.0
      %1753 = vmatpush.msra.mxu0 0.0
      %1754 = vmatpush.msra.mxu0 0.0
      %1755 = vmatpush.msra.mxu0 0.0
      %1756 = vmatpush.msra.mxu0 0.0
      %1757 = vmatpush.msra.mxu0 0.0
      %1758 = vmatpush.msra.mxu0 0.0
      %1759 = vmatpush.msra.mxu0 0.0
      %1760 = vmatpush.msra.mxu0 0.0
      %1761 = vmatpush.msra.mxu0 0.0
      %1762 = vmatpush.msra.mxu0 %v1745
      %1763 = vmatmul.f32.gmra.mxu0 %v545
      %v1764 = vpop.f32.mrf.mxu0
      %v1765 = vadd.f32 %v1649, %v1764
      %1766 = vmatmul.f32.gmra.mxu0 %v548
      %v1767 = vpop.f32.mrf.mxu0
      %v1768 = vadd.f32 %v1652, %v1767
      %1769 = vmatmul.f32.gmra.mxu0 %v551
      %v1770 = vpop.f32.mrf.mxu0
      %v1771 = vadd.f32 %v1655, %v1770
      %1772 = vmatmul.f32.gmra.mxu0 %v554
      %v1773 = vpop.f32.mrf.mxu0
      %v1774 = vadd.f32 %v1658, %v1773
      %1775 = vmatmul.f32.gmra.mxu0 %v557
      %v1776 = vpop.f32.mrf.mxu0
      %v1777 = vadd.f32 %v1661, %v1776
      %1778 = vmatmul.f32.gmra.mxu0 %v560
      %v1779 = vpop.f32.mrf.mxu0
      %v1780 = vadd.f32 %v1664, %v1779
      %1781 = vmatmul.f32.gmra.mxu0 %v563
      %v1782 = vpop.f32.mrf.mxu0
      %v1783 = vadd.f32 %v1667, %v1782
      %1784 = vmatmul.f32.gmra.mxu0 %v566
      %v1785 = vpop.f32.mrf.mxu0
      %v1786 = vadd.f32 %v1670, %v1785
      %1787 = vmatmul.f32.gmra.mxu0 %v569
      %v1788 = vpop.f32.mrf.mxu0
      %v1789 = vadd.f32 %v1673, %v1788
      %1790 = vmatmul.f32.gmra.mxu0 %v572
      %v1791 = vpop.f32.mrf.mxu0
      %v1792 = vadd.f32 %v1676, %v1791
      %1793 = vmatmul.f32.gmra.mxu0 %v575
      %v1794 = vpop.f32.mrf.mxu0
      %v1795 = vadd.f32 %v1679, %v1794
      %1796 = vmatmul.f32.gmra.mxu0 %v578
      %v1797 = vpop.f32.mrf.mxu0
      %v1798 = vadd.f32 %v1682, %v1797
      %1799 = vmatmul.f32.gmra.mxu0 %v581
      %v1800 = vpop.f32.mrf.mxu0
      %v1801 = vadd.f32 %v1685, %v1800
      %1802 = vmatmul.f32.gmra.mxu0 %v584
      %v1803 = vpop.f32.mrf.mxu0
      %v1804 = vadd.f32 %v1688, %v1803
      %1805 = vmatmul.f32.gmra.mxu0 %v587
      %v1806 = vpop.f32.mrf.mxu0
      %v1807 = vadd.f32 %v1691, %v1806
      %1808 = vmatmul.f32.gmra.mxu0 %v590
      %v1809 = vpop.f32.mrf.mxu0
      %v1810 = vadd.f32 %v1694, %v1809
      %1811 = vmatmul.f32.gmra.mxu0 %v593
      %v1812 = vpop.f32.mrf.mxu0
      %v1813 = vadd.f32 %v1697, %v1812
      %1814 = vmatmul.f32.gmra.mxu0 %v596
      %v1815 = vpop.f32.mrf.mxu0
      %v1816 = vadd.f32 %v1700, %v1815
      %1817 = vmatmul.f32.gmra.mxu0 %v599
      %v1818 = vpop.f32.mrf.mxu0
      %v1819 = vadd.f32 %v1703, %v1818
      %1820 = vmatmul.f32.gmra.mxu0 %v602
      %v1821 = vpop.f32.mrf.mxu0
      %v1822 = vadd.f32 %v1706, %v1821
      %1823 = vmatmul.f32.gmra.mxu0 %v605
      %v1824 = vpop.f32.mrf.mxu0
      %v1825 = vadd.f32 %v1709, %v1824
      %1826 = vmatmul.f32.gmra.mxu0 %v608
      %v1827 = vpop.f32.mrf.mxu0
      %v1828 = vadd.f32 %v1712, %v1827
      %1829 = vmatmul.f32.gmra.mxu0 %v611
      %v1830 = vpop.f32.mrf.mxu0
      %v1831 = vadd.f32 %v1715, %v1830
      %1832 = vmatmul.f32.gmra.mxu0 %v614
      %v1833 = vpop.f32.mrf.mxu0
      %v1834 = vadd.f32 %v1718, %v1833
      %1835 = vmatmul.f32.gmra.mxu0 %v617
      %v1836 = vpop.f32.mrf.mxu0
      %v1837 = vadd.f32 %v1721, %v1836
      %1838 = vmatmul.f32.gmra.mxu0 %v620
      %v1839 = vpop.f32.mrf.mxu0
      %v1840 = vadd.f32 %v1724, %v1839
      %1841 = vmatmul.f32.gmra.mxu0 %v623
      %v1842 = vpop.f32.mrf.mxu0
      %v1843 = vadd.f32 %v1727, %v1842
      %1844 = vmatmul.f32.gmra.mxu0 %v626
      %v1845 = vpop.f32.mrf.mxu0
      %v1846 = vadd.f32 %v1730, %v1845
      %1847 = vmatmul.f32.gmra.mxu0 %v629
      %v1848 = vpop.f32.mrf.mxu0
      %v1849 = vadd.f32 %v1733, %v1848
      %1850 = vmatmul.f32.gmra.mxu0 %v632
      %v1851 = vpop.f32.mrf.mxu0
      %v1852 = vadd.f32 %v1736, %v1851
      %1853 = vmatmul.f32.gmra.mxu0 %v635
      %v1854 = vpop.f32.mrf.mxu0
      %v1855 = vadd.f32 %v1739, %v1854
      %1856 = vmatmul.f32.gmra.mxu0 %v638
      %v1857 = vpop.f32.mrf.mxu0
      %v1858 = vadd.f32 %v1742, %v1857
      %1859 = vdwg.mxu0
      %s1860 = scalar_lea.vmem %s224, 24
      %v1861 = vld [vmem:[%s1860] sm:$0xf]
      %v1863 = vsel %vm640, %v1861, 0
      %1865 = vmatpush.msra.mxu0 0.0
      %1866 = vmatpush.msra.mxu0 0.0
      %1867 = vmatpush.msra.mxu0 0.0
      %1868 = vmatpush.msra.mxu0 0.0
      %1869 = vmatpush.msra.mxu0 0.0
      %1870 = vmatpush.msra.mxu0 0.0
      %1871 = vmatpush.msra.mxu0 0.0
      %1872 = vmatpush.msra.mxu0 0.0
      %1873 = vmatpush.msra.mxu0 0.0
      %1874 = vmatpush.msra.mxu0 0.0
      %1875 = vmatpush.msra.mxu0 0.0
      %1876 = vmatpush.msra.mxu0 0.0
      %1877 = vmatpush.msra.mxu0 0.0
      %1878 = vmatpush.msra.mxu0 0.0
      %1879 = vmatpush.msra.mxu0 0.0
      %1880 = vmatpush.msra.mxu0 %v1863
      %1881 = vmatmul.f32.gmra.mxu0 %v1218
      %v1882 = vpop.f32.mrf.mxu0
      %v1883 = vadd.f32 0.0, %v1882
      %1884 = vmatmul.f32.gmra.mxu0 %v1221
      %v1885 = vpop.f32.mrf.mxu0
      %v1886 = vadd.f32 0.0, %v1885
      %1887 = vmatmul.f32.gmra.mxu0 %v1224
      %v1888 = vpop.f32.mrf.mxu0
      %v1889 = vadd.f32 0.0, %v1888
      %1890 = vmatmul.f32.gmra.mxu0 %v1227
      %v1891 = vpop.f32.mrf.mxu0
      %v1892 = vadd.f32 0.0, %v1891
      %1893 = vmatmul.f32.gmra.mxu0 %v1230
      %v1894 = vpop.f32.mrf.mxu0
      %v1895 = vadd.f32 0.0, %v1894
      %1896 = vmatmul.f32.gmra.mxu0 %v1233
      %v1897 = vpop.f32.mrf.mxu0
      %v1898 = vadd.f32 0.0, %v1897
      %1899 = vmatmul.f32.gmra.mxu0 %v1236
      %v1900 = vpop.f32.mrf.mxu0
      %v1901 = vadd.f32 0.0, %v1900
      %1902 = vmatmul.f32.gmra.mxu0 %v1239
      %v1903 = vpop.f32.mrf.mxu0
      %v1904 = vadd.f32 0.0, %v1903
      %1905 = vmatmul.f32.gmra.mxu0 %v1242
      %v1906 = vpop.f32.mrf.mxu0
      %v1907 = vadd.f32 0.0, %v1906
      %1908 = vmatmul.f32.gmra.mxu0 %v1245
      %v1909 = vpop.f32.mrf.mxu0
      %v1910 = vadd.f32 0.0, %v1909
      %1911 = vmatmul.f32.gmra.mxu0 %v1248
      %v1912 = vpop.f32.mrf.mxu0
      %v1913 = vadd.f32 0.0, %v1912
      %1914 = vmatmul.f32.gmra.mxu0 %v1251
      %v1915 = vpop.f32.mrf.mxu0
      %v1916 = vadd.f32 0.0, %v1915
      %1917 = vmatmul.f32.gmra.mxu0 %v1254
      %v1918 = vpop.f32.mrf.mxu0
      %v1919 = vadd.f32 0.0, %v1918
      %1920 = vmatmul.f32.gmra.mxu0 %v1257
      %v1921 = vpop.f32.mrf.mxu0
      %v1922 = vadd.f32 0.0, %v1921
      %1923 = vmatmul.f32.gmra.mxu0 %v1260
      %v1924 = vpop.f32.mrf.mxu0
      %v1925 = vadd.f32 0.0, %v1924
      %1926 = vmatmul.f32.gmra.mxu0 %v1263
      %v1927 = vpop.f32.mrf.mxu0
      %v1928 = vadd.f32 0.0, %v1927
      %1929 = vmatmul.f32.gmra.mxu0 %v1266
      %v1930 = vpop.f32.mrf.mxu0
      %v1931 = vadd.f32 0.0, %v1930
      %1932 = vmatmul.f32.gmra.mxu0 %v1269
      %v1933 = vpop.f32.mrf.mxu0
      %v1934 = vadd.f32 0.0, %v1933
      %1935 = vmatmul.f32.gmra.mxu0 %v1272
      %v1936 = vpop.f32.mrf.mxu0
      %v1937 = vadd.f32 0.0, %v1936
      %1938 = vmatmul.f32.gmra.mxu0 %v1275
      %v1939 = vpop.f32.mrf.mxu0
      %v1940 = vadd.f32 0.0, %v1939
      %1941 = vmatmul.f32.gmra.mxu0 %v1278
      %v1942 = vpop.f32.mrf.mxu0
      %v1943 = vadd.f32 0.0, %v1942
      %1944 = vmatmul.f32.gmra.mxu0 %v1281
      %v1945 = vpop.f32.mrf.mxu0
      %v1946 = vadd.f32 0.0, %v1945
      %1947 = vmatmul.f32.gmra.mxu0 %v1284
      %v1948 = vpop.f32.mrf.mxu0
      %v1949 = vadd.f32 0.0, %v1948
      %1950 = vmatmul.f32.gmra.mxu0 %v1287
      %v1951 = vpop.f32.mrf.mxu0
      %v1952 = vadd.f32 0.0, %v1951
      %1953 = vmatmul.f32.gmra.mxu0 %v1290
      %v1954 = vpop.f32.mrf.mxu0
      %v1955 = vadd.f32 0.0, %v1954
      %1956 = vmatmul.f32.gmra.mxu0 %v1293
      %v1957 = vpop.f32.mrf.mxu0
      %v1958 = vadd.f32 0.0, %v1957
      %1959 = vmatmul.f32.gmra.mxu0 %v1296
      %v1960 = vpop.f32.mrf.mxu0
      %v1961 = vadd.f32 0.0, %v1960
      %1962 = vmatmul.f32.gmra.mxu0 %v1299
      %v1963 = vpop.f32.mrf.mxu0
      %v1964 = vadd.f32 0.0, %v1963
      %1965 = vmatmul.f32.gmra.mxu0 %v1302
      %v1966 = vpop.f32.mrf.mxu0
      %v1967 = vadd.f32 0.0, %v1966
      %1968 = vmatmul.f32.gmra.mxu0 %v1305
      %v1969 = vpop.f32.mrf.mxu0
      %v1970 = vadd.f32 0.0, %v1969
      %1971 = vmatmul.f32.gmra.mxu0 %v1308
      %v1972 = vpop.f32.mrf.mxu0
      %v1973 = vadd.f32 0.0, %v1972
      %1974 = vmatmul.f32.gmra.mxu0 %v1311
      %v1975 = vpop.f32.mrf.mxu0
      %v1976 = vadd.f32 0.0, %v1975
      %1977 = vdwg.mxu0
      %v1978 = vadd.f32 %v1765, %v1883
      %v1979 = vadd.f32 %v1768, %v1886
      %v1980 = vadd.f32 %v1771, %v1889
      %v1981 = vadd.f32 %v1774, %v1892
      %v1982 = vadd.f32 %v1777, %v1895
      %v1983 = vadd.f32 %v1780, %v1898
      %v1984 = vadd.f32 %v1783, %v1901
      %v1985 = vadd.f32 %v1786, %v1904
      %v1986 = vadd.f32 %v1789, %v1907
      %v1987 = vadd.f32 %v1792, %v1910
      %v1988 = vadd.f32 %v1795, %v1913
      %v1989 = vadd.f32 %v1798, %v1916
      %v1990 = vadd.f32 %v1801, %v1919
      %v1991 = vadd.f32 %v1804, %v1922
      %v1992 = vadd.f32 %v1807, %v1925
      %v1993 = vadd.f32 %v1810, %v1928
      %v1994 = vadd.f32 %v1813, %v1931
      %v1995 = vadd.f32 %v1816, %v1934
      %v1996 = vadd.f32 %v1819, %v1937
      %v1997 = vadd.f32 %v1822, %v1940
      %v1998 = vadd.f32 %v1825, %v1943
      %v1999 = vadd.f32 %v1828, %v1946
      %v2000 = vadd.f32 %v1831, %v1949
      %v2001 = vadd.f32 %v1834, %v1952
      %v2002 = vadd.f32 %v1837, %v1955
      %v2003 = vadd.f32 %v1840, %v1958
      %v2004 = vadd.f32 %v1843, %v1961
      %v2005 = vadd.f32 %v1846, %v1964
      %v2006 = vadd.f32 %v1849, %v1967
      %v2007 = vadd.f32 %v1852, %v1970
      %v2008 = vadd.f32 %v1855, %v1973
      %v2009 = vadd.f32 %v1858, %v1976
      %s2010 = scalar_lea.vmem %s224, 28
      %v2011 = vld [vmem:[%s2010] sm:$0xf]
      %v2013 = vsel %vm543, %v408, 0
      %v2016 = vsel %vm543, %v409, 0
      %v2019 = vsel %vm543, %v410, 0
      %v2022 = vsel %vm543, %v411, 0
      %v2025 = vsel %vm543, %v412, 0
      %v2028 = vsel %vm543, %v413, 0
      %v2031 = vsel %vm543, %v414, 0
      %v2034 = vsel %vm543, %v415, 0
      %v2037 = vsel %vm543, %v416, 0
      %v2040 = vsel %vm543, %v417, 0
      %v2043 = vsel %vm543, %v418, 0
      %v2046 = vsel %vm543, %v419, 0
      %v2049 = vsel %vm543, %v420, 0
      %v2052 = vsel %vm543, %v421, 0
      %v2055 = vsel %vm543, %v422, 0
      %v2058 = vsel %vm543, %v423, 0
      %v2061 = vsel %vm543, %v424, 0
      %v2064 = vsel %vm543, %v425, 0
      %v2067 = vsel %vm543, %v426, 0
      %v2070 = vsel %vm543, %v427, 0
      %v2073 = vsel %vm543, %v428, 0
      %v2076 = vsel %vm543, %v429, 0
      %v2079 = vsel %vm543, %v430, 0
      %v2082 = vsel %vm543, %v431, 0
      %v2085 = vsel %vm543, %v432, 0
      %v2088 = vsel %vm543, %v433, 0
      %v2091 = vsel %vm543, %v434, 0
      %v2094 = vsel %vm543, %v435, 0
      %v2097 = vsel %vm543, %v436, 0
      %v2100 = vsel %vm543, %v437, 0
      %v2103 = vsel %vm543, %v438, 0
      %v2106 = vsel %vm543, %v439, 0
      %v2109 = vsel %vm640, %v2011, 0
      %2111 = vmatpush.msra.mxu0 0.0
      %2112 = vmatpush.msra.mxu0 0.0
      %2113 = vmatpush.msra.mxu0 0.0
      %2114 = vmatpush.msra.mxu0 0.0
      %2115 = vmatpush.msra.mxu0 0.0
      %2116 = vmatpush.msra.mxu0 0.0
      %2117 = vmatpush.msra.mxu0 0.0
      %2118 = vmatpush.msra.mxu0 0.0
      %2119 = vmatpush.msra.mxu0 0.0
      %2120 = vmatpush.msra.mxu0 0.0
      %2121 = vmatpush.msra.mxu0 0.0
      %2122 = vmatpush.msra.mxu0 0.0
      %2123 = vmatpush.msra.mxu0 0.0
      %2124 = vmatpush.msra.mxu0 0.0
      %2125 = vmatpush.msra.mxu0 0.0
      %2126 = vmatpush.msra.mxu0 %v2109
      %2127 = vmatmul.f32.gmra.mxu0 %v2013
      %v2128 = vpop.f32.mrf.mxu0
      %v2129 = vadd.f32 0.0, %v2128
      %2130 = vmatmul.f32.gmra.mxu0 %v2016
      %v2131 = vpop.f32.mrf.mxu0
      %v2132 = vadd.f32 0.0, %v2131
      %2133 = vmatmul.f32.gmra.mxu0 %v2019
      %v2134 = vpop.f32.mrf.mxu0
      %v2135 = vadd.f32 0.0, %v2134
      %2136 = vmatmul.f32.gmra.mxu0 %v2022
      %v2137 = vpop.f32.mrf.mxu0
      %v2138 = vadd.f32 0.0, %v2137
      %2139 = vmatmul.f32.gmra.mxu0 %v2025
      %v2140 = vpop.f32.mrf.mxu0
      %v2141 = vadd.f32 0.0, %v2140
      %2142 = vmatmul.f32.gmra.mxu0 %v2028
      %v2143 = vpop.f32.mrf.mxu0
      %v2144 = vadd.f32 0.0, %v2143
      %2145 = vmatmul.f32.gmra.mxu0 %v2031
      %v2146 = vpop.f32.mrf.mxu0
      %v2147 = vadd.f32 0.0, %v2146
      %2148 = vmatmul.f32.gmra.mxu0 %v2034
      %v2149 = vpop.f32.mrf.mxu0
      %v2150 = vadd.f32 0.0, %v2149
      %2151 = vmatmul.f32.gmra.mxu0 %v2037
      %v2152 = vpop.f32.mrf.mxu0
      %v2153 = vadd.f32 0.0, %v2152
      %2154 = vmatmul.f32.gmra.mxu0 %v2040
      %v2155 = vpop.f32.mrf.mxu0
      %v2156 = vadd.f32 0.0, %v2155
      %2157 = vmatmul.f32.gmra.mxu0 %v2043
      %v2158 = vpop.f32.mrf.mxu0
      %v2159 = vadd.f32 0.0, %v2158
      %2160 = vmatmul.f32.gmra.mxu0 %v2046
      %v2161 = vpop.f32.mrf.mxu0
      %v2162 = vadd.f32 0.0, %v2161
      %2163 = vmatmul.f32.gmra.mxu0 %v2049
      %v2164 = vpop.f32.mrf.mxu0
      %v2165 = vadd.f32 0.0, %v2164
      %2166 = vmatmul.f32.gmra.mxu0 %v2052
      %v2167 = vpop.f32.mrf.mxu0
      %v2168 = vadd.f32 0.0, %v2167
      %2169 = vmatmul.f32.gmra.mxu0 %v2055
      %v2170 = vpop.f32.mrf.mxu0
      %v2171 = vadd.f32 0.0, %v2170
      %2172 = vmatmul.f32.gmra.mxu0 %v2058
      %v2173 = vpop.f32.mrf.mxu0
      %v2174 = vadd.f32 0.0, %v2173
      %2175 = vmatmul.f32.gmra.mxu0 %v2061
      %v2176 = vpop.f32.mrf.mxu0
      %v2177 = vadd.f32 0.0, %v2176
      %2178 = vmatmul.f32.gmra.mxu0 %v2064
      %v2179 = vpop.f32.mrf.mxu0
      %v2180 = vadd.f32 0.0, %v2179
      %2181 = vmatmul.f32.gmra.mxu0 %v2067
      %v2182 = vpop.f32.mrf.mxu0
      %v2183 = vadd.f32 0.0, %v2182
      %2184 = vmatmul.f32.gmra.mxu0 %v2070
      %v2185 = vpop.f32.mrf.mxu0
      %v2186 = vadd.f32 0.0, %v2185
      %2187 = vmatmul.f32.gmra.mxu0 %v2073
      %v2188 = vpop.f32.mrf.mxu0
      %v2189 = vadd.f32 0.0, %v2188
      %2190 = vmatmul.f32.gmra.mxu0 %v2076
      %v2191 = vpop.f32.mrf.mxu0
      %v2192 = vadd.f32 0.0, %v2191
      %2193 = vmatmul.f32.gmra.mxu0 %v2079
      %v2194 = vpop.f32.mrf.mxu0
      %v2195 = vadd.f32 0.0, %v2194
      %2196 = vmatmul.f32.gmra.mxu0 %v2082
      %v2197 = vpop.f32.mrf.mxu0
      %v2198 = vadd.f32 0.0, %v2197
      %2199 = vmatmul.f32.gmra.mxu0 %v2085
      %v2200 = vpop.f32.mrf.mxu0
      %v2201 = vadd.f32 0.0, %v2200
      %2202 = vmatmul.f32.gmra.mxu0 %v2088
      %v2203 = vpop.f32.mrf.mxu0
      %v2204 = vadd.f32 0.0, %v2203
      %2205 = vmatmul.f32.gmra.mxu0 %v2091
      %v2206 = vpop.f32.mrf.mxu0
      %v2207 = vadd.f32 0.0, %v2206
      %2208 = vmatmul.f32.gmra.mxu0 %v2094
      %v2209 = vpop.f32.mrf.mxu0
      %v2210 = vadd.f32 0.0, %v2209
      %2211 = vmatmul.f32.gmra.mxu0 %v2097
      %v2212 = vpop.f32.mrf.mxu0
      %v2213 = vadd.f32 0.0, %v2212
      %2214 = vmatmul.f32.gmra.mxu0 %v2100
      %v2215 = vpop.f32.mrf.mxu0
      %v2216 = vadd.f32 0.0, %v2215
      %2217 = vmatmul.f32.gmra.mxu0 %v2103
      %v2218 = vpop.f32.mrf.mxu0
      %v2219 = vadd.f32 0.0, %v2218
      %2220 = vmatmul.f32.gmra.mxu0 %v2106
      %v2221 = vpop.f32.mrf.mxu0
      %v2222 = vadd.f32 0.0, %v2221
      %2223 = vdwg.mxu0
      %v2224 = vadd.f32 %v1978, %v2129
      %v2225 = vadd.f32 %v1979, %v2132
      %v2226 = vadd.f32 %v1980, %v2135
      %v2227 = vadd.f32 %v1981, %v2138
      %v2228 = vadd.f32 %v1982, %v2141
      %v2229 = vadd.f32 %v1983, %v2144
      %v2230 = vadd.f32 %v1984, %v2147
      %v2231 = vadd.f32 %v1985, %v2150
      %v2232 = vadd.f32 %v1986, %v2153
      %v2233 = vadd.f32 %v1987, %v2156
      %v2234 = vadd.f32 %v1988, %v2159
      %v2235 = vadd.f32 %v1989, %v2162
      %v2236 = vadd.f32 %v1990, %v2165
      %v2237 = vadd.f32 %v1991, %v2168
      %v2238 = vadd.f32 %v1992, %v2171
      %v2239 = vadd.f32 %v1993, %v2174
      %v2240 = vadd.f32 %v1994, %v2177
      %v2241 = vadd.f32 %v1995, %v2180
      %v2242 = vadd.f32 %v1996, %v2183
      %v2243 = vadd.f32 %v1997, %v2186
      %v2244 = vadd.f32 %v1998, %v2189
      %v2245 = vadd.f32 %v1999, %v2192
      %v2246 = vadd.f32 %v2000, %v2195
      %v2247 = vadd.f32 %v2001, %v2198
      %v2248 = vadd.f32 %v2002, %v2201
      %v2249 = vadd.f32 %v2003, %v2204
      %v2250 = vadd.f32 %v2004, %v2207
      %v2251 = vadd.f32 %v2005, %v2210
      %v2252 = vadd.f32 %v2006, %v2213
      %v2253 = vadd.f32 %v2007, %v2216
      %v2254 = vadd.f32 %v2008, %v2219
      %v2255 = vadd.f32 %v2009, %v2222
      %v2256 = vadd.f32 %v2224, %v1462
      %v2257 = vadd.f32 %v2225, %v1462
      %v2258 = vadd.f32 %v2226, %v1462
      %v2259 = vadd.f32 %v2227, %v1462
      %v2260 = vadd.f32 %v2228, %v1462
      %v2261 = vadd.f32 %v2229, %v1462
      %v2262 = vadd.f32 %v2230, %v1462
      %v2263 = vadd.f32 %v2231, %v1462
      %v2264 = vadd.f32 %v2232, %v1462
      %v2265 = vadd.f32 %v2233, %v1462
      %v2266 = vadd.f32 %v2234, %v1462
      %v2267 = vadd.f32 %v2235, %v1462
      %v2268 = vadd.f32 %v2236, %v1462
      %v2269 = vadd.f32 %v2237, %v1462
      %v2270 = vadd.f32 %v2238, %v1462
      %v2271 = vadd.f32 %v2239, %v1462
      %v2272 = vadd.f32 %v2240, %v1462
      %v2273 = vadd.f32 %v2241, %v1462
      %v2274 = vadd.f32 %v2242, %v1462
      %v2275 = vadd.f32 %v2243, %v1462
      %v2276 = vadd.f32 %v2244, %v1462
      %v2277 = vadd.f32 %v2245, %v1462
      %v2278 = vadd.f32 %v2246, %v1462
      %v2279 = vadd.f32 %v2247, %v1462
      %v2280 = vadd.f32 %v2248, %v1462
      %v2281 = vadd.f32 %v2249, %v1462
      %v2282 = vadd.f32 %v2250, %v1462
      %v2283 = vadd.f32 %v2251, %v1462
      %v2284 = vadd.f32 %v2252, %v1462
      %v2285 = vadd.f32 %v2253, %v1462
      %v2286 = vadd.f32 %v2254, %v1462
      %v2287 = vadd.f32 %v2255, %v1462
      %s2288 = scalar_lea.vmem %s240, 512
      %2289 = vst.msk [vmem:[%s2288] sm:$0xff] %vm543, %v2256
      %2290 = vst.msk [vmem:[%s2288 + $0x8] sm:$0xff] %vm543, %v2257
      %2291 = vst.msk [vmem:[%s2288 + $0x10] sm:$0xff] %vm543, %v2258
      %2292 = vst.msk [vmem:[%s2288 + $0x18] sm:$0xff] %vm543, %v2259
      %2293 = vst.msk [vmem:[%s2288 + $0x20] sm:$0xff] %vm543, %v2260
      %2294 = vst.msk [vmem:[%s2288 + $0x28] sm:$0xff] %vm543, %v2261
      %2295 = vst.msk [vmem:[%s2288 + $0x30] sm:$0xff] %vm543, %v2262
      %2296 = vst.msk [vmem:[%s2288 + $0x38] sm:$0xff] %vm543, %v2263
      %2297 = vst.msk [vmem:[%s2288 + $0x40] sm:$0xff] %vm543, %v2264
      %2298 = vst.msk [vmem:[%s2288 + $0x48] sm:$0xff] %vm543, %v2265
      %2299 = vst.msk [vmem:[%s2288 + $0x50] sm:$0xff] %vm543, %v2266
      %2300 = vst.msk [vmem:[%s2288 + $0x58] sm:$0xff] %vm543, %v2267
      %2301 = vst.msk [vmem:[%s2288 + $0x60] sm:$0xff] %vm543, %v2268
      %2302 = vst.msk [vmem:[%s2288 + $0x68] sm:$0xff] %vm543, %v2269
      %2303 = vst.msk [vmem:[%s2288 + $0x70] sm:$0xff] %vm543, %v2270
      %2304 = vst.msk [vmem:[%s2288 + $0x78] sm:$0xff] %vm543, %v2271
      %2305 = vst.msk [vmem:[%s2288 + $0x80] sm:$0xff] %vm543, %v2272
      %2306 = vst.msk [vmem:[%s2288 + $0x88] sm:$0xff] %vm543, %v2273
      %2307 = vst.msk [vmem:[%s2288 + $0x90] sm:$0xff] %vm543, %v2274
      %2308 = vst.msk [vmem:[%s2288 + $0x98] sm:$0xff] %vm543, %v2275
      %2309 = vst.msk [vmem:[%s2288 + $0xa0] sm:$0xff] %vm543, %v2276
      %2310 = vst.msk [vmem:[%s2288 + $0xa8] sm:$0xff] %vm543, %v2277
      %2311 = vst.msk [vmem:[%s2288 + $0xb0] sm:$0xff] %vm543, %v2278
      %2312 = vst.msk [vmem:[%s2288 + $0xb8] sm:$0xff] %vm543, %v2279
      %2313 = vst.msk [vmem:[%s2288 + $0xc0] sm:$0xff] %vm543, %v2280
      %2314 = vst.msk [vmem:[%s2288 + $0xc8] sm:$0xff] %vm543, %v2281
      %2315 = vst.msk [vmem:[%s2288 + $0xd0] sm:$0xff] %vm543, %v2282
      %2316 = vst.msk [vmem:[%s2288 + $0xd8] sm:$0xff] %vm543, %v2283
      %2317 = vst.msk [vmem:[%s2288 + $0xe0] sm:$0xff] %vm543, %v2284
      %2318 = vst.msk [vmem:[%s2288 + $0xe8] sm:$0xff] %vm543, %v2285
      %2319 = vst.msk [vmem:[%s2288 + $0xf0] sm:$0xff] %vm543, %v2286
      %2320 = vst.msk [vmem:[%s2288 + $0xf8] sm:$0xff] %vm543, %v2287
      %s2321 = scalar_lea.vmem %s224, 32
      %v2322 = vld [vmem:[%s2321] sm:$0xf]
      %s2323 = scalar_lea.vmem %s224, 36
      %v2324 = vld [vmem:[%s2323] sm:$0xf]
      %v2326 = vsel %vm640, %v2324, 0
      %2328 = vmatpush.msra.mxu0 0.0
      %2329 = vmatpush.msra.mxu0 0.0
      %2330 = vmatpush.msra.mxu0 0.0
      %2331 = vmatpush.msra.mxu0 0.0
      %2332 = vmatpush.msra.mxu0 0.0
      %2333 = vmatpush.msra.mxu0 0.0
      %2334 = vmatpush.msra.mxu0 0.0
      %2335 = vmatpush.msra.mxu0 0.0
      %2336 = vmatpush.msra.mxu0 0.0
      %2337 = vmatpush.msra.mxu0 0.0
      %2338 = vmatpush.msra.mxu0 0.0
      %2339 = vmatpush.msra.mxu0 0.0
      %2340 = vmatpush.msra.mxu0 0.0
      %2341 = vmatpush.msra.mxu0 0.0
      %2342 = vmatpush.msra.mxu0 0.0
      %2343 = vmatpush.msra.mxu0 %v2326
      %2344 = vmatmul.f32.gmra.mxu0 %v1218
      %v2345 = vpop.f32.mrf.mxu0
      %v2346 = vadd.f32 0.0, %v2345
      %2347 = vmatmul.f32.gmra.mxu0 %v1221
      %v2348 = vpop.f32.mrf.mxu0
      %v2349 = vadd.f32 0.0, %v2348
      %2350 = vmatmul.f32.gmra.mxu0 %v1224
      %v2351 = vpop.f32.mrf.mxu0
      %v2352 = vadd.f32 0.0, %v2351
      %2353 = vmatmul.f32.gmra.mxu0 %v1227
      %v2354 = vpop.f32.mrf.mxu0
      %v2355 = vadd.f32 0.0, %v2354
      %2356 = vmatmul.f32.gmra.mxu0 %v1230
      %v2357 = vpop.f32.mrf.mxu0
      %v2358 = vadd.f32 0.0, %v2357
      %2359 = vmatmul.f32.gmra.mxu0 %v1233
      %v2360 = vpop.f32.mrf.mxu0
      %v2361 = vadd.f32 0.0, %v2360
      %2362 = vmatmul.f32.gmra.mxu0 %v1236
      %v2363 = vpop.f32.mrf.mxu0
      %v2364 = vadd.f32 0.0, %v2363
      %2365 = vmatmul.f32.gmra.mxu0 %v1239
      %v2366 = vpop.f32.mrf.mxu0
      %v2367 = vadd.f32 0.0, %v2366
      %2368 = vmatmul.f32.gmra.mxu0 %v1242
      %v2369 = vpop.f32.mrf.mxu0
      %v2370 = vadd.f32 0.0, %v2369
      %2371 = vmatmul.f32.gmra.mxu0 %v1245
      %v2372 = vpop.f32.mrf.mxu0
      %v2373 = vadd.f32 0.0, %v2372
      %2374 = vmatmul.f32.gmra.mxu0 %v1248
      %v2375 = vpop.f32.mrf.mxu0
      %v2376 = vadd.f32 0.0, %v2375
      %2377 = vmatmul.f32.gmra.mxu0 %v1251
      %v2378 = vpop.f32.mrf.mxu0
      %v2379 = vadd.f32 0.0, %v2378
      %2380 = vmatmul.f32.gmra.mxu0 %v1254
      %v2381 = vpop.f32.mrf.mxu0
      %v2382 = vadd.f32 0.0, %v2381
      %2383 = vmatmul.f32.gmra.mxu0 %v1257
      %v2384 = vpop.f32.mrf.mxu0
      %v2385 = vadd.f32 0.0, %v2384
      %2386 = vmatmul.f32.gmra.mxu0 %v1260
      %v2387 = vpop.f32.mrf.mxu0
      %v2388 = vadd.f32 0.0, %v2387
      %2389 = vmatmul.f32.gmra.mxu0 %v1263
      %v2390 = vpop.f32.mrf.mxu0
      %v2391 = vadd.f32 0.0, %v2390
      %2392 = vmatmul.f32.gmra.mxu0 %v1266
      %v2393 = vpop.f32.mrf.mxu0
      %v2394 = vadd.f32 0.0, %v2393
      %2395 = vmatmul.f32.gmra.mxu0 %v1269
      %v2396 = vpop.f32.mrf.mxu0
      %v2397 = vadd.f32 0.0, %v2396
      %2398 = vmatmul.f32.gmra.mxu0 %v1272
      %v2399 = vpop.f32.mrf.mxu0
      %v2400 = vadd.f32 0.0, %v2399
      %2401 = vmatmul.f32.gmra.mxu0 %v1275
      %v2402 = vpop.f32.mrf.mxu0
      %v2403 = vadd.f32 0.0, %v2402
      %2404 = vmatmul.f32.gmra.mxu0 %v1278
      %v2405 = vpop.f32.mrf.mxu0
      %v2406 = vadd.f32 0.0, %v2405
      %2407 = vmatmul.f32.gmra.mxu0 %v1281
      %v2408 = vpop.f32.mrf.mxu0
      %v2409 = vadd.f32 0.0, %v2408
      %2410 = vmatmul.f32.gmra.mxu0 %v1284
      %v2411 = vpop.f32.mrf.mxu0
      %v2412 = vadd.f32 0.0, %v2411
      %2413 = vmatmul.f32.gmra.mxu0 %v1287
      %v2414 = vpop.f32.mrf.mxu0
      %v2415 = vadd.f32 0.0, %v2414
      %2416 = vmatmul.f32.gmra.mxu0 %v1290
      %v2417 = vpop.f32.mrf.mxu0
      %v2418 = vadd.f32 0.0, %v2417
      %2419 = vmatmul.f32.gmra.mxu0 %v1293
      %v2420 = vpop.f32.mrf.mxu0
      %v2421 = vadd.f32 0.0, %v2420
      %2422 = vmatmul.f32.gmra.mxu0 %v1296
      %v2423 = vpop.f32.mrf.mxu0
      %v2424 = vadd.f32 0.0, %v2423
      %2425 = vmatmul.f32.gmra.mxu0 %v1299
      %v2426 = vpop.f32.mrf.mxu0
      %v2427 = vadd.f32 0.0, %v2426
      %2428 = vmatmul.f32.gmra.mxu0 %v1302
      %v2429 = vpop.f32.mrf.mxu0
      %v2430 = vadd.f32 0.0, %v2429
      %2431 = vmatmul.f32.gmra.mxu0 %v1305
      %v2432 = vpop.f32.mrf.mxu0
      %v2433 = vadd.f32 0.0, %v2432
      %2434 = vmatmul.f32.gmra.mxu0 %v1308
      %v2435 = vpop.f32.mrf.mxu0
      %v2436 = vadd.f32 0.0, %v2435
      %2437 = vmatmul.f32.gmra.mxu0 %v1311
      %v2438 = vpop.f32.mrf.mxu0
      %v2439 = vadd.f32 0.0, %v2438
      %2440 = vdwg.mxu0
      %v2442 = vsel %vm640, %v2322, 0
      %2444 = vmatpush.msra.mxu0 0.0
      %2445 = vmatpush.msra.mxu0 0.0
      %2446 = vmatpush.msra.mxu0 0.0
      %2447 = vmatpush.msra.mxu0 0.0
      %2448 = vmatpush.msra.mxu0 0.0
      %2449 = vmatpush.msra.mxu0 0.0
      %2450 = vmatpush.msra.mxu0 0.0
      %2451 = vmatpush.msra.mxu0 0.0
      %2452 = vmatpush.msra.mxu0 0.0
      %2453 = vmatpush.msra.mxu0 0.0
      %2454 = vmatpush.msra.mxu0 0.0
      %2455 = vmatpush.msra.mxu0 0.0
      %2456 = vmatpush.msra.mxu0 0.0
      %2457 = vmatpush.msra.mxu0 0.0
      %2458 = vmatpush.msra.mxu0 0.0
      %2459 = vmatpush.msra.mxu0 %v2442
      %2460 = vmatmul.f32.gmra.mxu0 %v972
      %v2461 = vpop.f32.mrf.mxu0
      %v2462 = vadd.f32 %v2346, %v2461
      %2463 = vmatmul.f32.gmra.mxu0 %v975
      %v2464 = vpop.f32.mrf.mxu0
      %v2465 = vadd.f32 %v2349, %v2464
      %2466 = vmatmul.f32.gmra.mxu0 %v978
      %v2467 = vpop.f32.mrf.mxu0
      %v2468 = vadd.f32 %v2352, %v2467
      %2469 = vmatmul.f32.gmra.mxu0 %v981
      %v2470 = vpop.f32.mrf.mxu0
      %v2471 = vadd.f32 %v2355, %v2470
      %2472 = vmatmul.f32.gmra.mxu0 %v984
      %v2473 = vpop.f32.mrf.mxu0
      %v2474 = vadd.f32 %v2358, %v2473
      %2475 = vmatmul.f32.gmra.mxu0 %v987
      %v2476 = vpop.f32.mrf.mxu0
      %v2477 = vadd.f32 %v2361, %v2476
      %2478 = vmatmul.f32.gmra.mxu0 %v990
      %v2479 = vpop.f32.mrf.mxu0
      %v2480 = vadd.f32 %v2364, %v2479
      %2481 = vmatmul.f32.gmra.mxu0 %v993
      %v2482 = vpop.f32.mrf.mxu0
      %v2483 = vadd.f32 %v2367, %v2482
      %2484 = vmatmul.f32.gmra.mxu0 %v996
      %v2485 = vpop.f32.mrf.mxu0
      %v2486 = vadd.f32 %v2370, %v2485
      %2487 = vmatmul.f32.gmra.mxu0 %v999
      %v2488 = vpop.f32.mrf.mxu0
      %v2489 = vadd.f32 %v2373, %v2488
      %2490 = vmatmul.f32.gmra.mxu0 %v1002
      %v2491 = vpop.f32.mrf.mxu0
      %v2492 = vadd.f32 %v2376, %v2491
      %2493 = vmatmul.f32.gmra.mxu0 %v1005
      %v2494 = vpop.f32.mrf.mxu0
      %v2495 = vadd.f32 %v2379, %v2494
      %2496 = vmatmul.f32.gmra.mxu0 %v1008
      %v2497 = vpop.f32.mrf.mxu0
      %v2498 = vadd.f32 %v2382, %v2497
      %2499 = vmatmul.f32.gmra.mxu0 %v1011
      %v2500 = vpop.f32.mrf.mxu0
      %v2501 = vadd.f32 %v2385, %v2500
      %2502 = vmatmul.f32.gmra.mxu0 %v1014
      %v2503 = vpop.f32.mrf.mxu0
      %v2504 = vadd.f32 %v2388, %v2503
      %2505 = vmatmul.f32.gmra.mxu0 %v1017
      %v2506 = vpop.f32.mrf.mxu0
      %v2507 = vadd.f32 %v2391, %v2506
      %2508 = vmatmul.f32.gmra.mxu0 %v1020
      %v2509 = vpop.f32.mrf.mxu0
      %v2510 = vadd.f32 %v2394, %v2509
      %2511 = vmatmul.f32.gmra.mxu0 %v1023
      %v2512 = vpop.f32.mrf.mxu0
      %v2513 = vadd.f32 %v2397, %v2512
      %2514 = vmatmul.f32.gmra.mxu0 %v1026
      %v2515 = vpop.f32.mrf.mxu0
      %v2516 = vadd.f32 %v2400, %v2515
      %2517 = vmatmul.f32.gmra.mxu0 %v1029
      %v2518 = vpop.f32.mrf.mxu0
      %v2519 = vadd.f32 %v2403, %v2518
      %2520 = vmatmul.f32.gmra.mxu0 %v1032
      %v2521 = vpop.f32.mrf.mxu0
      %v2522 = vadd.f32 %v2406, %v2521
      %2523 = vmatmul.f32.gmra.mxu0 %v1035
      %v2524 = vpop.f32.mrf.mxu0
      %v2525 = vadd.f32 %v2409, %v2524
      %2526 = vmatmul.f32.gmra.mxu0 %v1038
      %v2527 = vpop.f32.mrf.mxu0
      %v2528 = vadd.f32 %v2412, %v2527
      %2529 = vmatmul.f32.gmra.mxu0 %v1041
      %v2530 = vpop.f32.mrf.mxu0
      %v2531 = vadd.f32 %v2415, %v2530
      %2532 = vmatmul.f32.gmra.mxu0 %v1044
      %v2533 = vpop.f32.mrf.mxu0
      %v2534 = vadd.f32 %v2418, %v2533
      %2535 = vmatmul.f32.gmra.mxu0 %v1047
      %v2536 = vpop.f32.mrf.mxu0
      %v2537 = vadd.f32 %v2421, %v2536
      %2538 = vmatmul.f32.gmra.mxu0 %v1050
      %v2539 = vpop.f32.mrf.mxu0
      %v2540 = vadd.f32 %v2424, %v2539
      %2541 = vmatmul.f32.gmra.mxu0 %v1053
      %v2542 = vpop.f32.mrf.mxu0
      %v2543 = vadd.f32 %v2427, %v2542
      %2544 = vmatmul.f32.gmra.mxu0 %v1056
      %v2545 = vpop.f32.mrf.mxu0
      %v2546 = vadd.f32 %v2430, %v2545
      %2547 = vmatmul.f32.gmra.mxu0 %v1059
      %v2548 = vpop.f32.mrf.mxu0
      %v2549 = vadd.f32 %v2433, %v2548
      %2550 = vmatmul.f32.gmra.mxu0 %v1062
      %v2551 = vpop.f32.mrf.mxu0
      %v2552 = vadd.f32 %v2436, %v2551
      %2553 = vmatmul.f32.gmra.mxu0 %v1065
      %v2554 = vpop.f32.mrf.mxu0
      %v2555 = vadd.f32 %v2439, %v2554
      %2556 = vdwg.mxu0
      %s2557 = scalar_lea.vmem %s224, 40
      %v2558 = vld [vmem:[%s2557] sm:$0xf]
      %v2560 = vsel %vm543, %v443, 0
      %v2563 = vsel %vm543, %v444, 0
      %v2566 = vsel %vm543, %v445, 0
      %v2569 = vsel %vm543, %v446, 0
      %v2572 = vsel %vm543, %v447, 0
      %v2575 = vsel %vm543, %v448, 0
      %v2578 = vsel %vm543, %v449, 0
      %v2581 = vsel %vm543, %v450, 0
      %v2584 = vsel %vm543, %v451, 0
      %v2587 = vsel %vm543, %v452, 0
      %v2590 = vsel %vm543, %v453, 0
      %v2593 = vsel %vm543, %v454, 0
      %v2596 = vsel %vm543, %v455, 0
      %v2599 = vsel %vm543, %v456, 0
      %v2602 = vsel %vm543, %v457, 0
      %v2605 = vsel %vm543, %v458, 0
      %v2608 = vsel %vm543, %v459, 0
      %v2611 = vsel %vm543, %v460, 0
      %v2614 = vsel %vm543, %v461, 0
      %v2617 = vsel %vm543, %v462, 0
      %v2620 = vsel %vm543, %v463, 0
      %v2623 = vsel %vm543, %v464, 0
      %v2626 = vsel %vm543, %v465, 0
      %v2629 = vsel %vm543, %v466, 0
      %v2632 = vsel %vm543, %v467, 0
      %v2635 = vsel %vm543, %v468, 0
      %v2638 = vsel %vm543, %v469, 0
      %v2641 = vsel %vm543, %v470, 0
      %v2644 = vsel %vm543, %v471, 0
      %v2647 = vsel %vm543, %v472, 0
      %v2650 = vsel %vm543, %v473, 0
      %v2653 = vsel %vm543, %v474, 0
      %v2656 = vsel %vm640, %v2558, 0
      %2658 = vmatpush.msra.mxu0 0.0
      %2659 = vmatpush.msra.mxu0 0.0
      %2660 = vmatpush.msra.mxu0 0.0
      %2661 = vmatpush.msra.mxu0 0.0
      %2662 = vmatpush.msra.mxu0 0.0
      %2663 = vmatpush.msra.mxu0 0.0
      %2664 = vmatpush.msra.mxu0 0.0
      %2665 = vmatpush.msra.mxu0 0.0
      %2666 = vmatpush.msra.mxu0 0.0
      %2667 = vmatpush.msra.mxu0 0.0
      %2668 = vmatpush.msra.mxu0 0.0
      %2669 = vmatpush.msra.mxu0 0.0
      %2670 = vmatpush.msra.mxu0 0.0
      %2671 = vmatpush.msra.mxu0 0.0
      %2672 = vmatpush.msra.mxu0 0.0
      %2673 = vmatpush.msra.mxu0 %v2656
      %2674 = vmatmul.f32.gmra.mxu0 %v2560
      %v2675 = vpop.f32.mrf.mxu0
      %v2676 = vadd.f32 0.0, %v2675
      %2677 = vmatmul.f32.gmra.mxu0 %v2563
      %v2678 = vpop.f32.mrf.mxu0
      %v2679 = vadd.f32 0.0, %v2678
      %2680 = vmatmul.f32.gmra.mxu0 %v2566
      %v2681 = vpop.f32.mrf.mxu0
      %v2682 = vadd.f32 0.0, %v2681
      %2683 = vmatmul.f32.gmra.mxu0 %v2569
      %v2684 = vpop.f32.mrf.mxu0
      %v2685 = vadd.f32 0.0, %v2684
      %2686 = vmatmul.f32.gmra.mxu0 %v2572
      %v2687 = vpop.f32.mrf.mxu0
      %v2688 = vadd.f32 0.0, %v2687
      %2689 = vmatmul.f32.gmra.mxu0 %v2575
      %v2690 = vpop.f32.mrf.mxu0
      %v2691 = vadd.f32 0.0, %v2690
      %2692 = vmatmul.f32.gmra.mxu0 %v2578
      %v2693 = vpop.f32.mrf.mxu0
      %v2694 = vadd.f32 0.0, %v2693
      %2695 = vmatmul.f32.gmra.mxu0 %v2581
      %v2696 = vpop.f32.mrf.mxu0
      %v2697 = vadd.f32 0.0, %v2696
      %2698 = vmatmul.f32.gmra.mxu0 %v2584
      %v2699 = vpop.f32.mrf.mxu0
      %v2700 = vadd.f32 0.0, %v2699
      %2701 = vmatmul.f32.gmra.mxu0 %v2587
      %v2702 = vpop.f32.mrf.mxu0
      %v2703 = vadd.f32 0.0, %v2702
      %2704 = vmatmul.f32.gmra.mxu0 %v2590
      %v2705 = vpop.f32.mrf.mxu0
      %v2706 = vadd.f32 0.0, %v2705
      %2707 = vmatmul.f32.gmra.mxu0 %v2593
      %v2708 = vpop.f32.mrf.mxu0
      %v2709 = vadd.f32 0.0, %v2708
      %2710 = vmatmul.f32.gmra.mxu0 %v2596
      %v2711 = vpop.f32.mrf.mxu0
      %v2712 = vadd.f32 0.0, %v2711
      %2713 = vmatmul.f32.gmra.mxu0 %v2599
      %v2714 = vpop.f32.mrf.mxu0
      %v2715 = vadd.f32 0.0, %v2714
      %2716 = vmatmul.f32.gmra.mxu0 %v2602
      %v2717 = vpop.f32.mrf.mxu0
      %v2718 = vadd.f32 0.0, %v2717
      %2719 = vmatmul.f32.gmra.mxu0 %v2605
      %v2720 = vpop.f32.mrf.mxu0
      %v2721 = vadd.f32 0.0, %v2720
      %2722 = vmatmul.f32.gmra.mxu0 %v2608
      %v2723 = vpop.f32.mrf.mxu0
      %v2724 = vadd.f32 0.0, %v2723
      %2725 = vmatmul.f32.gmra.mxu0 %v2611
      %v2726 = vpop.f32.mrf.mxu0
      %v2727 = vadd.f32 0.0, %v2726
      %2728 = vmatmul.f32.gmra.mxu0 %v2614
      %v2729 = vpop.f32.mrf.mxu0
      %v2730 = vadd.f32 0.0, %v2729
      %2731 = vmatmul.f32.gmra.mxu0 %v2617
      %v2732 = vpop.f32.mrf.mxu0
      %v2733 = vadd.f32 0.0, %v2732
      %2734 = vmatmul.f32.gmra.mxu0 %v2620
      %v2735 = vpop.f32.mrf.mxu0
      %v2736 = vadd.f32 0.0, %v2735
      %2737 = vmatmul.f32.gmra.mxu0 %v2623
      %v2738 = vpop.f32.mrf.mxu0
      %v2739 = vadd.f32 0.0, %v2738
      %2740 = vmatmul.f32.gmra.mxu0 %v2626
      %v2741 = vpop.f32.mrf.mxu0
      %v2742 = vadd.f32 0.0, %v2741
      %2743 = vmatmul.f32.gmra.mxu0 %v2629
      %v2744 = vpop.f32.mrf.mxu0
      %v2745 = vadd.f32 0.0, %v2744
      %2746 = vmatmul.f32.gmra.mxu0 %v2632
      %v2747 = vpop.f32.mrf.mxu0
      %v2748 = vadd.f32 0.0, %v2747
      %2749 = vmatmul.f32.gmra.mxu0 %v2635
      %v2750 = vpop.f32.mrf.mxu0
      %v2751 = vadd.f32 0.0, %v2750
      %2752 = vmatmul.f32.gmra.mxu0 %v2638
      %v2753 = vpop.f32.mrf.mxu0
      %v2754 = vadd.f32 0.0, %v2753
      %2755 = vmatmul.f32.gmra.mxu0 %v2641
      %v2756 = vpop.f32.mrf.mxu0
      %v2757 = vadd.f32 0.0, %v2756
      %2758 = vmatmul.f32.gmra.mxu0 %v2644
      %v2759 = vpop.f32.mrf.mxu0
      %v2760 = vadd.f32 0.0, %v2759
      %2761 = vmatmul.f32.gmra.mxu0 %v2647
      %v2762 = vpop.f32.mrf.mxu0
      %v2763 = vadd.f32 0.0, %v2762
      %2764 = vmatmul.f32.gmra.mxu0 %v2650
      %v2765 = vpop.f32.mrf.mxu0
      %v2766 = vadd.f32 0.0, %v2765
      %2767 = vmatmul.f32.gmra.mxu0 %v2653
      %v2768 = vpop.f32.mrf.mxu0
      %v2769 = vadd.f32 0.0, %v2768
      %2770 = vdwg.mxu0
      %v2771 = vadd.f32 %v2462, %v2676
      %v2772 = vadd.f32 %v2465, %v2679
      %v2773 = vadd.f32 %v2468, %v2682
      %v2774 = vadd.f32 %v2471, %v2685
      %v2775 = vadd.f32 %v2474, %v2688
      %v2776 = vadd.f32 %v2477, %v2691
      %v2777 = vadd.f32 %v2480, %v2694
      %v2778 = vadd.f32 %v2483, %v2697
      %v2779 = vadd.f32 %v2486, %v2700
      %v2780 = vadd.f32 %v2489, %v2703
      %v2781 = vadd.f32 %v2492, %v2706
      %v2782 = vadd.f32 %v2495, %v2709
      %v2783 = vadd.f32 %v2498, %v2712
      %v2784 = vadd.f32 %v2501, %v2715
      %v2785 = vadd.f32 %v2504, %v2718
      %v2786 = vadd.f32 %v2507, %v2721
      %v2787 = vadd.f32 %v2510, %v2724
      %v2788 = vadd.f32 %v2513, %v2727
      %v2789 = vadd.f32 %v2516, %v2730
      %v2790 = vadd.f32 %v2519, %v2733
      %v2791 = vadd.f32 %v2522, %v2736
      %v2792 = vadd.f32 %v2525, %v2739
      %v2793 = vadd.f32 %v2528, %v2742
      %v2794 = vadd.f32 %v2531, %v2745
      %v2795 = vadd.f32 %v2534, %v2748
      %v2796 = vadd.f32 %v2537, %v2751
      %v2797 = vadd.f32 %v2540, %v2754
      %v2798 = vadd.f32 %v2543, %v2757
      %v2799 = vadd.f32 %v2546, %v2760
      %v2800 = vadd.f32 %v2549, %v2763
      %v2801 = vadd.f32 %v2552, %v2766
      %v2802 = vadd.f32 %v2555, %v2769
      %s2803 = scalar_lea.vmem %s224, 44
      %v2804 = vld [vmem:[%s2803] sm:$0xf]
      %v2806 = vsel %vm543, %v475, 0
      %v2809 = vsel %vm543, %v476, 0
      %v2812 = vsel %vm543, %v477, 0
      %v2815 = vsel %vm543, %v478, 0
      %v2818 = vsel %vm543, %v479, 0
      %v2821 = vsel %vm543, %v480, 0
      %v2824 = vsel %vm543, %v481, 0
      %v2827 = vsel %vm543, %v482, 0
      %v2830 = vsel %vm543, %v483, 0
      %v2833 = vsel %vm543, %v484, 0
      %v2836 = vsel %vm543, %v485, 0
      %v2839 = vsel %vm543, %v486, 0
      %v2842 = vsel %vm543, %v487, 0
      %v2845 = vsel %vm543, %v488, 0
      %v2848 = vsel %vm543, %v489, 0
      %v2851 = vsel %vm543, %v490, 0
      %v2854 = vsel %vm543, %v491, 0
      %v2857 = vsel %vm543, %v492, 0
      %v2860 = vsel %vm543, %v493, 0
      %v2863 = vsel %vm543, %v494, 0
      %v2866 = vsel %vm543, %v495, 0
      %v2869 = vsel %vm543, %v496, 0
      %v2872 = vsel %vm543, %v497, 0
      %v2875 = vsel %vm543, %v498, 0
      %v2878 = vsel %vm543, %v499, 0
      %v2881 = vsel %vm543, %v500, 0
      %v2884 = vsel %vm543, %v501, 0
      %v2887 = vsel %vm543, %v502, 0
      %v2890 = vsel %vm543, %v503, 0
      %v2893 = vsel %vm543, %v504, 0
      %v2896 = vsel %vm543, %v505, 0
      %v2899 = vsel %vm543, %v506, 0
      %v2902 = vsel %vm640, %v2804, 0
      %2904 = vmatpush.msra.mxu0 0.0
      %2905 = vmatpush.msra.mxu0 0.0
      %2906 = vmatpush.msra.mxu0 0.0
      %2907 = vmatpush.msra.mxu0 0.0
      %2908 = vmatpush.msra.mxu0 0.0
      %2909 = vmatpush.msra.mxu0 0.0
      %2910 = vmatpush.msra.mxu0 0.0
      %2911 = vmatpush.msra.mxu0 0.0
      %2912 = vmatpush.msra.mxu0 0.0
      %2913 = vmatpush.msra.mxu0 0.0
      %2914 = vmatpush.msra.mxu0 0.0
      %2915 = vmatpush.msra.mxu0 0.0
      %2916 = vmatpush.msra.mxu0 0.0
      %2917 = vmatpush.msra.mxu0 0.0
      %2918 = vmatpush.msra.mxu0 0.0
      %2919 = vmatpush.msra.mxu0 %v2902
      %2920 = vmatmul.f32.gmra.mxu0 %v2806
      %v2921 = vpop.f32.mrf.mxu0
      %v2922 = vadd.f32 0.0, %v2921
      %2923 = vmatmul.f32.gmra.mxu0 %v2809
      %v2924 = vpop.f32.mrf.mxu0
      %v2925 = vadd.f32 0.0, %v2924
      %2926 = vmatmul.f32.gmra.mxu0 %v2812
      %v2927 = vpop.f32.mrf.mxu0
      %v2928 = vadd.f32 0.0, %v2927
      %2929 = vmatmul.f32.gmra.mxu0 %v2815
      %v2930 = vpop.f32.mrf.mxu0
      %v2931 = vadd.f32 0.0, %v2930
      %2932 = vmatmul.f32.gmra.mxu0 %v2818
      %v2933 = vpop.f32.mrf.mxu0
      %v2934 = vadd.f32 0.0, %v2933
      %2935 = vmatmul.f32.gmra.mxu0 %v2821
      %v2936 = vpop.f32.mrf.mxu0
      %v2937 = vadd.f32 0.0, %v2936
      %2938 = vmatmul.f32.gmra.mxu0 %v2824
      %v2939 = vpop.f32.mrf.mxu0
      %v2940 = vadd.f32 0.0, %v2939
      %2941 = vmatmul.f32.gmra.mxu0 %v2827
      %v2942 = vpop.f32.mrf.mxu0
      %v2943 = vadd.f32 0.0, %v2942
      %2944 = vmatmul.f32.gmra.mxu0 %v2830
      %v2945 = vpop.f32.mrf.mxu0
      %v2946 = vadd.f32 0.0, %v2945
      %2947 = vmatmul.f32.gmra.mxu0 %v2833
      %v2948 = vpop.f32.mrf.mxu0
      %v2949 = vadd.f32 0.0, %v2948
      %2950 = vmatmul.f32.gmra.mxu0 %v2836
      %v2951 = vpop.f32.mrf.mxu0
      %v2952 = vadd.f32 0.0, %v2951
      %2953 = vmatmul.f32.gmra.mxu0 %v2839
      %v2954 = vpop.f32.mrf.mxu0
      %v2955 = vadd.f32 0.0, %v2954
      %2956 = vmatmul.f32.gmra.mxu0 %v2842
      %v2957 = vpop.f32.mrf.mxu0
      %v2958 = vadd.f32 0.0, %v2957
      %2959 = vmatmul.f32.gmra.mxu0 %v2845
      %v2960 = vpop.f32.mrf.mxu0
      %v2961 = vadd.f32 0.0, %v2960
      %2962 = vmatmul.f32.gmra.mxu0 %v2848
      %v2963 = vpop.f32.mrf.mxu0
      %v2964 = vadd.f32 0.0, %v2963
      %2965 = vmatmul.f32.gmra.mxu0 %v2851
      %v2966 = vpop.f32.mrf.mxu0
      %v2967 = vadd.f32 0.0, %v2966
      %2968 = vmatmul.f32.gmra.mxu0 %v2854
      %v2969 = vpop.f32.mrf.mxu0
      %v2970 = vadd.f32 0.0, %v2969
      %2971 = vmatmul.f32.gmra.mxu0 %v2857
      %v2972 = vpop.f32.mrf.mxu0
      %v2973 = vadd.f32 0.0, %v2972
      %2974 = vmatmul.f32.gmra.mxu0 %v2860
      %v2975 = vpop.f32.mrf.mxu0
      %v2976 = vadd.f32 0.0, %v2975
      %2977 = vmatmul.f32.gmra.mxu0 %v2863
      %v2978 = vpop.f32.mrf.mxu0
      %v2979 = vadd.f32 0.0, %v2978
      %2980 = vmatmul.f32.gmra.mxu0 %v2866
      %v2981 = vpop.f32.mrf.mxu0
      %v2982 = vadd.f32 0.0, %v2981
      %2983 = vmatmul.f32.gmra.mxu0 %v2869
      %v2984 = vpop.f32.mrf.mxu0
      %v2985 = vadd.f32 0.0, %v2984
      %2986 = vmatmul.f32.gmra.mxu0 %v2872
      %v2987 = vpop.f32.mrf.mxu0
      %v2988 = vadd.f32 0.0, %v2987
      %2989 = vmatmul.f32.gmra.mxu0 %v2875
      %v2990 = vpop.f32.mrf.mxu0
      %v2991 = vadd.f32 0.0, %v2990
      %2992 = vmatmul.f32.gmra.mxu0 %v2878
      %v2993 = vpop.f32.mrf.mxu0
      %v2994 = vadd.f32 0.0, %v2993
      %2995 = vmatmul.f32.gmra.mxu0 %v2881
      %v2996 = vpop.f32.mrf.mxu0
      %v2997 = vadd.f32 0.0, %v2996
      %2998 = vmatmul.f32.gmra.mxu0 %v2884
      %v2999 = vpop.f32.mrf.mxu0
      %v3000 = vadd.f32 0.0, %v2999
      %3001 = vmatmul.f32.gmra.mxu0 %v2887
      %v3002 = vpop.f32.mrf.mxu0
      %v3003 = vadd.f32 0.0, %v3002
      %3004 = vmatmul.f32.gmra.mxu0 %v2890
      %v3005 = vpop.f32.mrf.mxu0
      %v3006 = vadd.f32 0.0, %v3005
      %3007 = vmatmul.f32.gmra.mxu0 %v2893
      %v3008 = vpop.f32.mrf.mxu0
      %v3009 = vadd.f32 0.0, %v3008
      %3010 = vmatmul.f32.gmra.mxu0 %v2896
      %v3011 = vpop.f32.mrf.mxu0
      %v3012 = vadd.f32 0.0, %v3011
      %3013 = vmatmul.f32.gmra.mxu0 %v2899
      %v3014 = vpop.f32.mrf.mxu0
      %v3015 = vadd.f32 0.0, %v3014
      %3016 = vdwg.mxu0
      %v3017 = vadd.f32 %v2771, %v2922
      %v3018 = vadd.f32 %v2772, %v2925
      %v3019 = vadd.f32 %v2773, %v2928
      %v3020 = vadd.f32 %v2774, %v2931
      %v3021 = vadd.f32 %v2775, %v2934
      %v3022 = vadd.f32 %v2776, %v2937
      %v3023 = vadd.f32 %v2777, %v2940
      %v3024 = vadd.f32 %v2778, %v2943
      %v3025 = vadd.f32 %v2779, %v2946
      %v3026 = vadd.f32 %v2780, %v2949
      %v3027 = vadd.f32 %v2781, %v2952
      %v3028 = vadd.f32 %v2782, %v2955
      %v3029 = vadd.f32 %v2783, %v2958
      %v3030 = vadd.f32 %v2784, %v2961
      %v3031 = vadd.f32 %v2785, %v2964
      %v3032 = vadd.f32 %v2786, %v2967
      %v3033 = vadd.f32 %v2787, %v2970
      %v3034 = vadd.f32 %v2788, %v2973
      %v3035 = vadd.f32 %v2789, %v2976
      %v3036 = vadd.f32 %v2790, %v2979
      %v3037 = vadd.f32 %v2791, %v2982
      %v3038 = vadd.f32 %v2792, %v2985
      %v3039 = vadd.f32 %v2793, %v2988
      %v3040 = vadd.f32 %v2794, %v2991
      %v3041 = vadd.f32 %v2795, %v2994
      %v3042 = vadd.f32 %v2796, %v2997
      %v3043 = vadd.f32 %v2797, %v3000
      %v3044 = vadd.f32 %v2798, %v3003
      %v3045 = vadd.f32 %v2799, %v3006
      %v3046 = vadd.f32 %v2800, %v3009
      %v3047 = vadd.f32 %v2801, %v3012
      %v3048 = vadd.f32 %v2802, %v3015
      %v3049 = vadd.f32 %v3017, %v1462
      %v3050 = vadd.f32 %v3018, %v1462
      %v3051 = vadd.f32 %v3019, %v1462
      %v3052 = vadd.f32 %v3020, %v1462
      %v3053 = vadd.f32 %v3021, %v1462
      %v3054 = vadd.f32 %v3022, %v1462
      %v3055 = vadd.f32 %v3023, %v1462
      %v3056 = vadd.f32 %v3024, %v1462
      %v3057 = vadd.f32 %v3025, %v1462
      %v3058 = vadd.f32 %v3026, %v1462
      %v3059 = vadd.f32 %v3027, %v1462
      %v3060 = vadd.f32 %v3028, %v1462
      %v3061 = vadd.f32 %v3029, %v1462
      %v3062 = vadd.f32 %v3030, %v1462
      %v3063 = vadd.f32 %v3031, %v1462
      %v3064 = vadd.f32 %v3032, %v1462
      %v3065 = vadd.f32 %v3033, %v1462
      %v3066 = vadd.f32 %v3034, %v1462
      %v3067 = vadd.f32 %v3035, %v1462
      %v3068 = vadd.f32 %v3036, %v1462
      %v3069 = vadd.f32 %v3037, %v1462
      %v3070 = vadd.f32 %v3038, %v1462
      %v3071 = vadd.f32 %v3039, %v1462
      %v3072 = vadd.f32 %v3040, %v1462
      %v3073 = vadd.f32 %v3041, %v1462
      %v3074 = vadd.f32 %v3042, %v1462
      %v3075 = vadd.f32 %v3043, %v1462
      %v3076 = vadd.f32 %v3044, %v1462
      %v3077 = vadd.f32 %v3045, %v1462
      %v3078 = vadd.f32 %v3046, %v1462
      %v3079 = vadd.f32 %v3047, %v1462
      %v3080 = vadd.f32 %v3048, %v1462
      %s3081 = scalar_lea.vmem %s240, 256
      %3082 = vst.msk [vmem:[%s3081] sm:$0xff] %vm543, %v3049
      %3083 = vst.msk [vmem:[%s3081 + $0x8] sm:$0xff] %vm543, %v3050
      %3084 = vst.msk [vmem:[%s3081 + $0x10] sm:$0xff] %vm543, %v3051
      %3085 = vst.msk [vmem:[%s3081 + $0x18] sm:$0xff] %vm543, %v3052
      %3086 = vst.msk [vmem:[%s3081 + $0x20] sm:$0xff] %vm543, %v3053
      %3087 = vst.msk [vmem:[%s3081 + $0x28] sm:$0xff] %vm543, %v3054
      %3088 = vst.msk [vmem:[%s3081 + $0x30] sm:$0xff] %vm543, %v3055
      %3089 = vst.msk [vmem:[%s3081 + $0x38] sm:$0xff] %vm543, %v3056
      %3090 = vst.msk [vmem:[%s3081 + $0x40] sm:$0xff] %vm543, %v3057
      %3091 = vst.msk [vmem:[%s3081 + $0x48] sm:$0xff] %vm543, %v3058
      %3092 = vst.msk [vmem:[%s3081 + $0x50] sm:$0xff] %vm543, %v3059
      %3093 = vst.msk [vmem:[%s3081 + $0x58] sm:$0xff] %vm543, %v3060
      %3094 = vst.msk [vmem:[%s3081 + $0x60] sm:$0xff] %vm543, %v3061
      %3095 = vst.msk [vmem:[%s3081 + $0x68] sm:$0xff] %vm543, %v3062
      %3096 = vst.msk [vmem:[%s3081 + $0x70] sm:$0xff] %vm543, %v3063
      %3097 = vst.msk [vmem:[%s3081 + $0x78] sm:$0xff] %vm543, %v3064
      %3098 = vst.msk [vmem:[%s3081 + $0x80] sm:$0xff] %vm543, %v3065
      %3099 = vst.msk [vmem:[%s3081 + $0x88] sm:$0xff] %vm543, %v3066
      %3100 = vst.msk [vmem:[%s3081 + $0x90] sm:$0xff] %vm543, %v3067
      %3101 = vst.msk [vmem:[%s3081 + $0x98] sm:$0xff] %vm543, %v3068
      %3102 = vst.msk [vmem:[%s3081 + $0xa0] sm:$0xff] %vm543, %v3069
      %3103 = vst.msk [vmem:[%s3081 + $0xa8] sm:$0xff] %vm543, %v3070
      %3104 = vst.msk [vmem:[%s3081 + $0xb0] sm:$0xff] %vm543, %v3071
      %3105 = vst.msk [vmem:[%s3081 + $0xb8] sm:$0xff] %vm543, %v3072
      %3106 = vst.msk [vmem:[%s3081 + $0xc0] sm:$0xff] %vm543, %v3073
      %3107 = vst.msk [vmem:[%s3081 + $0xc8] sm:$0xff] %vm543, %v3074
      %3108 = vst.msk [vmem:[%s3081 + $0xd0] sm:$0xff] %vm543, %v3075
      %3109 = vst.msk [vmem:[%s3081 + $0xd8] sm:$0xff] %vm543, %v3076
      %3110 = vst.msk [vmem:[%s3081 + $0xe0] sm:$0xff] %vm543, %v3077
      %3111 = vst.msk [vmem:[%s3081 + $0xe8] sm:$0xff] %vm543, %v3078
      %3112 = vst.msk [vmem:[%s3081 + $0xf0] sm:$0xff] %vm543, %v3079
      %3113 = vst.msk [vmem:[%s3081 + $0xf8] sm:$0xff] %vm543, %v3080
      %s3114 = scalar_lea.vmem %s224, 48
      %v3115 = vld [vmem:[%s3114] sm:$0xf]
      %s3116 = scalar_lea.vmem %s224, 52
      %v3117 = vld [vmem:[%s3116] sm:$0xf]
      %v3119 = vsel %vm640, %v3117, 0
      %3121 = vmatpush.msra.mxu0 0.0
      %3122 = vmatpush.msra.mxu0 0.0
      %3123 = vmatpush.msra.mxu0 0.0
      %3124 = vmatpush.msra.mxu0 0.0
      %3125 = vmatpush.msra.mxu0 0.0
      %3126 = vmatpush.msra.mxu0 0.0
      %3127 = vmatpush.msra.mxu0 0.0
      %3128 = vmatpush.msra.mxu0 0.0
      %3129 = vmatpush.msra.mxu0 0.0
      %3130 = vmatpush.msra.mxu0 0.0
      %3131 = vmatpush.msra.mxu0 0.0
      %3132 = vmatpush.msra.mxu0 0.0
      %3133 = vmatpush.msra.mxu0 0.0
      %3134 = vmatpush.msra.mxu0 0.0
      %3135 = vmatpush.msra.mxu0 0.0
      %3136 = vmatpush.msra.mxu0 %v3119
      %3137 = vmatmul.f32.gmra.mxu0 %v2013
      %v3138 = vpop.f32.mrf.mxu0
      %v3139 = vadd.f32 0.0, %v3138
      %3140 = vmatmul.f32.gmra.mxu0 %v2016
      %v3141 = vpop.f32.mrf.mxu0
      %v3142 = vadd.f32 0.0, %v3141
      %3143 = vmatmul.f32.gmra.mxu0 %v2019
      %v3144 = vpop.f32.mrf.mxu0
      %v3145 = vadd.f32 0.0, %v3144
      %3146 = vmatmul.f32.gmra.mxu0 %v2022
      %v3147 = vpop.f32.mrf.mxu0
      %v3148 = vadd.f32 0.0, %v3147
      %3149 = vmatmul.f32.gmra.mxu0 %v2025
      %v3150 = vpop.f32.mrf.mxu0
      %v3151 = vadd.f32 0.0, %v3150
      %3152 = vmatmul.f32.gmra.mxu0 %v2028
      %v3153 = vpop.f32.mrf.mxu0
      %v3154 = vadd.f32 0.0, %v3153
      %3155 = vmatmul.f32.gmra.mxu0 %v2031
      %v3156 = vpop.f32.mrf.mxu0
      %v3157 = vadd.f32 0.0, %v3156
      %3158 = vmatmul.f32.gmra.mxu0 %v2034
      %v3159 = vpop.f32.mrf.mxu0
      %v3160 = vadd.f32 0.0, %v3159
      %3161 = vmatmul.f32.gmra.mxu0 %v2037
      %v3162 = vpop.f32.mrf.mxu0
      %v3163 = vadd.f32 0.0, %v3162
      %3164 = vmatmul.f32.gmra.mxu0 %v2040
      %v3165 = vpop.f32.mrf.mxu0
      %v3166 = vadd.f32 0.0, %v3165
      %3167 = vmatmul.f32.gmra.mxu0 %v2043
      %v3168 = vpop.f32.mrf.mxu0
      %v3169 = vadd.f32 0.0, %v3168
      %3170 = vmatmul.f32.gmra.mxu0 %v2046
      %v3171 = vpop.f32.mrf.mxu0
      %v3172 = vadd.f32 0.0, %v3171
      %3173 = vmatmul.f32.gmra.mxu0 %v2049
      %v3174 = vpop.f32.mrf.mxu0
      %v3175 = vadd.f32 0.0, %v3174
      %3176 = vmatmul.f32.gmra.mxu0 %v2052
      %v3177 = vpop.f32.mrf.mxu0
      %v3178 = vadd.f32 0.0, %v3177
      %3179 = vmatmul.f32.gmra.mxu0 %v2055
      %v3180 = vpop.f32.mrf.mxu0
      %v3181 = vadd.f32 0.0, %v3180
      %3182 = vmatmul.f32.gmra.mxu0 %v2058
      %v3183 = vpop.f32.mrf.mxu0
      %v3184 = vadd.f32 0.0, %v3183
      %3185 = vmatmul.f32.gmra.mxu0 %v2061
      %v3186 = vpop.f32.mrf.mxu0
      %v3187 = vadd.f32 0.0, %v3186
      %3188 = vmatmul.f32.gmra.mxu0 %v2064
      %v3189 = vpop.f32.mrf.mxu0
      %v3190 = vadd.f32 0.0, %v3189
      %3191 = vmatmul.f32.gmra.mxu0 %v2067
      %v3192 = vpop.f32.mrf.mxu0
      %v3193 = vadd.f32 0.0, %v3192
      %3194 = vmatmul.f32.gmra.mxu0 %v2070
      %v3195 = vpop.f32.mrf.mxu0
      %v3196 = vadd.f32 0.0, %v3195
      %3197 = vmatmul.f32.gmra.mxu0 %v2073
      %v3198 = vpop.f32.mrf.mxu0
      %v3199 = vadd.f32 0.0, %v3198
      %3200 = vmatmul.f32.gmra.mxu0 %v2076
      %v3201 = vpop.f32.mrf.mxu0
      %v3202 = vadd.f32 0.0, %v3201
      %3203 = vmatmul.f32.gmra.mxu0 %v2079
      %v3204 = vpop.f32.mrf.mxu0
      %v3205 = vadd.f32 0.0, %v3204
      %3206 = vmatmul.f32.gmra.mxu0 %v2082
      %v3207 = vpop.f32.mrf.mxu0
      %v3208 = vadd.f32 0.0, %v3207
      %3209 = vmatmul.f32.gmra.mxu0 %v2085
      %v3210 = vpop.f32.mrf.mxu0
      %v3211 = vadd.f32 0.0, %v3210
      %3212 = vmatmul.f32.gmra.mxu0 %v2088
      %v3213 = vpop.f32.mrf.mxu0
      %v3214 = vadd.f32 0.0, %v3213
      %3215 = vmatmul.f32.gmra.mxu0 %v2091
      %v3216 = vpop.f32.mrf.mxu0
      %v3217 = vadd.f32 0.0, %v3216
      %3218 = vmatmul.f32.gmra.mxu0 %v2094
      %v3219 = vpop.f32.mrf.mxu0
      %v3220 = vadd.f32 0.0, %v3219
      %3221 = vmatmul.f32.gmra.mxu0 %v2097
      %v3222 = vpop.f32.mrf.mxu0
      %v3223 = vadd.f32 0.0, %v3222
      %3224 = vmatmul.f32.gmra.mxu0 %v2100
      %v3225 = vpop.f32.mrf.mxu0
      %v3226 = vadd.f32 0.0, %v3225
      %3227 = vmatmul.f32.gmra.mxu0 %v2103
      %v3228 = vpop.f32.mrf.mxu0
      %v3229 = vadd.f32 0.0, %v3228
      %3230 = vmatmul.f32.gmra.mxu0 %v2106
      %v3231 = vpop.f32.mrf.mxu0
      %v3232 = vadd.f32 0.0, %v3231
      %3233 = vdwg.mxu0
      %v3235 = vsel %vm640, %v3115, 0
      %3237 = vmatpush.msra.mxu0 0.0
      %3238 = vmatpush.msra.mxu0 0.0
      %3239 = vmatpush.msra.mxu0 0.0
      %3240 = vmatpush.msra.mxu0 0.0
      %3241 = vmatpush.msra.mxu0 0.0
      %3242 = vmatpush.msra.mxu0 0.0
      %3243 = vmatpush.msra.mxu0 0.0
      %3244 = vmatpush.msra.mxu0 0.0
      %3245 = vmatpush.msra.mxu0 0.0
      %3246 = vmatpush.msra.mxu0 0.0
      %3247 = vmatpush.msra.mxu0 0.0
      %3248 = vmatpush.msra.mxu0 0.0
      %3249 = vmatpush.msra.mxu0 0.0
      %3250 = vmatpush.msra.mxu0 0.0
      %3251 = vmatpush.msra.mxu0 0.0
      %3252 = vmatpush.msra.mxu0 %v3235
      %3253 = vmatmul.f32.gmra.mxu0 %v1218
      %v3254 = vpop.f32.mrf.mxu0
      %v3255 = vadd.f32 %v3139, %v3254
      %3256 = vmatmul.f32.gmra.mxu0 %v1221
      %v3257 = vpop.f32.mrf.mxu0
      %v3258 = vadd.f32 %v3142, %v3257
      %3259 = vmatmul.f32.gmra.mxu0 %v1224
      %v3260 = vpop.f32.mrf.mxu0
      %v3261 = vadd.f32 %v3145, %v3260
      %3262 = vmatmul.f32.gmra.mxu0 %v1227
      %v3263 = vpop.f32.mrf.mxu0
      %v3264 = vadd.f32 %v3148, %v3263
      %3265 = vmatmul.f32.gmra.mxu0 %v1230
      %v3266 = vpop.f32.mrf.mxu0
      %v3267 = vadd.f32 %v3151, %v3266
      %3268 = vmatmul.f32.gmra.mxu0 %v1233
      %v3269 = vpop.f32.mrf.mxu0
      %v3270 = vadd.f32 %v3154, %v3269
      %3271 = vmatmul.f32.gmra.mxu0 %v1236
      %v3272 = vpop.f32.mrf.mxu0
      %v3273 = vadd.f32 %v3157, %v3272
      %3274 = vmatmul.f32.gmra.mxu0 %v1239
      %v3275 = vpop.f32.mrf.mxu0
      %v3276 = vadd.f32 %v3160, %v3275
      %3277 = vmatmul.f32.gmra.mxu0 %v1242
      %v3278 = vpop.f32.mrf.mxu0
      %v3279 = vadd.f32 %v3163, %v3278
      %3280 = vmatmul.f32.gmra.mxu0 %v1245
      %v3281 = vpop.f32.mrf.mxu0
      %v3282 = vadd.f32 %v3166, %v3281
      %3283 = vmatmul.f32.gmra.mxu0 %v1248
      %v3284 = vpop.f32.mrf.mxu0
      %v3285 = vadd.f32 %v3169, %v3284
      %3286 = vmatmul.f32.gmra.mxu0 %v1251
      %v3287 = vpop.f32.mrf.mxu0
      %v3288 = vadd.f32 %v3172, %v3287
      %3289 = vmatmul.f32.gmra.mxu0 %v1254
      %v3290 = vpop.f32.mrf.mxu0
      %v3291 = vadd.f32 %v3175, %v3290
      %3292 = vmatmul.f32.gmra.mxu0 %v1257
      %v3293 = vpop.f32.mrf.mxu0
      %v3294 = vadd.f32 %v3178, %v3293
      %3295 = vmatmul.f32.gmra.mxu0 %v1260
      %v3296 = vpop.f32.mrf.mxu0
      %v3297 = vadd.f32 %v3181, %v3296
      %3298 = vmatmul.f32.gmra.mxu0 %v1263
      %v3299 = vpop.f32.mrf.mxu0
      %v3300 = vadd.f32 %v3184, %v3299
      %3301 = vmatmul.f32.gmra.mxu0 %v1266
      %v3302 = vpop.f32.mrf.mxu0
      %v3303 = vadd.f32 %v3187, %v3302
      %3304 = vmatmul.f32.gmra.mxu0 %v1269
      %v3305 = vpop.f32.mrf.mxu0
      %v3306 = vadd.f32 %v3190, %v3305
      %3307 = vmatmul.f32.gmra.mxu0 %v1272
      %v3308 = vpop.f32.mrf.mxu0
      %v3309 = vadd.f32 %v3193, %v3308
      %3310 = vmatmul.f32.gmra.mxu0 %v1275
      %v3311 = vpop.f32.mrf.mxu0
      %v3312 = vadd.f32 %v3196, %v3311
      %3313 = vmatmul.f32.gmra.mxu0 %v1278
      %v3314 = vpop.f32.mrf.mxu0
      %v3315 = vadd.f32 %v3199, %v3314
      %3316 = vmatmul.f32.gmra.mxu0 %v1281
      %v3317 = vpop.f32.mrf.mxu0
      %v3318 = vadd.f32 %v3202, %v3317
      %3319 = vmatmul.f32.gmra.mxu0 %v1284
      %v3320 = vpop.f32.mrf.mxu0
      %v3321 = vadd.f32 %v3205, %v3320
      %3322 = vmatmul.f32.gmra.mxu0 %v1287
      %v3323 = vpop.f32.mrf.mxu0
      %v3324 = vadd.f32 %v3208, %v3323
      %3325 = vmatmul.f32.gmra.mxu0 %v1290
      %v3326 = vpop.f32.mrf.mxu0
      %v3327 = vadd.f32 %v3211, %v3326
      %3328 = vmatmul.f32.gmra.mxu0 %v1293
      %v3329 = vpop.f32.mrf.mxu0
      %v3330 = vadd.f32 %v3214, %v3329
      %3331 = vmatmul.f32.gmra.mxu0 %v1296
      %v3332 = vpop.f32.mrf.mxu0
      %v3333 = vadd.f32 %v3217, %v3332
      %3334 = vmatmul.f32.gmra.mxu0 %v1299
      %v3335 = vpop.f32.mrf.mxu0
      %v3336 = vadd.f32 %v3220, %v3335
      %3337 = vmatmul.f32.gmra.mxu0 %v1302
      %v3338 = vpop.f32.mrf.mxu0
      %v3339 = vadd.f32 %v3223, %v3338
      %3340 = vmatmul.f32.gmra.mxu0 %v1305
      %v3341 = vpop.f32.mrf.mxu0
      %v3342 = vadd.f32 %v3226, %v3341
      %3343 = vmatmul.f32.gmra.mxu0 %v1308
      %v3344 = vpop.f32.mrf.mxu0
      %v3345 = vadd.f32 %v3229, %v3344
      %3346 = vmatmul.f32.gmra.mxu0 %v1311
      %v3347 = vpop.f32.mrf.mxu0
      %v3348 = vadd.f32 %v3232, %v3347
      %3349 = vdwg.mxu0
      %s3350 = scalar_lea.vmem %s224, 56
      %v3351 = vld [vmem:[%s3350] sm:$0xf]
      %v3353 = vsel %vm640, %v3351, 0
      %3355 = vmatpush.msra.mxu0 0.0
      %3356 = vmatpush.msra.mxu0 0.0
      %3357 = vmatpush.msra.mxu0 0.0
      %3358 = vmatpush.msra.mxu0 0.0
      %3359 = vmatpush.msra.mxu0 0.0
      %3360 = vmatpush.msra.mxu0 0.0
      %3361 = vmatpush.msra.mxu0 0.0
      %3362 = vmatpush.msra.mxu0 0.0
      %3363 = vmatpush.msra.mxu0 0.0
      %3364 = vmatpush.msra.mxu0 0.0
      %3365 = vmatpush.msra.mxu0 0.0
      %3366 = vmatpush.msra.mxu0 0.0
      %3367 = vmatpush.msra.mxu0 0.0
      %3368 = vmatpush.msra.mxu0 0.0
      %3369 = vmatpush.msra.mxu0 0.0
      %3370 = vmatpush.msra.mxu0 %v3353
      %3371 = vmatmul.f32.gmra.mxu0 %v2806
      %v3372 = vpop.f32.mrf.mxu0
      %v3373 = vadd.f32 0.0, %v3372
      %3374 = vmatmul.f32.gmra.mxu0 %v2809
      %v3375 = vpop.f32.mrf.mxu0
      %v3376 = vadd.f32 0.0, %v3375
      %3377 = vmatmul.f32.gmra.mxu0 %v2812
      %v3378 = vpop.f32.mrf.mxu0
      %v3379 = vadd.f32 0.0, %v3378
      %3380 = vmatmul.f32.gmra.mxu0 %v2815
      %v3381 = vpop.f32.mrf.mxu0
      %v3382 = vadd.f32 0.0, %v3381
      %3383 = vmatmul.f32.gmra.mxu0 %v2818
      %v3384 = vpop.f32.mrf.mxu0
      %v3385 = vadd.f32 0.0, %v3384
      %3386 = vmatmul.f32.gmra.mxu0 %v2821
      %v3387 = vpop.f32.mrf.mxu0
      %v3388 = vadd.f32 0.0, %v3387
      %3389 = vmatmul.f32.gmra.mxu0 %v2824
      %v3390 = vpop.f32.mrf.mxu0
      %v3391 = vadd.f32 0.0, %v3390
      %3392 = vmatmul.f32.gmra.mxu0 %v2827
      %v3393 = vpop.f32.mrf.mxu0
      %v3394 = vadd.f32 0.0, %v3393
      %3395 = vmatmul.f32.gmra.mxu0 %v2830
      %v3396 = vpop.f32.mrf.mxu0
      %v3397 = vadd.f32 0.0, %v3396
      %3398 = vmatmul.f32.gmra.mxu0 %v2833
      %v3399 = vpop.f32.mrf.mxu0
      %v3400 = vadd.f32 0.0, %v3399
      %3401 = vmatmul.f32.gmra.mxu0 %v2836
      %v3402 = vpop.f32.mrf.mxu0
      %v3403 = vadd.f32 0.0, %v3402
      %3404 = vmatmul.f32.gmra.mxu0 %v2839
      %v3405 = vpop.f32.mrf.mxu0
      %v3406 = vadd.f32 0.0, %v3405
      %3407 = vmatmul.f32.gmra.mxu0 %v2842
      %v3408 = vpop.f32.mrf.mxu0
      %v3409 = vadd.f32 0.0, %v3408
      %3410 = vmatmul.f32.gmra.mxu0 %v2845
      %v3411 = vpop.f32.mrf.mxu0
      %v3412 = vadd.f32 0.0, %v3411
      %3413 = vmatmul.f32.gmra.mxu0 %v2848
      %v3414 = vpop.f32.mrf.mxu0
      %v3415 = vadd.f32 0.0, %v3414
      %3416 = vmatmul.f32.gmra.mxu0 %v2851
      %v3417 = vpop.f32.mrf.mxu0
      %v3418 = vadd.f32 0.0, %v3417
      %3419 = vmatmul.f32.gmra.mxu0 %v2854
      %v3420 = vpop.f32.mrf.mxu0
      %v3421 = vadd.f32 0.0, %v3420
      %3422 = vmatmul.f32.gmra.mxu0 %v2857
      %v3423 = vpop.f32.mrf.mxu0
      %v3424 = vadd.f32 0.0, %v3423
      %3425 = vmatmul.f32.gmra.mxu0 %v2860
      %v3426 = vpop.f32.mrf.mxu0
      %v3427 = vadd.f32 0.0, %v3426
      %3428 = vmatmul.f32.gmra.mxu0 %v2863
      %v3429 = vpop.f32.mrf.mxu0
      %v3430 = vadd.f32 0.0, %v3429
      %3431 = vmatmul.f32.gmra.mxu0 %v2866
      %v3432 = vpop.f32.mrf.mxu0
      %v3433 = vadd.f32 0.0, %v3432
      %3434 = vmatmul.f32.gmra.mxu0 %v2869
      %v3435 = vpop.f32.mrf.mxu0
      %v3436 = vadd.f32 0.0, %v3435
      %3437 = vmatmul.f32.gmra.mxu0 %v2872
      %v3438 = vpop.f32.mrf.mxu0
      %v3439 = vadd.f32 0.0, %v3438
      %3440 = vmatmul.f32.gmra.mxu0 %v2875
      %v3441 = vpop.f32.mrf.mxu0
      %v3442 = vadd.f32 0.0, %v3441
      %3443 = vmatmul.f32.gmra.mxu0 %v2878
      %v3444 = vpop.f32.mrf.mxu0
      %v3445 = vadd.f32 0.0, %v3444
      %3446 = vmatmul.f32.gmra.mxu0 %v2881
      %v3447 = vpop.f32.mrf.mxu0
      %v3448 = vadd.f32 0.0, %v3447
      %3449 = vmatmul.f32.gmra.mxu0 %v2884
      %v3450 = vpop.f32.mrf.mxu0
      %v3451 = vadd.f32 0.0, %v3450
      %3452 = vmatmul.f32.gmra.mxu0 %v2887
      %v3453 = vpop.f32.mrf.mxu0
      %v3454 = vadd.f32 0.0, %v3453
      %3455 = vmatmul.f32.gmra.mxu0 %v2890
      %v3456 = vpop.f32.mrf.mxu0
      %v3457 = vadd.f32 0.0, %v3456
      %3458 = vmatmul.f32.gmra.mxu0 %v2893
      %v3459 = vpop.f32.mrf.mxu0
      %v3460 = vadd.f32 0.0, %v3459
      %3461 = vmatmul.f32.gmra.mxu0 %v2896
      %v3462 = vpop.f32.mrf.mxu0
      %v3463 = vadd.f32 0.0, %v3462
      %3464 = vmatmul.f32.gmra.mxu0 %v2899
      %v3465 = vpop.f32.mrf.mxu0
      %v3466 = vadd.f32 0.0, %v3465
      %3467 = vdwg.mxu0
      %v3468 = vadd.f32 %v3255, %v3373
      %v3469 = vadd.f32 %v3258, %v3376
      %v3470 = vadd.f32 %v3261, %v3379
      %v3471 = vadd.f32 %v3264, %v3382
      %v3472 = vadd.f32 %v3267, %v3385
      %v3473 = vadd.f32 %v3270, %v3388
      %v3474 = vadd.f32 %v3273, %v3391
      %v3475 = vadd.f32 %v3276, %v3394
      %v3476 = vadd.f32 %v3279, %v3397
      %v3477 = vadd.f32 %v3282, %v3400
      %v3478 = vadd.f32 %v3285, %v3403
      %v3479 = vadd.f32 %v3288, %v3406
      %v3480 = vadd.f32 %v3291, %v3409
      %v3481 = vadd.f32 %v3294, %v3412
      %v3482 = vadd.f32 %v3297, %v3415
      %v3483 = vadd.f32 %v3300, %v3418
      %v3484 = vadd.f32 %v3303, %v3421
      %v3485 = vadd.f32 %v3306, %v3424
      %v3486 = vadd.f32 %v3309, %v3427
      %v3487 = vadd.f32 %v3312, %v3430
      %v3488 = vadd.f32 %v3315, %v3433
      %v3489 = vadd.f32 %v3318, %v3436
      %v3490 = vadd.f32 %v3321, %v3439
      %v3491 = vadd.f32 %v3324, %v3442
      %v3492 = vadd.f32 %v3327, %v3445
      %v3493 = vadd.f32 %v3330, %v3448
      %v3494 = vadd.f32 %v3333, %v3451
      %v3495 = vadd.f32 %v3336, %v3454
      %v3496 = vadd.f32 %v3339, %v3457
      %v3497 = vadd.f32 %v3342, %v3460
      %v3498 = vadd.f32 %v3345, %v3463
      %v3499 = vadd.f32 %v3348, %v3466
      %s3500 = scalar_lea.vmem %s224, 60
      %v3501 = vld [vmem:[%s3500] sm:$0xf]
      %v3503 = vsel %vm543, %v507, 0
      %v3506 = vsel %vm543, %v508, 0
      %v3509 = vsel %vm543, %v509, 0
      %v3512 = vsel %vm543, %v510, 0
      %v3515 = vsel %vm543, %v511, 0
      %v3518 = vsel %vm543, %v512, 0
      %v3521 = vsel %vm543, %v513, 0
      %v3524 = vsel %vm543, %v514, 0
      %v3527 = vsel %vm543, %v515, 0
      %v3530 = vsel %vm543, %v516, 0
      %v3533 = vsel %vm543, %v517, 0
      %v3536 = vsel %vm543, %v518, 0
      %v3539 = vsel %vm543, %v519, 0
      %v3542 = vsel %vm543, %v520, 0
      %v3545 = vsel %vm543, %v521, 0
      %v3548 = vsel %vm543, %v522, 0
      %v3551 = vsel %vm543, %v523, 0
      %v3554 = vsel %vm543, %v524, 0
      %v3557 = vsel %vm543, %v525, 0
      %v3560 = vsel %vm543, %v526, 0
      %v3563 = vsel %vm543, %v527, 0
      %v3566 = vsel %vm543, %v528, 0
      %v3569 = vsel %vm543, %v529, 0
      %v3572 = vsel %vm543, %v530, 0
      %v3575 = vsel %vm543, %v531, 0
      %v3578 = vsel %vm543, %v532, 0
      %v3581 = vsel %vm543, %v533, 0
      %v3584 = vsel %vm543, %v534, 0
      %v3587 = vsel %vm543, %v535, 0
      %v3590 = vsel %vm543, %v536, 0
      %v3593 = vsel %vm543, %v537, 0
      %v3596 = vsel %vm543, %v538, 0
      %v3599 = vsel %vm640, %v3501, 0
      %3601 = vmatpush.msra.mxu0 0.0
      %3602 = vmatpush.msra.mxu0 0.0
      %3603 = vmatpush.msra.mxu0 0.0
      %3604 = vmatpush.msra.mxu0 0.0
      %3605 = vmatpush.msra.mxu0 0.0
      %3606 = vmatpush.msra.mxu0 0.0
      %3607 = vmatpush.msra.mxu0 0.0
      %3608 = vmatpush.msra.mxu0 0.0
      %3609 = vmatpush.msra.mxu0 0.0
      %3610 = vmatpush.msra.mxu0 0.0
      %3611 = vmatpush.msra.mxu0 0.0
      %3612 = vmatpush.msra.mxu0 0.0
      %3613 = vmatpush.msra.mxu0 0.0
      %3614 = vmatpush.msra.mxu0 0.0
      %3615 = vmatpush.msra.mxu0 0.0
      %3616 = vmatpush.msra.mxu0 %v3599
      %3617 = vmatmul.f32.gmra.mxu0 %v3503
      %v3618 = vpop.f32.mrf.mxu0
      %v3619 = vadd.f32 0.0, %v3618
      %3620 = vmatmul.f32.gmra.mxu0 %v3506
      %v3621 = vpop.f32.mrf.mxu0
      %v3622 = vadd.f32 0.0, %v3621
      %3623 = vmatmul.f32.gmra.mxu0 %v3509
      %v3624 = vpop.f32.mrf.mxu0
      %v3625 = vadd.f32 0.0, %v3624
      %3626 = vmatmul.f32.gmra.mxu0 %v3512
      %v3627 = vpop.f32.mrf.mxu0
      %v3628 = vadd.f32 0.0, %v3627
      %3629 = vmatmul.f32.gmra.mxu0 %v3515
      %v3630 = vpop.f32.mrf.mxu0
      %v3631 = vadd.f32 0.0, %v3630
      %3632 = vmatmul.f32.gmra.mxu0 %v3518
      %v3633 = vpop.f32.mrf.mxu0
      %v3634 = vadd.f32 0.0, %v3633
      %3635 = vmatmul.f32.gmra.mxu0 %v3521
      %v3636 = vpop.f32.mrf.mxu0
      %v3637 = vadd.f32 0.0, %v3636
      %3638 = vmatmul.f32.gmra.mxu0 %v3524
      %v3639 = vpop.f32.mrf.mxu0
      %v3640 = vadd.f32 0.0, %v3639
      %3641 = vmatmul.f32.gmra.mxu0 %v3527
      %v3642 = vpop.f32.mrf.mxu0
      %v3643 = vadd.f32 0.0, %v3642
      %3644 = vmatmul.f32.gmra.mxu0 %v3530
      %v3645 = vpop.f32.mrf.mxu0
      %v3646 = vadd.f32 0.0, %v3645
      %3647 = vmatmul.f32.gmra.mxu0 %v3533
      %v3648 = vpop.f32.mrf.mxu0
      %v3649 = vadd.f32 0.0, %v3648
      %3650 = vmatmul.f32.gmra.mxu0 %v3536
      %v3651 = vpop.f32.mrf.mxu0
      %v3652 = vadd.f32 0.0, %v3651
      %3653 = vmatmul.f32.gmra.mxu0 %v3539
      %v3654 = vpop.f32.mrf.mxu0
      %v3655 = vadd.f32 0.0, %v3654
      %3656 = vmatmul.f32.gmra.mxu0 %v3542
      %v3657 = vpop.f32.mrf.mxu0
      %v3658 = vadd.f32 0.0, %v3657
      %3659 = vmatmul.f32.gmra.mxu0 %v3545
      %v3660 = vpop.f32.mrf.mxu0
      %v3661 = vadd.f32 0.0, %v3660
      %3662 = vmatmul.f32.gmra.mxu0 %v3548
      %v3663 = vpop.f32.mrf.mxu0
      %v3664 = vadd.f32 0.0, %v3663
      %3665 = vmatmul.f32.gmra.mxu0 %v3551
      %v3666 = vpop.f32.mrf.mxu0
      %v3667 = vadd.f32 0.0, %v3666
      %3668 = vmatmul.f32.gmra.mxu0 %v3554
      %v3669 = vpop.f32.mrf.mxu0
      %v3670 = vadd.f32 0.0, %v3669
      %3671 = vmatmul.f32.gmra.mxu0 %v3557
      %v3672 = vpop.f32.mrf.mxu0
      %v3673 = vadd.f32 0.0, %v3672
      %3674 = vmatmul.f32.gmra.mxu0 %v3560
      %v3675 = vpop.f32.mrf.mxu0
      %v3676 = vadd.f32 0.0, %v3675
      %3677 = vmatmul.f32.gmra.mxu0 %v3563
      %v3678 = vpop.f32.mrf.mxu0
      %v3679 = vadd.f32 0.0, %v3678
      %3680 = vmatmul.f32.gmra.mxu0 %v3566
      %v3681 = vpop.f32.mrf.mxu0
      %v3682 = vadd.f32 0.0, %v3681
      %3683 = vmatmul.f32.gmra.mxu0 %v3569
      %v3684 = vpop.f32.mrf.mxu0
      %v3685 = vadd.f32 0.0, %v3684
      %3686 = vmatmul.f32.gmra.mxu0 %v3572
      %v3687 = vpop.f32.mrf.mxu0
      %v3688 = vadd.f32 0.0, %v3687
      %3689 = vmatmul.f32.gmra.mxu0 %v3575
      %v3690 = vpop.f32.mrf.mxu0
      %v3691 = vadd.f32 0.0, %v3690
      %3692 = vmatmul.f32.gmra.mxu0 %v3578
      %v3693 = vpop.f32.mrf.mxu0
      %v3694 = vadd.f32 0.0, %v3693
      %3695 = vmatmul.f32.gmra.mxu0 %v3581
      %v3696 = vpop.f32.mrf.mxu0
      %v3697 = vadd.f32 0.0, %v3696
      %3698 = vmatmul.f32.gmra.mxu0 %v3584
      %v3699 = vpop.f32.mrf.mxu0
      %v3700 = vadd.f32 0.0, %v3699
      %3701 = vmatmul.f32.gmra.mxu0 %v3587
      %v3702 = vpop.f32.mrf.mxu0
      %v3703 = vadd.f32 0.0, %v3702
      %3704 = vmatmul.f32.gmra.mxu0 %v3590
      %v3705 = vpop.f32.mrf.mxu0
      %v3706 = vadd.f32 0.0, %v3705
      %3707 = vmatmul.f32.gmra.mxu0 %v3593
      %v3708 = vpop.f32.mrf.mxu0
      %v3709 = vadd.f32 0.0, %v3708
      %3710 = vmatmul.f32.gmra.mxu0 %v3596
      %v3711 = vpop.f32.mrf.mxu0
      %v3712 = vadd.f32 0.0, %v3711
      %3713 = vdwg.mxu0
      %v3714 = vadd.f32 %v3468, %v3619
      %v3715 = vadd.f32 %v3469, %v3622
      %v3716 = vadd.f32 %v3470, %v3625
      %v3717 = vadd.f32 %v3471, %v3628
      %v3718 = vadd.f32 %v3472, %v3631
      %v3719 = vadd.f32 %v3473, %v3634
      %v3720 = vadd.f32 %v3474, %v3637
      %v3721 = vadd.f32 %v3475, %v3640
      %v3722 = vadd.f32 %v3476, %v3643
      %v3723 = vadd.f32 %v3477, %v3646
      %v3724 = vadd.f32 %v3478, %v3649
      %v3725 = vadd.f32 %v3479, %v3652
      %v3726 = vadd.f32 %v3480, %v3655
      %v3727 = vadd.f32 %v3481, %v3658
      %v3728 = vadd.f32 %v3482, %v3661
      %v3729 = vadd.f32 %v3483, %v3664
      %v3730 = vadd.f32 %v3484, %v3667
      %v3731 = vadd.f32 %v3485, %v3670
      %v3732 = vadd.f32 %v3486, %v3673
      %v3733 = vadd.f32 %v3487, %v3676
      %v3734 = vadd.f32 %v3488, %v3679
      %v3735 = vadd.f32 %v3489, %v3682
      %v3736 = vadd.f32 %v3490, %v3685
      %v3737 = vadd.f32 %v3491, %v3688
      %v3738 = vadd.f32 %v3492, %v3691
      %v3739 = vadd.f32 %v3493, %v3694
      %v3740 = vadd.f32 %v3494, %v3697
      %v3741 = vadd.f32 %v3495, %v3700
      %v3742 = vadd.f32 %v3496, %v3703
      %v3743 = vadd.f32 %v3497, %v3706
      %v3744 = vadd.f32 %v3498, %v3709
      %v3745 = vadd.f32 %v3499, %v3712
      %v3746 = vadd.f32 %v3714, %v1462
      %v3747 = vadd.f32 %v3715, %v1462
      %v3748 = vadd.f32 %v3716, %v1462
      %v3749 = vadd.f32 %v3717, %v1462
      %v3750 = vadd.f32 %v3718, %v1462
      %v3751 = vadd.f32 %v3719, %v1462
      %v3752 = vadd.f32 %v3720, %v1462
      %v3753 = vadd.f32 %v3721, %v1462
      %v3754 = vadd.f32 %v3722, %v1462
      %v3755 = vadd.f32 %v3723, %v1462
      %v3756 = vadd.f32 %v3724, %v1462
      %v3757 = vadd.f32 %v3725, %v1462
      %v3758 = vadd.f32 %v3726, %v1462
      %v3759 = vadd.f32 %v3727, %v1462
      %v3760 = vadd.f32 %v3728, %v1462
      %v3761 = vadd.f32 %v3729, %v1462
      %v3762 = vadd.f32 %v3730, %v1462
      %v3763 = vadd.f32 %v3731, %v1462
      %v3764 = vadd.f32 %v3732, %v1462
      %v3765 = vadd.f32 %v3733, %v1462
      %v3766 = vadd.f32 %v3734, %v1462
      %v3767 = vadd.f32 %v3735, %v1462
      %v3768 = vadd.f32 %v3736, %v1462
      %v3769 = vadd.f32 %v3737, %v1462
      %v3770 = vadd.f32 %v3738, %v1462
      %v3771 = vadd.f32 %v3739, %v1462
      %v3772 = vadd.f32 %v3740, %v1462
      %v3773 = vadd.f32 %v3741, %v1462
      %v3774 = vadd.f32 %v3742, %v1462
      %v3775 = vadd.f32 %v3743, %v1462
      %v3776 = vadd.f32 %v3744, %v1462
      %v3777 = vadd.f32 %v3745, %v1462
      %s3778 = scalar_lea.vmem %s240, 768
      %3779 = vst.msk [vmem:[%s3778] sm:$0xff] %vm543, %v3746
      %3780 = vst.msk [vmem:[%s3778 + $0x8] sm:$0xff] %vm543, %v3747
      %3781 = vst.msk [vmem:[%s3778 + $0x10] sm:$0xff] %vm543, %v3748
      %3782 = vst.msk [vmem:[%s3778 + $0x18] sm:$0xff] %vm543, %v3749
      %3783 = vst.msk [vmem:[%s3778 + $0x20] sm:$0xff] %vm543, %v3750
      %3784 = vst.msk [vmem:[%s3778 + $0x28] sm:$0xff] %vm543, %v3751
      %3785 = vst.msk [vmem:[%s3778 + $0x30] sm:$0xff] %vm543, %v3752
      %3786 = vst.msk [vmem:[%s3778 + $0x38] sm:$0xff] %vm543, %v3753
      %3787 = vst.msk [vmem:[%s3778 + $0x40] sm:$0xff] %vm543, %v3754
      %3788 = vst.msk [vmem:[%s3778 + $0x48] sm:$0xff] %vm543, %v3755
      %3789 = vst.msk [vmem:[%s3778 + $0x50] sm:$0xff] %vm543, %v3756
      %3790 = vst.msk [vmem:[%s3778 + $0x58] sm:$0xff] %vm543, %v3757
      %3791 = vst.msk [vmem:[%s3778 + $0x60] sm:$0xff] %vm543, %v3758
      %3792 = vst.msk [vmem:[%s3778 + $0x68] sm:$0xff] %vm543, %v3759
      %3793 = vst.msk [vmem:[%s3778 + $0x70] sm:$0xff] %vm543, %v3760
      %3794 = vst.msk [vmem:[%s3778 + $0x78] sm:$0xff] %vm543, %v3761
      %3795 = vst.msk [vmem:[%s3778 + $0x80] sm:$0xff] %vm543, %v3762
      %3796 = vst.msk [vmem:[%s3778 + $0x88] sm:$0xff] %vm543, %v3763
      %3797 = vst.msk [vmem:[%s3778 + $0x90] sm:$0xff] %vm543, %v3764
      %3798 = vst.msk [vmem:[%s3778 + $0x98] sm:$0xff] %vm543, %v3765
      %3799 = vst.msk [vmem:[%s3778 + $0xa0] sm:$0xff] %vm543, %v3766
      %3800 = vst.msk [vmem:[%s3778 + $0xa8] sm:$0xff] %vm543, %v3767
      %3801 = vst.msk [vmem:[%s3778 + $0xb0] sm:$0xff] %vm543, %v3768
      %3802 = vst.msk [vmem:[%s3778 + $0xb8] sm:$0xff] %vm543, %v3769
      %3803 = vst.msk [vmem:[%s3778 + $0xc0] sm:$0xff] %vm543, %v3770
      %3804 = vst.msk [vmem:[%s3778 + $0xc8] sm:$0xff] %vm543, %v3771
      %3805 = vst.msk [vmem:[%s3778 + $0xd0] sm:$0xff] %vm543, %v3772
      %3806 = vst.msk [vmem:[%s3778 + $0xd8] sm:$0xff] %vm543, %v3773
      %3807 = vst.msk [vmem:[%s3778 + $0xe0] sm:$0xff] %vm543, %v3774
      %3808 = vst.msk [vmem:[%s3778 + $0xe8] sm:$0xff] %vm543, %v3775
      %3809 = vst.msk [vmem:[%s3778 + $0xf0] sm:$0xff] %vm543, %v3776
      %3810 = vst.msk [vmem:[%s3778 + $0xf8] sm:$0xff] %vm543, %v3777
      %s3811 = smul.u32 16, %s21
      %p3812 = scmp.lt.s32.totalorder %s19, 1
      %s3813 = scalar_select %p3812, %s19, 1
      %p3814 = scmp.lt.s32.totalorder %s3811, 15
      %s3815 = scalar_select %p3814, %s3811, 15
      %p3816 = scmp.lt.s32.totalorder %s20, 0
      %s3817 = scalar_select %p3816, %s20, 0
      %s3818 = smul.addr %s3815, 2
      %s3819 = sadd.s32 %s3817, %s3818
      %s3820 = smul.addr %s3813, 128
      %s3821 = sadd.s32 %s3819, %s3820
      %s3822 = smul.addr %s3821, 8
      %s3823 = scalar_lea.vmem %s3, %s3822
      // Predicated region
      $region33: #{tpu_custom_call.1} parent=31 // pred_check
        %p3824 = pneg %p133
      $region34: #{tpu_custom_call.1} parent=31 // pred_check_branch
        %3826 = sbr.rel (%p3824) target = $region36
      $region35: #{tpu_custom_call.1} parent=31 // pred_region
        %s3827 = smul.u32 16, %s21
      $region36: #{tpu_custom_call.1} parent=31 // pred_fallthru
        _
    $region32: #{tpu_custom_call.1} parent=5 // pred_fallthru
      _
    %p3828 = scmp.le.s32.totalorder 2, %s9
    // Predicated region
    $region37: #{tpu_custom_call.1} parent=5 // pred_check
      %p3829 = pneg %p3828
    $region38: #{tpu_custom_call.1} parent=5 // pred_check_branch
      %3831 = sbr.rel (%p3829) target = $region40
    $region39: #{tpu_custom_call.1} parent=5 // pred_region
      %s3832 = ssub.s32 %s9, 2
      // Predicated region
      $region41: #{tpu_custom_call.1} parent=39 // pred_check
        %p3833 = pneg %p139
      $region42: #{tpu_custom_call.1} parent=39 // pred_check_branch
        %3835 = sbr.rel (%p3833) target = $region44
      $region43: #{tpu_custom_call.1} parent=39 // pred_region
        %s3836 = smul.u32 16, %s24
        %p3837 = scmp.lt.s32.totalorder %s22, 1
        %s3838 = scalar_select %p3837, %s22, 1
        %p3839 = scmp.lt.s32.totalorder %s3836, 15
        %s3840 = scalar_select %p3839, %s3836, 15
        %p3841 = scmp.lt.s32.totalorder %s23, 0
        %s3842 = scalar_select %p3841, %s23, 0
        %s3843 = smul.addr %s3840, 2
        %s3844 = sadd.s32 %s3842, %s3843
        %s3845 = smul.addr %s3838, 128
        %s3846 = sadd.s32 %s3844, %s3845
        %s3847 = smul.addr %s3846, 8
        %s3848 = scalar_lea.vmem %s3, %s3847
      $region44: #{tpu_custom_call.1} parent=39 // pred_fallthru
        _
    $region40: #{tpu_custom_call.1} parent=5 // pred_fallthru
      _
  $region6: #{tpu_custom_call.1} parent=0 // loop_footer
    %s13 = sadd.s32 1, %s9
  $region7: #{tpu_custom_call.1} parent=0 // loop_footer_branch
    %8 = sbr.rel target = $region3
  $region8: #{tpu_custom_call.1} parent=0 // loop_exit
    _

</llo_original>
